<compile_context>
chip_gen: v6e
topology: v6e:2x2x1
jax: 0.10.0
libtpu: 0.0.40
codegen_flags: <defaults>
</compile_context>

<pallas_src>
import functools
import numpy as np
import jax
import jax.numpy as jnp
from jax.experimental import pallas as pl
from jax.experimental.pallas import tpu as pltpu

_SLAB_LANES = 128   # lane width of the packed parameter slab / output rows
_OUT_PAD = 128      # lane-dense per-timestep output row width


# --------------------------- parameter slab layout ---------------------------
def _slab_layout(vocabulary_size, hidden_dim, memory_size):
    """Row offsets (sublane-aligned) of each fused matrix inside the slab."""
    V, H, M = vocabulary_size, hidden_dim, memory_size
    H2 = H // 2
    DIN = 2 + V
    sizes = [
        ("w1", DIN, H),            # fused [obs|msg] -> layer-1
        ("b1", 1, H),
        ("w2", H, H + H2),         # fused rep_Mod("o" half) + msg_Enc-L2
        ("b2", 1, H + H2),
        ("w3", H2, H),             # rep_Mod "m" half
        ("w4", H + M, 4 * M),      # fused [z|h] LSTM gates (i|f|g|o)
        ("b4", 1, 4 * M),          # b_ih + b_hh
        ("w5", M, 2 * M + 1),      # fused heads layer-1: [d | v | act_pre]
        ("b5", 1, 2 * M + 1),
        ("w6", 2 * M, V + 1),      # block-diag(w_d2, w_v2)
        ("b6", 1, V + 1),
    ]
    offsets = {}
    r = 0
    for name, rows, cols in sizes:
        assert cols <= _SLAB_LANES
        offsets[name] = r
        r += ((rows + 7) // 8) * 8   # align each section to a sublane group
    return offsets, r


# ----------------------------- Pallas kernel --------------------------------
def _make_kernel(*, V, H, M, DIN, T_CHUNK, offsets):
    H2 = H // 2
    OUT_W = V + 2 * M + 2
    f32 = jnp.float32

    def kernel(xs_ref, mem0_ref, params_ref, out_ref, state_ref):
        # --- load all weights once per grid step (static slices of one slab) ---
        def wp(name, rows, cols):
            r0 = offsets[name]
            return params_ref[r0:r0 + rows, 0:cols]

        w1 = wp("w1", DIN, H)
        b1 = wp("b1", 1, H)
        w2 = wp("w2", H, H + H2)
        b2 = wp("b2", 1, H + H2)
        w3 = wp("w3", H2, H)
        w4 = wp("w4", H + M, 4 * M)
        b4 = wp("b4", 1, 4 * M)
        w5 = wp("w5", M, 2 * M + 1)
        b5 = wp("b5", 1, 2 * M + 1)
        w6 = wp("w6", 2 * M, V + 1)
        b6 = wp("b6", 1, V + 1)

        # --- (re)initialize the recurrent state at the start of each T sweep ---
        @pl.when(pl.program_id(1) == 0)
        def _():
            state_ref[...] = mem0_ref[0]

        BS = state_ref.shape[0]
        pad = jnp.zeros((BS, _OUT_PAD - OUT_W), f32)

        h = state_ref[:, :M]
        c = state_ref[:, M:]

        def mm(a, b):
            return jnp.dot(a, b, preferred_element_type=f32)

        # Static unroll over the chunk: recurrence is serial, shapes are tiny,
        # and full unrolling gives the scheduler visibility across timesteps.
        for t in range(T_CHUNK):
            x = xs_ref[0, t]                                   # (BS, 2+V) = [obs|msg]

            # layer 1 (fused): [relu(obs@Wobs+b) | relu(msg@Wm1+b)]
            x1 = jax.nn.relu(mm(x, w1) + b1)

            # layer 2 (fused): [o@Wrep_o + b_rep | m1@Wm2 + b_m2]
            x2 = mm(x1, w2) + b2
            m2 = jax.nn.relu(x2[:, H:])
            z = jax.nn.relu(x2[:, :H] + mm(m2, w3))

            # LSTMCell(H, M): one fused (BS, 4M) gate matmul on [z|h]
            zh = jnp.concatenate([z, h], axis=-1)
            gates = mm(zh, w4) + b4
            i_g = jax.nn.sigmoid(gates[:, 0 * M:1 * M])
            f_g = jax.nn.sigmoid(gates[:, 1 * M:2 * M])
            g_g = jnp.tanh(gates[:, 2 * M:3 * M])
            o_g = jax.nn.sigmoid(gates[:, 3 * M:4 * M])
            c = f_g * c + i_g * g_g
            h = o_g * jnp.tanh(c)

            # heads layer-1 (fused): [d | v | act_pre]
            heads = mm(h, w5) + b5
            action = jax.nn.sigmoid(heads[:, 2 * M:2 * M + 1])

            # heads layer-2 (fused, block-diagonal): [logits | value]
            out6 = mm(heads[:, :2 * M], w6) + b6
            logits = out6[:, :V]
            value = out6[:, V:]

            # softmax over message logits (exact reciprocal)
            logits = logits - jnp.max(logits, axis=-1, keepdims=True)
            e = jnp.exp(logits)
            message = e * pl.reciprocal(jnp.sum(e, axis=-1, keepdims=True))

            # one lane-dense 128-wide store per timestep
            out_ref[0, t] = jnp.concatenate(
                [message, h, c, action, value, pad], axis=-1)

        # carry h/c to the next grid step along the "arbitrary" T axis
        state_ref[...] = jnp.concatenate([h, c], axis=-1)

    return kernel


# ------------------------------ Wrapper --------------------------------------
def aria_forward_seq(obs_seq, msg_seq, memory0, param_slab, *, memory_size,
                     vocabulary_size, hidden_dim, t_chunk=8, num_batch_shards=1):
    """Runs the ariaModel forward for T timesteps inside a single pallas_call."""
    T, B, _ = obs_seq.shape
    V, M, H = vocabulary_size, memory_size, hidden_dim
    DIN = 2 + V
    OUT_W = V + 2 * M + 2
    NB = num_batch_shards
    assert H % 2 == 0 and B % NB == 0 and T % t_chunk == 0
    assert OUT_W <= _OUT_PAD
    BS = B // NB
    NT = T // t_chunk

    offsets, total_rows = _slab_layout(V, H, M)
    assert param_slab.shape == (total_rows, _SLAB_LANES)

    # one data slab per timestep: [obs | msg], then split batch into shards
    xs = jnp.concatenate([obs_seq, msg_seq], axis=-1)            # (T, B, DIN)
    xs = xs.reshape(T, NB, BS, DIN).transpose(1, 0, 2, 3)        # (NB, T, BS, DIN)
    mem = memory0.reshape(NB, BS, 2 * M)                         # (NB, BS, 2M)

    kernel = _make_kernel(V=V, H=H, M=M, DIN=DIN, T_CHUNK=t_chunk, offsets=offsets)

    out = pl.pallas_call(
        kernel,
        out_shape=jax.ShapeDtypeStruct((NB, T, BS, _OUT_PAD), jnp.float32),
        grid_spec=pltpu.PrefetchScalarGridSpec(
            num_scalar_prefetch=0,
            grid=(NB, NT),
            in_specs=[
                pl.BlockSpec((1, t_chunk, BS, DIN), lambda b, t: (b, t, 0, 0)),
                pl.BlockSpec((1, BS, 2 * M), lambda b, t: (b, 0, 0)),
                pl.BlockSpec((total_rows, _SLAB_LANES), lambda b, t: (0, 0)),
            ],
            out_specs=pl.BlockSpec((1, t_chunk, BS, _OUT_PAD),
                                   lambda b, t: (b, t, 0, 0)),
            scratch_shapes=[pltpu.VMEM((BS, 2 * M), jnp.float32)],
        ),
        compiler_params=pltpu.CompilerParams(
            dimension_semantics=("parallel", "arbitrary")),
    )(xs, mem, param_slab)

    out = out.transpose(1, 0, 2, 3).reshape(T, B, _OUT_PAD)
    message = out[:, :, :V]
    out_memory = out[:, :, V:V + 2 * M]                          # [h | c] per step
    action = out[:, :, V + 2 * M:V + 2 * M + 1]
    value = out[:, :, V + 2 * M + 1:V + 2 * M + 2]
    return action, message, out_memory, value


# ------------------------- Deterministic param init --------------------------
def init_params(key, vocabulary_size, hidden_dim, memory_size):
    """Natural (PyTorch-equivalent) params; weights stored [in, out], bias [1, out]."""
    H, H2, M, V = hidden_dim, hidden_dim // 2, memory_size, vocabulary_size
    keys = iter(jax.random.split(key, 32))

    def uni(shape, bound):
        return jax.random.uniform(next(keys), shape, jnp.float32, -bound, bound)

    def linear(in_f, out_f):
        k = 1.0 / np.sqrt(in_f)
        return uni((in_f, out_f), k), uni((1, out_f), k)

    p = {}
    p["w_obs"], p["b_obs"] = linear(2, H2)
    p["w_m1"], p["b_m1"] = linear(V, H2)
    p["w_m2"], p["b_m2"] = linear(H2, H2)
    p["w_rep"], p["b_rep"] = linear(H, H)
    k = 1.0 / np.sqrt(M)
    p["w_ih"] = uni((H, 4 * M), k)      # columns ordered i|f|g|o (PyTorch)
    p["w_hh"] = uni((M, 4 * M), k)
    p["b_ih"] = uni((1, 4 * M), k)
    p["b_hh"] = uni((1, 4 * M), k)
    p["w_act"], p["b_act"] = linear(M, 1)
    p["w_d1"], p["b_d1"] = linear(M, M)
    p["w_d2"], p["b_d2"] = linear(M, V)
    p["w_v1"], p["b_v1"] = linear(M, M)
    p["w_v2"], p["b_v2"] = linear(M, 1)
    return p


def pack_params(p, hidden_dim, memory_size, vocabulary_size):
    """Pack all fused weights into ONE lane-padded slab (done once, outside jit)."""
    H, H2, M, V = hidden_dim, hidden_dim // 2, memory_size, vocabulary_size
    z = lambda s: np.zeros(s, np.float32)
    a = lambda x: np.asarray(x, np.float32)

    w1 = np.concatenate([
        np.concatenate([a(p["w_obs"]), z((2, H2))], axis=1),
        np.concatenate([z((V, H2)), a(p["w_m1"])], axis=1)], axis=0)      # (2+V, H)
    b1 = np.concatenate([a(p["b_obs"]), a(p["b_m1"])], axis=1)            # (1, H)

    w2 = np.concatenate([
        np.concatenate([a(p["w_rep"])[:H2, :], z((H2, H2))], axis=1),
        np.concatenate([z((H2, H)), a(p["w_m2"])], axis=1)], axis=0)      # (H, H+H2)
    b2 = np.concatenate([a(p["b_rep"]), a(p["b_m2"])], axis=1)            # (1, H+H2)
    w3 = a(p["w_rep"])[H2:, :]                                            # (H2, H)

    w4 = np.concatenate([a(p["w_ih"]), a(p["w_hh"])], axis=0)             # (H+M, 4M)
    b4 = a(p["b_ih"]) + a(p["b_hh"])                                      # (1, 4M)

    w5 = np.concatenate([a(p["w_d1"]), a(p["w_v1"]), a(p["w_act"])], axis=1)   # (M, 2M+1)
    b5 = np.concatenate([a(p["b_d1"]), a(p["b_v1"]), a(p["b_act"])], axis=1)

    w6 = np.concatenate([
        np.concatenate([a(p["w_d2"]), z((M, 1))], axis=1),
        np.concatenate([z((M, V)), a(p["w_v2"])], axis=1)], axis=0)       # (2M, V+1)
    b6 = np.concatenate([a(p["b_d2"]), a(p["b_v2"])], axis=1)             # (1, V+1)

    mats = {"w1": w1, "b1": b1, "w2": w2, "b2": b2, "w3": w3,
            "w4": w4, "b4": b4, "w5": w5, "b5": b5, "w6": w6, "b6": b6}

    offsets, total_rows = _slab_layout(V, H, M)
    slab = np.zeros((total_rows, _SLAB_LANES), np.float32)
    for name, mat in mats.items():
        r0 = offsets[name]
        rows, cols = mat.shape
        slab[r0:r0 + rows, :cols] = mat
    return jnp.asarray(slab)


# ------------------------- Pure-JAX reference --------------------------------
def aria_reference_seq(obs_seq, msg_seq, memory0, p, memory_size):
    M = memory_size

    def step(mem, xm):
        obs, msg = xm
        o = jax.nn.relu(obs @ p["w_obs"] + p["b_obs"])
        m = jax.nn.relu(msg @ p["w_m1"] + p["b_m1"])
        m = jax.nn.relu(m @ p["w_m2"] + p["b_m2"])
        z = jax.nn.relu(jnp.concatenate([o, m], axis=-1) @ p["w_rep"] + p["b_rep"])
        h, c = mem[:, :M], mem[:, M:]
        gates = z @ p["w_ih"] + h @ p["w_hh"] + p["b_ih"] + p["b_hh"]
        i_g = jax.nn.sigmoid(gates[:, 0 * M:1 * M])
        f_g = jax.nn.sigmoid(gates[:, 1 * M:2 * M])
        g_g = jnp.tanh(gates[:, 2 * M:3 * M])
        o_g = jax.nn.sigmoid(gates[:, 3 * M:4 * M])
        c_new = f_g * c + i_g * g_g
        h_new = o_g * jnp.tanh(c_new)
        out_memory = jnp.concatenate([h_new, c_new], axis=1)
        action = jax.nn.sigmoid(h_new @ p["w_act"] + p["b_act"])
        logits = (h_new @ p["w_d1"] + p["b_d1"]) @ p["w_d2"] + p["b_d2"]
        logits = logits - jnp.max(logits, axis=-1, keepdims=True)
        e = jnp.exp(logits)
        message = e / jnp.sum(e, axis=-1, keepdims=True)
        value = (h_new @ p["w_v1"] + p["b_v1"]) @ p["w_v2"] + p["b_v2"]
        return out_memory, (action, message, out_memory, value)

    _, outs = jax.lax.scan(step, memory0, (obs_seq, msg_seq))
    return outs   # (actions, messages, memories, values), each (T, B, ...)


# ------------------------------- Main -----------------------------------------
if __name__ == "__main__":
    batch_size = 16          # 2 shards x 8 sublanes (feeds both v7x TensorCores)
    vocabulary_size = 16
    hidden_dim = 32
    memory_size = 8
    T = 32                   # timesteps unrolled inside the kernel
    t_chunk = 8              # timesteps per grid step
    num_batch_shards = 2

    key = jax.random.PRNGKey(0)
    k_obs, k_msg, k_mem, k_params = jax.random.split(key, 4)

    obs_seq = jax.random.normal(k_obs, (T, batch_size, 2), jnp.float32)
    msg_seq = jax.nn.softmax(
        jax.random.normal(k_msg, (T, batch_size, vocabulary_size), jnp.float32), axis=-1)
    memory0 = jax.random.normal(k_mem, (batch_size, 2 * memory_size), jnp.float32)

    params = init_params(k_params, vocabulary_size, hidden_dim, memory_size)
    slab = pack_params(params, hidden_dim, memory_size, vocabulary_size)
    slab = jax.block_until_ready(slab)   # packed once, outside jit

    fwd = jax.jit(functools.partial(
        aria_forward_seq, memory_size=memory_size, vocabulary_size=vocabulary_size,
        hidden_dim=hidden_dim, t_chunk=t_chunk, num_batch_shards=num_batch_shards))
    action, message, out_memory, value = fwd(obs_seq, msg_seq, memory0, slab)
    jax.block_until_ready((action, message, out_memory, value))

    # correctness check vs pure-JAX reference over the full unroll
    ref = aria_reference_seq(obs_seq, msg_seq, memory0, params, memory_size)
    for got, want in zip((action, message, out_memory, value), ref):
        np.testing.assert_allclose(np.asarray(got), np.asarray(want),
                                   rtol=1e-4, atol=1e-4)

    print("KERNEL_OK")
</pallas_src>

<mosaic_0001>
module attributes {stable_mosaic.version = 11 : i64} {
  func.func @kernel(%arg0: i32, %arg1: i32, %arg2: memref<1x8x8x18xf32, #tpu.memory_space<vmem>>, %arg3: memref<1x8x16xf32, #tpu.memory_space<vmem>>, %arg4: memref<176x128xf32, #tpu.memory_space<vmem>>, %arg5: memref<1x8x8x128xf32, #tpu.memory_space<vmem>>, %arg6: memref<8x16xf32, #tpu.memory_space<vmem>>) attributes {dimension_semantics = [#tpu.dimension_semantics<parallel>, #tpu.dimension_semantics<arbitrary>], iteration_bounds = array<i64: 2, 4>, scalar_prefetch = 0 : i64, scratch_operands = 1 : i64, tpu.core_type = #tpu.core_type<tc>, window_params = [{transform_indices = @transform_0, window_bounds = array<i64: 1, 8, 8, 18>}, {transform_indices = @transform_1, window_bounds = array<i64: 1, 8, 16>}, {pipeline_mode = #tpu.pipeline_mode<synchronous>, transform_indices = @transform_2, window_bounds = array<i64: 176, 128>}, {transform_indices = @transform_3, window_bounds = array<i64: 1, 8, 8, 128>}]} {
    %c0 = arith.constant 0 : index
    %c0_0 = arith.constant 0 : index
    %0 = vector.load %arg4[%c0, %c0_0] : memref<176x128xf32, #tpu.memory_space<vmem>>, vector<18x32xf32>
    %c24 = arith.constant 24 : index
    %c0_1 = arith.constant 0 : index
    %1 = vector.load %arg4[%c24, %c0_1] : memref<176x128xf32, #tpu.memory_space<vmem>>, vector<1x32xf32>
    %c32 = arith.constant 32 : index
    %c0_2 = arith.constant 0 : index
    %2 = vector.load %arg4[%c32, %c0_2] : memref<176x128xf32, #tpu.memory_space<vmem>>, vector<32x48xf32>
    %c64 = arith.constant 64 : index
    %c0_3 = arith.constant 0 : index
    %3 = vector.load %arg4[%c64, %c0_3] : memref<176x128xf32, #tpu.memory_space<vmem>>, vector<1x48xf32>
    %c72 = arith.constant 72 : index
    %c0_4 = arith.constant 0 : index
    %4 = vector.load %arg4[%c72, %c0_4] : memref<176x128xf32, #tpu.memory_space<vmem>>, vector<16x32xf32>
    %c88 = arith.constant 88 : index
    %c0_5 = arith.constant 0 : index
    %5 = vector.load %arg4[%c88, %c0_5] : memref<176x128xf32, #tpu.memory_space<vmem>>, vector<40x32xf32>
    %c128 = arith.constant 128 : index
    %c0_6 = arith.constant 0 : index
    %6 = vector.load %arg4[%c128, %c0_6] : memref<176x128xf32, #tpu.memory_space<vmem>>, vector<1x32xf32>
    %c136 = arith.constant 136 : index
    %c0_7 = arith.constant 0 : index
    %7 = vector.load %arg4[%c136, %c0_7] : memref<176x128xf32, #tpu.memory_space<vmem>>, vector<8x17xf32>
    %c144 = arith.constant 144 : index
    %c0_8 = arith.constant 0 : index
    %8 = vector.load %arg4[%c144, %c0_8] : memref<176x128xf32, #tpu.memory_space<vmem>>, vector<1x17xf32>
    %c152 = arith.constant 152 : index
    %c0_9 = arith.constant 0 : index
    %9 = vector.load %arg4[%c152, %c0_9] : memref<176x128xf32, #tpu.memory_space<vmem>>, vector<16x17xf32>
    %c168 = arith.constant 168 : index
    %c0_10 = arith.constant 0 : index
    %10 = vector.load %arg4[%c168, %c0_10] : memref<176x128xf32, #tpu.memory_space<vmem>>, vector<1x17xf32>
    %c0_i32 = arith.constant 0 : i32
    %11 = arith.cmpi eq, %arg1, %c0_i32 : i32
    %12 = arith.extui %11 : i1 to i32
    %c0_i32_11 = arith.constant 0 : i32
    %13 = arith.cmpi ne, %12, %c0_i32_11 : i32
    scf.if %13 {
      %c0_194 = arith.constant 0 : index
      %c0_195 = arith.constant 0 : index
      %c0_196 = arith.constant 0 : index
      %627 = vector.load %arg3[%c0_194, %c0_195, %c0_196] : memref<1x8x16xf32, #tpu.memory_space<vmem>>, vector<1x8x16xf32>
      %628 = vector.shape_cast %627 : vector<1x8x16xf32> to vector<8x16xf32>
      %c0_197 = arith.constant 0 : index
      %c0_198 = arith.constant 0 : index
      %629 = vector.load %arg6[%c0_197, %c0_198] : memref<8x16xf32, #tpu.memory_space<vmem>>, vector<8x16xf32>
      tpu.vector_store %arg6[%c0_197, %c0_198], %628 {strides = array<i32>} : memref<8x16xf32, #tpu.memory_space<vmem>>, vector<8x16xf32>,
    } else {
    }
    %cst = arith.constant 0.000000e+00 : f32
    %14 = vector.broadcast %cst : f32 to vector<8x94xf32>
    %c0_12 = arith.constant 0 : index
    %c0_13 = arith.constant 0 : index
    %15 = vector.load %arg6[%c0_12, %c0_13] : memref<8x16xf32, #tpu.memory_space<vmem>>, vector<8x8xf32>
    %c0_14 = arith.constant 0 : index
    %c8 = arith.constant 8 : index
    %16 = vector.load %arg6[%c0_14, %c8] : memref<8x16xf32, #tpu.memory_space<vmem>>, vector<8x8xf32>
    %c0_15 = arith.constant 0 : index
    %c0_16 = arith.constant 0 : index
    %c0_17 = arith.constant 0 : index
    %c0_18 = arith.constant 0 : index
    %17 = vector.load %arg2[%c0_15, %c0_16, %c0_17, %c0_18] : memref<1x8x8x18xf32, #tpu.memory_space<vmem>>, vector<1x1x8x18xf32>
    %18 = vector.shape_cast %17 : vector<1x1x8x18xf32> to vector<8x18xf32>
    %cst_19 = arith.constant dense<0.000000e+00> : vector<8x32xf32>
    %19 = tpu.matmul %18, %0, %cst_19 {dimension_numbers = #tpu.dot_dimension_numbers<[1], [0], [0], [1], [0, 0, 1, 1], [], []>} : vector<8x18xf32>, vector<18x32xf32>, vector<8x32xf32> -> vector<8x32xf32>
    %20 = vector.broadcast %1 : vector<1x32xf32> to vector<8x32xf32>
    %21 = arith.addf %19, %20 : vector<8x32xf32>
    %cst_20 = arith.constant 0.000000e+00 : f32
    %22 = vector.broadcast %cst_20 : f32 to vector<8x32xf32>
    %23 = arith.maximumf %21, %22 : vector<8x32xf32>
    %cst_21 = arith.constant dense<0.000000e+00> : vector<8x48xf32>
    %24 = tpu.matmul %23, %2, %cst_21 {dimension_numbers = #tpu.dot_dimension_numbers<[1], [0], [0], [1], [0, 0, 1, 1], [], []>} : vector<8x32xf32>, vector<32x48xf32>, vector<8x48xf32> -> vector<8x48xf32>
    %25 = vector.broadcast %3 : vector<1x48xf32> to vector<8x48xf32>
    %26 = arith.addf %24, %25 : vector<8x48xf32>
    %27 = vector.extract_strided_slice %26 {offsets = [0, 32], sizes = [8, 16], strides = [1, 1]} : vector<8x48xf32> to vector<8x16xf32>
    %cst_22 = arith.constant 0.000000e+00 : f32
    %28 = vector.broadcast %cst_22 : f32 to vector<8x16xf32>
    %29 = arith.maximumf %27, %28 : vector<8x16xf32>
    %30 = vector.extract_strided_slice %26 {offsets = [0, 0], sizes = [8, 32], strides = [1, 1]} : vector<8x48xf32> to vector<8x32xf32>
    %cst_23 = arith.constant dense<0.000000e+00> : vector<8x32xf32>
    %31 = tpu.matmul %29, %4, %cst_23 {dimension_numbers = #tpu.dot_dimension_numbers<[1], [0], [0], [1], [0, 0, 1, 1], [], []>} : vector<8x16xf32>, vector<16x32xf32>, vector<8x32xf32> -> vector<8x32xf32>
    %32 = arith.addf %30, %31 : vector<8x32xf32>
    %cst_24 = arith.constant 0.000000e+00 : f32
    %33 = vector.broadcast %cst_24 : f32 to vector<8x32xf32>
    %34 = arith.maximumf %32, %33 : vector<8x32xf32>
    %35 = tpu.concatenate %34, %15 in 1 : vector<8x32xf32>, vector<8x8xf32> -> vector<8x40xf32>
    %cst_25 = arith.constant dense<0.000000e+00> : vector<8x32xf32>
    %36 = tpu.matmul %35, %5, %cst_25 {dimension_numbers = #tpu.dot_dimension_numbers<[1], [0], [0], [1], [0, 0, 1, 1], [], []>} : vector<8x40xf32>, vector<40x32xf32>, vector<8x32xf32> -> vector<8x32xf32>
    %37 = vector.broadcast %6 : vector<1x32xf32> to vector<8x32xf32>
    %38 = arith.addf %36, %37 : vector<8x32xf32>
    %39 = vector.extract_strided_slice %38 {offsets = [0, 0], sizes = [8, 8], strides = [1, 1]} : vector<8x32xf32> to vector<8x8xf32>
    %40 = arith.negf %39 : vector<8x8xf32>
    %41 = math.exp %40 : vector<8x8xf32>
    %cst_26 = arith.constant 1.000000e+00 : f32
    %42 = vector.broadcast %cst_26 : f32 to vector<8x8xf32>
    %43 = arith.addf %42, %41 : vector<8x8xf32>
    %44 = arith.divf %42, %43 : vector<8x8xf32>
    %45 = vector.extract_strided_slice %38 {offsets = [0, 8], sizes = [8, 8], strides = [1, 1]} : vector<8x32xf32> to vector<8x8xf32>
    %46 = arith.negf %45 : vector<8x8xf32>
    %47 = math.exp %46 : vector<8x8xf32>
    %cst_27 = arith.constant 1.000000e+00 : f32
    %48 = vector.broadcast %cst_27 : f32 to vector<8x8xf32>
    %49 = arith.addf %48, %47 : vector<8x8xf32>
    %50 = arith.divf %48, %49 : vector<8x8xf32>
    %51 = vector.extract_strided_slice %38 {offsets = [0, 16], sizes = [8, 8], strides = [1, 1]} : vector<8x32xf32> to vector<8x8xf32>
    %52 = math.tanh %51 : vector<8x8xf32>
    %53 = vector.extract_strided_slice %38 {offsets = [0, 24], sizes = [8, 8], strides = [1, 1]} : vector<8x32xf32> to vector<8x8xf32>
    %54 = arith.negf %53 : vector<8x8xf32>
    %55 = math.exp %54 : vector<8x8xf32>
    %cst_28 = arith.constant 1.000000e+00 : f32
    %56 = vector.broadcast %cst_28 : f32 to vector<8x8xf32>
    %57 = arith.addf %56, %55 : vector<8x8xf32>
    %58 = arith.divf %56, %57 : vector<8x8xf32>
    %59 = arith.mulf %50, %16 : vector<8x8xf32>
    %60 = arith.mulf %44, %52 : vector<8x8xf32>
    %61 = arith.addf %59, %60 : vector<8x8xf32>
    %62 = math.tanh %61 : vector<8x8xf32>
    %63 = arith.mulf %58, %62 : vector<8x8xf32>
    %cst_29 = arith.constant dense<0.000000e+00> : vector<8x17xf32>
    %64 = tpu.matmul %63, %7, %cst_29 {dimension_numbers = #tpu.dot_dimension_numbers<[1], [0], [0], [1], [0, 0, 1, 1], [], []>} : vector<8x8xf32>, vector<8x17xf32>, vector<8x17xf32> -> vector<8x17xf32>
    %65 = vector.broadcast %8 : vector<1x17xf32> to vector<8x17xf32>
    %66 = arith.addf %64, %65 : vector<8x17xf32>
    %67 = vector.extract_strided_slice %66 {offsets = [0, 16], sizes = [8, 1], strides = [1, 1]} : vector<8x17xf32> to vector<8x1xf32>
    %68 = arith.negf %67 : vector<8x1xf32>
    %69 = math.exp %68 : vector<8x1xf32>
    %cst_30 = arith.constant 1.000000e+00 : f32
    %70 = vector.broadcast %cst_30 : f32 to vector<8x1xf32>
    %71 = arith.addf %70, %69 : vector<8x1xf32>
    %72 = arith.divf %70, %71 : vector<8x1xf32>
    %73 = vector.extract_strided_slice %66 {offsets = [0, 0], sizes = [8, 16], strides = [1, 1]} : vector<8x17xf32> to vector<8x16xf32>
    %cst_31 = arith.constant dense<0.000000e+00> : vector<8x17xf32>
    %74 = tpu.matmul %73, %9, %cst_31 {dimension_numbers = #tpu.dot_dimension_numbers<[1], [0], [0], [1], [0, 0, 1, 1], [], []>} : vector<8x16xf32>, vector<16x17xf32>, vector<8x17xf32> -> vector<8x17xf32>
    %75 = vector.broadcast %10 : vector<1x17xf32> to vector<8x17xf32>
    %76 = arith.addf %74, %75 : vector<8x17xf32>
    %77 = vector.extract_strided_slice %76 {offsets = [0, 0], sizes = [8, 16], strides = [1, 1]} : vector<8x17xf32> to vector<8x16xf32>
    %78 = vector.extract_strided_slice %76 {offsets = [0, 16], sizes = [8, 1], strides = [1, 1]} : vector<8x17xf32> to vector<8x1xf32>
    %cst_32 = arith.constant dense<0xFF800000> : vector<8xf32>
    %79 = vector.multi_reduction <maximumf>, %77, %cst_32 [1] : vector<8x16xf32> to vector<8xf32>
    %80 = vector.shape_cast %79 : vector<8xf32> to vector<8x1xf32>
    %81 = vector.broadcast %80 : vector<8x1xf32> to vector<8x16xf32>
    %82 = arith.subf %77, %81 : vector<8x16xf32>
    %83 = math.exp %82 : vector<8x16xf32>
    %cst_33 = arith.constant dense<0.000000e+00> : vector<8xf32>
    %84 = vector.multi_reduction <add>, %83, %cst_33 [1] : vector<8x16xf32> to vector<8xf32>
    %85 = vector.shape_cast %84 : vector<8xf32> to vector<8x1xf32>
    %86 = tpu.reciprocal %85 : vector<8x1xf32> -> vector<8x1xf32>
    %87 = vector.broadcast %86 : vector<8x1xf32> to vector<8x16xf32>
    %88 = arith.mulf %83, %87 : vector<8x16xf32>
    %89 = tpu.concatenate %88, %63, %61, %72, %78, %14 in 1 : vector<8x16xf32>, vector<8x8xf32>, vector<8x8xf32>, vector<8x1xf32>, vector<8x1xf32>, vector<8x94xf32> -> vector<8x128xf32>
    %c0_34 = arith.constant 0 : index
    %c0_35 = arith.constant 0 : index
    %c0_36 = arith.constant 0 : index
    %c0_37 = arith.constant 0 : index
    %90 = vector.load %arg5[%c0_34, %c0_35, %c0_36, %c0_37] : memref<1x8x8x128xf32, #tpu.memory_space<vmem>>, vector<1x1x8x128xf32>
    %91 = vector.shape_cast %90 : vector<1x1x8x128xf32> to vector<8x128xf32>
    %92 = vector.shape_cast %89 : vector<8x128xf32> to vector<1x1x8x128xf32>
    tpu.vector_store %arg5[%c0_34, %c0_35, %c0_36, %c0_37], %92 {strides = array<i32>} : memref<1x8x8x128xf32, #tpu.memory_space<vmem>>, vector<1x1x8x128xf32>,
    %c0_38 = arith.constant 0 : index
    %c1 = arith.constant 1 : index
    %c0_39 = arith.constant 0 : index
    %c0_40 = arith.constant 0 : index
    %93 = vector.load %arg2[%c0_38, %c1, %c0_39, %c0_40] : memref<1x8x8x18xf32, #tpu.memory_space<vmem>>, vector<1x1x8x18xf32>
    %94 = vector.shape_cast %93 : vector<1x1x8x18xf32> to vector<8x18xf32>
    %cst_41 = arith.constant dense<0.000000e+00> : vector<8x32xf32>
    %95 = tpu.matmul %94, %0, %cst_41 {dimension_numbers = #tpu.dot_dimension_numbers<[1], [0], [0], [1], [0, 0, 1, 1], [], []>} : vector<8x18xf32>, vector<18x32xf32>, vector<8x32xf32> -> vector<8x32xf32>
    %96 = vector.broadcast %1 : vector<1x32xf32> to vector<8x32xf32>
    %97 = arith.addf %95, %96 : vector<8x32xf32>
    %cst_42 = arith.constant 0.000000e+00 : f32
    %98 = vector.broadcast %cst_42 : f32 to vector<8x32xf32>
    %99 = arith.maximumf %97, %98 : vector<8x32xf32>
    %cst_43 = arith.constant dense<0.000000e+00> : vector<8x48xf32>
    %100 = tpu.matmul %99, %2, %cst_43 {dimension_numbers = #tpu.dot_dimension_numbers<[1], [0], [0], [1], [0, 0, 1, 1], [], []>} : vector<8x32xf32>, vector<32x48xf32>, vector<8x48xf32> -> vector<8x48xf32>
    %101 = vector.broadcast %3 : vector<1x48xf32> to vector<8x48xf32>
    %102 = arith.addf %100, %101 : vector<8x48xf32>
    %103 = vector.extract_strided_slice %102 {offsets = [0, 32], sizes = [8, 16], strides = [1, 1]} : vector<8x48xf32> to vector<8x16xf32>
    %cst_44 = arith.constant 0.000000e+00 : f32
    %104 = vector.broadcast %cst_44 : f32 to vector<8x16xf32>
    %105 = arith.maximumf %103, %104 : vector<8x16xf32>
    %106 = vector.extract_strided_slice %102 {offsets = [0, 0], sizes = [8, 32], strides = [1, 1]} : vector<8x48xf32> to vector<8x32xf32>
    %cst_45 = arith.constant dense<0.000000e+00> : vector<8x32xf32>
    %107 = tpu.matmul %105, %4, %cst_45 {dimension_numbers = #tpu.dot_dimension_numbers<[1], [0], [0], [1], [0, 0, 1, 1], [], []>} : vector<8x16xf32>, vector<16x32xf32>, vector<8x32xf32> -> vector<8x32xf32>
    %108 = arith.addf %106, %107 : vector<8x32xf32>
    %cst_46 = arith.constant 0.000000e+00 : f32
    %109 = vector.broadcast %cst_46 : f32 to vector<8x32xf32>
    %110 = arith.maximumf %108, %109 : vector<8x32xf32>
    %111 = tpu.concatenate %110, %63 in 1 : vector<8x32xf32>, vector<8x8xf32> -> vector<8x40xf32>
    %cst_47 = arith.constant dense<0.000000e+00> : vector<8x32xf32>
    %112 = tpu.matmul %111, %5, %cst_47 {dimension_numbers = #tpu.dot_dimension_numbers<[1], [0], [0], [1], [0, 0, 1, 1], [], []>} : vector<8x40xf32>, vector<40x32xf32>, vector<8x32xf32> -> vector<8x32xf32>
    %113 = vector.broadcast %6 : vector<1x32xf32> to vector<8x32xf32>
    %114 = arith.addf %112, %113 : vector<8x32xf32>
    %115 = vector.extract_strided_slice %114 {offsets = [0, 0], sizes = [8, 8], strides = [1, 1]} : vector<8x32xf32> to vector<8x8xf32>
    %116 = arith.negf %115 : vector<8x8xf32>
    %117 = math.exp %116 : vector<8x8xf32>
    %cst_48 = arith.constant 1.000000e+00 : f32
    %118 = vector.broadcast %cst_48 : f32 to vector<8x8xf32>
    %119 = arith.addf %118, %117 : vector<8x8xf32>
    %120 = arith.divf %118, %119 : vector<8x8xf32>
    %121 = vector.extract_strided_slice %114 {offsets = [0, 8], sizes = [8, 8], strides = [1, 1]} : vector<8x32xf32> to vector<8x8xf32>
    %122 = arith.negf %121 : vector<8x8xf32>
    %123 = math.exp %122 : vector<8x8xf32>
    %cst_49 = arith.constant 1.000000e+00 : f32
    %124 = vector.broadcast %cst_49 : f32 to vector<8x8xf32>
    %125 = arith.addf %124, %123 : vector<8x8xf32>
    %126 = arith.divf %124, %125 : vector<8x8xf32>
    %127 = vector.extract_strided_slice %114 {offsets = [0, 16], sizes = [8, 8], strides = [1, 1]} : vector<8x32xf32> to vector<8x8xf32>
    %128 = math.tanh %127 : vector<8x8xf32>
    %129 = vector.extract_strided_slice %114 {offsets = [0, 24], sizes = [8, 8], strides = [1, 1]} : vector<8x32xf32> to vector<8x8xf32>
    %130 = arith.negf %129 : vector<8x8xf32>
    %131 = math.exp %130 : vector<8x8xf32>
    %cst_50 = arith.constant 1.000000e+00 : f32
    %132 = vector.broadcast %cst_50 : f32 to vector<8x8xf32>
    %133 = arith.addf %132, %131 : vector<8x8xf32>
    %134 = arith.divf %132, %133 : vector<8x8xf32>
    %135 = arith.mulf %126, %61 : vector<8x8xf32>
    %136 = arith.mulf %120, %128 : vector<8x8xf32>
    %137 = arith.addf %135, %136 : vector<8x8xf32>
    %138 = math.tanh %137 : vector<8x8xf32>
    %139 = arith.mulf %134, %138 : vector<8x8xf32>
    %cst_51 = arith.constant dense<0.000000e+00> : vector<8x17xf32>
    %140 = tpu.matmul %139, %7, %cst_51 {dimension_numbers = #tpu.dot_dimension_numbers<[1], [0], [0], [1], [0, 0, 1, 1], [], []>} : vector<8x8xf32>, vector<8x17xf32>, vector<8x17xf32> -> vector<8x17xf32>
    %141 = vector.broadcast %8 : vector<1x17xf32> to vector<8x17xf32>
    %142 = arith.addf %140, %141 : vector<8x17xf32>
    %143 = vector.extract_strided_slice %142 {offsets = [0, 16], sizes = [8, 1], strides = [1, 1]} : vector<8x17xf32> to vector<8x1xf32>
    %144 = arith.negf %143 : vector<8x1xf32>
    %145 = math.exp %144 : vector<8x1xf32>
    %cst_52 = arith.constant 1.000000e+00 : f32
    %146 = vector.broadcast %cst_52 : f32 to vector<8x1xf32>
    %147 = arith.addf %146, %145 : vector<8x1xf32>
    %148 = arith.divf %146, %147 : vector<8x1xf32>
    %149 = vector.extract_strided_slice %142 {offsets = [0, 0], sizes = [8, 16], strides = [1, 1]} : vector<8x17xf32> to vector<8x16xf32>
    %cst_53 = arith.constant dense<0.000000e+00> : vector<8x17xf32>
    %150 = tpu.matmul %149, %9, %cst_53 {dimension_numbers = #tpu.dot_dimension_numbers<[1], [0], [0], [1], [0, 0, 1, 1], [], []>} : vector<8x16xf32>, vector<16x17xf32>, vector<8x17xf32> -> vector<8x17xf32>
    %151 = vector.broadcast %10 : vector<1x17xf32> to vector<8x17xf32>
    %152 = arith.addf %150, %151 : vector<8x17xf32>
    %153 = vector.extract_strided_slice %152 {offsets = [0, 0], sizes = [8, 16], strides = [1, 1]} : vector<8x17xf32> to vector<8x16xf32>
    %154 = vector.extract_strided_slice %152 {offsets = [0, 16], sizes = [8, 1], strides = [1, 1]} : vector<8x17xf32> to vector<8x1xf32>
    %cst_54 = arith.constant dense<0xFF800000> : vector<8xf32>
    %155 = vector.multi_reduction <maximumf>, %153, %cst_54 [1] : vector<8x16xf32> to vector<8xf32>
    %156 = vector.shape_cast %155 : vector<8xf32> to vector<8x1xf32>
    %157 = vector.broadcast %156 : vector<8x1xf32> to vector<8x16xf32>
    %158 = arith.subf %153, %157 : vector<8x16xf32>
    %159 = math.exp %158 : vector<8x16xf32>
    %cst_55 = arith.constant dense<0.000000e+00> : vector<8xf32>
    %160 = vector.multi_reduction <add>, %159, %cst_55 [1] : vector<8x16xf32> to vector<8xf32>
    %161 = vector.shape_cast %160 : vector<8xf32> to vector<8x1xf32>
    %162 = tpu.reciprocal %161 : vector<8x1xf32> -> vector<8x1xf32>
    %163 = vector.broadcast %162 : vector<8x1xf32> to vector<8x16xf32>
    %164 = arith.mulf %159, %163 : vector<8x16xf32>
    %165 = tpu.concatenate %164, %139, %137, %148, %154, %14 in 1 : vector<8x16xf32>, vector<8x8xf32>, vector<8x8xf32>, vector<8x1xf32>, vector<8x1xf32>, vector<8x94xf32> -> vector<8x128xf32>
    %c0_56 = arith.constant 0 : index
    %c1_57 = arith.constant 1 : index
    %c0_58 = arith.constant 0 : index
    %c0_59 = arith.constant 0 : index
    %166 = vector.load %arg5[%c0_56, %c1_57, %c0_58, %c0_59] : memref<1x8x8x128xf32, #tpu.memory_space<vmem>>, vector<1x1x8x128xf32>
    %167 = vector.shape_cast %166 : vector<1x1x8x128xf32> to vector<8x128xf32>
    %168 = vector.shape_cast %165 : vector<8x128xf32> to vector<1x1x8x128xf32>
    tpu.vector_store %arg5[%c0_56, %c1_57, %c0_58, %c0_59], %168 {strides = array<i32>} : memref<1x8x8x128xf32, #tpu.memory_space<vmem>>, vector<1x1x8x128xf32>,
    %c0_60 = arith.constant 0 : index
    %c2 = arith.constant 2 : index
    %c0_61 = arith.constant 0 : index
    %c0_62 = arith.constant 0 : index
    %169 = vector.load %arg2[%c0_60, %c2, %c0_61, %c0_62] : memref<1x8x8x18xf32, #tpu.memory_space<vmem>>, vector<1x1x8x18xf32>
    %170 = vector.shape_cast %169 : vector<1x1x8x18xf32> to vector<8x18xf32>
    %cst_63 = arith.constant dense<0.000000e+00> : vector<8x32xf32>
    %171 = tpu.matmul %170, %0, %cst_63 {dimension_numbers = #tpu.dot_dimension_numbers<[1], [0], [0], [1], [0, 0, 1, 1], [], []>} : vector<8x18xf32>, vector<18x32xf32>, vector<8x32xf32> -> vector<8x32xf32>
    %172 = vector.broadcast %1 : vector<1x32xf32> to vector<8x32xf32>
    %173 = arith.addf %171, %172 : vector<8x32xf32>
    %cst_64 = arith.constant 0.000000e+00 : f32
    %174 = vector.broadcast %cst_64 : f32 to vector<8x32xf32>
    %175 = arith.maximumf %173, %174 : vector<8x32xf32>
    %cst_65 = arith.constant dense<0.000000e+00> : vector<8x48xf32>
    %176 = tpu.matmul %175, %2, %cst_65 {dimension_numbers = #tpu.dot_dimension_numbers<[1], [0], [0], [1], [0, 0, 1, 1], [], []>} : vector<8x32xf32>, vector<32x48xf32>, vector<8x48xf32> -> vector<8x48xf32>
    %177 = vector.broadcast %3 : vector<1x48xf32> to vector<8x48xf32>
    %178 = arith.addf %176, %177 : vector<8x48xf32>
    %179 = vector.extract_strided_slice %178 {offsets = [0, 32], sizes = [8, 16], strides = [1, 1]} : vector<8x48xf32> to vector<8x16xf32>
    %cst_66 = arith.constant 0.000000e+00 : f32
    %180 = vector.broadcast %cst_66 : f32 to vector<8x16xf32>
    %181 = arith.maximumf %179, %180 : vector<8x16xf32>
    %182 = vector.extract_strided_slice %178 {offsets = [0, 0], sizes = [8, 32], strides = [1, 1]} : vector<8x48xf32> to vector<8x32xf32>
    %cst_67 = arith.constant dense<0.000000e+00> : vector<8x32xf32>
    %183 = tpu.matmul %181, %4, %cst_67 {dimension_numbers = #tpu.dot_dimension_numbers<[1], [0], [0], [1], [0, 0, 1, 1], [], []>} : vector<8x16xf32>, vector<16x32xf32>, vector<8x32xf32> -> vector<8x32xf32>
    %184 = arith.addf %182, %183 : vector<8x32xf32>
    %cst_68 = arith.constant 0.000000e+00 : f32
    %185 = vector.broadcast %cst_68 : f32 to vector<8x32xf32>
    %186 = arith.maximumf %184, %185 : vector<8x32xf32>
    %187 = tpu.concatenate %186, %139 in 1 : vector<8x32xf32>, vector<8x8xf32> -> vector<8x40xf32>
    %cst_69 = arith.constant dense<0.000000e+00> : vector<8x32xf32>
    %188 = tpu.matmul %187, %5, %cst_69 {dimension_numbers = #tpu.dot_dimension_numbers<[1], [0], [0], [1], [0, 0, 1, 1], [], []>} : vector<8x40xf32>, vector<40x32xf32>, vector<8x32xf32> -> vector<8x32xf32>
    %189 = vector.broadcast %6 : vector<1x32xf32> to vector<8x32xf32>
    %190 = arith.addf %188, %189 : vector<8x32xf32>
    %191 = vector.extract_strided_slice %190 {offsets = [0, 0], sizes = [8, 8], strides = [1, 1]} : vector<8x32xf32> to vector<8x8xf32>
    %192 = arith.negf %191 : vector<8x8xf32>
    %193 = math.exp %192 : vector<8x8xf32>
    %cst_70 = arith.constant 1.000000e+00 : f32
    %194 = vector.broadcast %cst_70 : f32 to vector<8x8xf32>
    %195 = arith.addf %194, %193 : vector<8x8xf32>
    %196 = arith.divf %194, %195 : vector<8x8xf32>
    %197 = vector.extract_strided_slice %190 {offsets = [0, 8], sizes = [8, 8], strides = [1, 1]} : vector<8x32xf32> to vector<8x8xf32>
    %198 = arith.negf %197 : vector<8x8xf32>
    %199 = math.exp %198 : vector<8x8xf32>
    %cst_71 = arith.constant 1.000000e+00 : f32
    %200 = vector.broadcast %cst_71 : f32 to vector<8x8xf32>
    %201 = arith.addf %200, %199 : vector<8x8xf32>
    %202 = arith.divf %200, %201 : vector<8x8xf32>
    %203 = vector.extract_strided_slice %190 {offsets = [0, 16], sizes = [8, 8], strides = [1, 1]} : vector<8x32xf32> to vector<8x8xf32>
    %204 = math.tanh %203 : vector<8x8xf32>
    %205 = vector.extract_strided_slice %190 {offsets = [0, 24], sizes = [8, 8], strides = [1, 1]} : vector<8x32xf32> to vector<8x8xf32>
    %206 = arith.negf %205 : vector<8x8xf32>
    %207 = math.exp %206 : vector<8x8xf32>
    %cst_72 = arith.constant 1.000000e+00 : f32
    %208 = vector.broadcast %cst_72 : f32 to vector<8x8xf32>
    %209 = arith.addf %208, %207 : vector<8x8xf32>
    %210 = arith.divf %208, %209 : vector<8x8xf32>
    %211 = arith.mulf %202, %137 : vector<8x8xf32>
    %212 = arith.mulf %196, %204 : vector<8x8xf32>
    %213 = arith.addf %211, %212 : vector<8x8xf32>
    %214 = math.tanh %213 : vector<8x8xf32>
    %215 = arith.mulf %210, %214 : vector<8x8xf32>
    %cst_73 = arith.constant dense<0.000000e+00> : vector<8x17xf32>
    %216 = tpu.matmul %215, %7, %cst_73 {dimension_numbers = #tpu.dot_dimension_numbers<[1], [0], [0], [1], [0, 0, 1, 1], [], []>} : vector<8x8xf32>, vector<8x17xf32>, vector<8x17xf32> -> vector<8x17xf32>
    %217 = vector.broadcast %8 : vector<1x17xf32> to vector<8x17xf32>
    %218 = arith.addf %216, %217 : vector<8x17xf32>
    %219 = vector.extract_strided_slice %218 {offsets = [0, 16], sizes = [8, 1], strides = [1, 1]} : vector<8x17xf32> to vector<8x1xf32>
    %220 = arith.negf %219 : vector<8x1xf32>
    %221 = math.exp %220 : vector<8x1xf32>
    %cst_74 = arith.constant 1.000000e+00 : f32
    %222 = vector.broadcast %cst_74 : f32 to vector<8x1xf32>
    %223 = arith.addf %222, %221 : vector<8x1xf32>
    %224 = arith.divf %222, %223 : vector<8x1xf32>
    %225 = vector.extract_strided_slice %218 {offsets = [0, 0], sizes = [8, 16], strides = [1, 1]} : vector<8x17xf32> to vector<8x16xf32>
    %cst_75 = arith.constant dense<0.000000e+00> : vector<8x17xf32>
    %226 = tpu.matmul %225, %9, %cst_75 {dimension_numbers = #tpu.dot_dimension_numbers<[1], [0], [0], [1], [0, 0, 1, 1], [], []>} : vector<8x16xf32>, vector<16x17xf32>, vector<8x17xf32> -> vector<8x17xf32>
    %227 = vector.broadcast %10 : vector<1x17xf32> to vector<8x17xf32>
    %228 = arith.addf %226, %227 : vector<8x17xf32>
    %229 = vector.extract_strided_slice %228 {offsets = [0, 0], sizes = [8, 16], strides = [1, 1]} : vector<8x17xf32> to vector<8x16xf32>
    %230 = vector.extract_strided_slice %228 {offsets = [0, 16], sizes = [8, 1], strides = [1, 1]} : vector<8x17xf32> to vector<8x1xf32>
    %cst_76 = arith.constant dense<0xFF800000> : vector<8xf32>
    %231 = vector.multi_reduction <maximumf>, %229, %cst_76 [1] : vector<8x16xf32> to vector<8xf32>
    %232 = vector.shape_cast %231 : vector<8xf32> to vector<8x1xf32>
    %233 = vector.broadcast %232 : vector<8x1xf32> to vector<8x16xf32>
    %234 = arith.subf %229, %233 : vector<8x16xf32>
    %235 = math.exp %234 : vector<8x16xf32>
    %cst_77 = arith.constant dense<0.000000e+00> : vector<8xf32>
    %236 = vector.multi_reduction <add>, %235, %cst_77 [1] : vector<8x16xf32> to vector<8xf32>
    %237 = vector.shape_cast %236 : vector<8xf32> to vector<8x1xf32>
    %238 = tpu.reciprocal %237 : vector<8x1xf32> -> vector<8x1xf32>
    %239 = vector.broadcast %238 : vector<8x1xf32> to vector<8x16xf32>
    %240 = arith.mulf %235, %239 : vector<8x16xf32>
    %241 = tpu.concatenate %240, %215, %213, %224, %230, %14 in 1 : vector<8x16xf32>, vector<8x8xf32>, vector<8x8xf32>, vector<8x1xf32>, vector<8x1xf32>, vector<8x94xf32> -> vector<8x128xf32>
    %c0_78 = arith.constant 0 : index
    %c2_79 = arith.constant 2 : index
    %c0_80 = arith.constant 0 : index
    %c0_81 = arith.constant 0 : index
    %242 = vector.load %arg5[%c0_78, %c2_79, %c0_80, %c0_81] : memref<1x8x8x128xf32, #tpu.memory_space<vmem>>, vector<1x1x8x128xf32>
    %243 = vector.shape_cast %242 : vector<1x1x8x128xf32> to vector<8x128xf32>
    %244 = vector.shape_cast %241 : vector<8x128xf32> to vector<1x1x8x128xf32>
    tpu.vector_store %arg5[%c0_78, %c2_79, %c0_80, %c0_81], %244 {strides = array<i32>} : memref<1x8x8x128xf32, #tpu.memory_space<vmem>>, vector<1x1x8x128xf32>,
    %c0_82 = arith.constant 0 : index
    %c3 = arith.constant 3 : index
    %c0_83 = arith.constant 0 : index
    %c0_84 = arith.constant 0 : index
    %245 = vector.load %arg2[%c0_82, %c3, %c0_83, %c0_84] : memref<1x8x8x18xf32, #tpu.memory_space<vmem>>, vector<1x1x8x18xf32>
    %246 = vector.shape_cast %245 : vector<1x1x8x18xf32> to vector<8x18xf32>
    %cst_85 = arith.constant dense<0.000000e+00> : vector<8x32xf32>
    %247 = tpu.matmul %246, %0, %cst_85 {dimension_numbers = #tpu.dot_dimension_numbers<[1], [0], [0], [1], [0, 0, 1, 1], [], []>} : vector<8x18xf32>, vector<18x32xf32>, vector<8x32xf32> -> vector<8x32xf32>
    %248 = vector.broadcast %1 : vector<1x32xf32> to vector<8x32xf32>
    %249 = arith.addf %247, %248 : vector<8x32xf32>
    %cst_86 = arith.constant 0.000000e+00 : f32
    %250 = vector.broadcast %cst_86 : f32 to vector<8x32xf32>
    %251 = arith.maximumf %249, %250 : vector<8x32xf32>
    %cst_87 = arith.constant dense<0.000000e+00> : vector<8x48xf32>
    %252 = tpu.matmul %251, %2, %cst_87 {dimension_numbers = #tpu.dot_dimension_numbers<[1], [0], [0], [1], [0, 0, 1, 1], [], []>} : vector<8x32xf32>, vector<32x48xf32>, vector<8x48xf32> -> vector<8x48xf32>
    %253 = vector.broadcast %3 : vector<1x48xf32> to vector<8x48xf32>
    %254 = arith.addf %252, %253 : vector<8x48xf32>
    %255 = vector.extract_strided_slice %254 {offsets = [0, 32], sizes = [8, 16], strides = [1, 1]} : vector<8x48xf32> to vector<8x16xf32>
    %cst_88 = arith.constant 0.000000e+00 : f32
    %256 = vector.broadcast %cst_88 : f32 to vector<8x16xf32>
    %257 = arith.maximumf %255, %256 : vector<8x16xf32>
    %258 = vector.extract_strided_slice %254 {offsets = [0, 0], sizes = [8, 32], strides = [1, 1]} : vector<8x48xf32> to vector<8x32xf32>
    %cst_89 = arith.constant dense<0.000000e+00> : vector<8x32xf32>
    %259 = tpu.matmul %257, %4, %cst_89 {dimension_numbers = #tpu.dot_dimension_numbers<[1], [0], [0], [1], [0, 0, 1, 1], [], []>} : vector<8x16xf32>, vector<16x32xf32>, vector<8x32xf32> -> vector<8x32xf32>
    %260 = arith.addf %258, %259 : vector<8x32xf32>
    %cst_90 = arith.constant 0.000000e+00 : f32
    %261 = vector.broadcast %cst_90 : f32 to vector<8x32xf32>
    %262 = arith.maximumf %260, %261 : vector<8x32xf32>
    %263 = tpu.concatenate %262, %215 in 1 : vector<8x32xf32>, vector<8x8xf32> -> vector<8x40xf32>
    %cst_91 = arith.constant dense<0.000000e+00> : vector<8x32xf32>
    %264 = tpu.matmul %263, %5, %cst_91 {dimension_numbers = #tpu.dot_dimension_numbers<[1], [0], [0], [1], [0, 0, 1, 1], [], []>} : vector<8x40xf32>, vector<40x32xf32>, vector<8x32xf32> -> vector<8x32xf32>
    %265 = vector.broadcast %6 : vector<1x32xf32> to vector<8x32xf32>
    %266 = arith.addf %264, %265 : vector<8x32xf32>
    %267 = vector.extract_strided_slice %266 {offsets = [0, 0], sizes = [8, 8], strides = [1, 1]} : vector<8x32xf32> to vector<8x8xf32>
    %268 = arith.negf %267 : vector<8x8xf32>
    %269 = math.exp %268 : vector<8x8xf32>
    %cst_92 = arith.constant 1.000000e+00 : f32
    %270 = vector.broadcast %cst_92 : f32 to vector<8x8xf32>
    %271 = arith.addf %270, %269 : vector<8x8xf32>
    %272 = arith.divf %270, %271 : vector<8x8xf32>
    %273 = vector.extract_strided_slice %266 {offsets = [0, 8], sizes = [8, 8], strides = [1, 1]} : vector<8x32xf32> to vector<8x8xf32>
    %274 = arith.negf %273 : vector<8x8xf32>
    %275 = math.exp %274 : vector<8x8xf32>
    %cst_93 = arith.constant 1.000000e+00 : f32
    %276 = vector.broadcast %cst_93 : f32 to vector<8x8xf32>
    %277 = arith.addf %276, %275 : vector<8x8xf32>
    %278 = arith.divf %276, %277 : vector<8x8xf32>
    %279 = vector.extract_strided_slice %266 {offsets = [0, 16], sizes = [8, 8], strides = [1, 1]} : vector<8x32xf32> to vector<8x8xf32>
    %280 = math.tanh %279 : vector<8x8xf32>
    %281 = vector.extract_strided_slice %266 {offsets = [0, 24], sizes = [8, 8], strides = [1, 1]} : vector<8x32xf32> to vector<8x8xf32>
    %282 = arith.negf %281 : vector<8x8xf32>
    %283 = math.exp %282 : vector<8x8xf32>
    %cst_94 = arith.constant 1.000000e+00 : f32
    %284 = vector.broadcast %cst_94 : f32 to vector<8x8xf32>
    %285 = arith.addf %284, %283 : vector<8x8xf32>
    %286 = arith.divf %284, %285 : vector<8x8xf32>
    %287 = arith.mulf %278, %213 : vector<8x8xf32>
    %288 = arith.mulf %272, %280 : vector<8x8xf32>
    %289 = arith.addf %287, %288 : vector<8x8xf32>
    %290 = math.tanh %289 : vector<8x8xf32>
    %291 = arith.mulf %286, %290 : vector<8x8xf32>
    %cst_95 = arith.constant dense<0.000000e+00> : vector<8x17xf32>
    %292 = tpu.matmul %291, %7, %cst_95 {dimension_numbers = #tpu.dot_dimension_numbers<[1], [0], [0], [1], [0, 0, 1, 1], [], []>} : vector<8x8xf32>, vector<8x17xf32>, vector<8x17xf32> -> vector<8x17xf32>
    %293 = vector.broadcast %8 : vector<1x17xf32> to vector<8x17xf32>
    %294 = arith.addf %292, %293 : vector<8x17xf32>
    %295 = vector.extract_strided_slice %294 {offsets = [0, 16], sizes = [8, 1], strides = [1, 1]} : vector<8x17xf32> to vector<8x1xf32>
    %296 = arith.negf %295 : vector<8x1xf32>
    %297 = math.exp %296 : vector<8x1xf32>
    %cst_96 = arith.constant 1.000000e+00 : f32
    %298 = vector.broadcast %cst_96 : f32 to vector<8x1xf32>
    %299 = arith.addf %298, %297 : vector<8x1xf32>
    %300 = arith.divf %298, %299 : vector<8x1xf32>
    %301 = vector.extract_strided_slice %294 {offsets = [0, 0], sizes = [8, 16], strides = [1, 1]} : vector<8x17xf32> to vector<8x16xf32>
    %cst_97 = arith.constant dense<0.000000e+00> : vector<8x17xf32>
    %302 = tpu.matmul %301, %9, %cst_97 {dimension_numbers = #tpu.dot_dimension_numbers<[1], [0], [0], [1], [0, 0, 1, 1], [], []>} : vector<8x16xf32>, vector<16x17xf32>, vector<8x17xf32> -> vector<8x17xf32>
    %303 = vector.broadcast %10 : vector<1x17xf32> to vector<8x17xf32>
    %304 = arith.addf %302, %303 : vector<8x17xf32>
    %305 = vector.extract_strided_slice %304 {offsets = [0, 0], sizes = [8, 16], strides = [1, 1]} : vector<8x17xf32> to vector<8x16xf32>
    %306 = vector.extract_strided_slice %304 {offsets = [0, 16], sizes = [8, 1], strides = [1, 1]} : vector<8x17xf32> to vector<8x1xf32>
    %cst_98 = arith.constant dense<0xFF800000> : vector<8xf32>
    %307 = vector.multi_reduction <maximumf>, %305, %cst_98 [1] : vector<8x16xf32> to vector<8xf32>
    %308 = vector.shape_cast %307 : vector<8xf32> to vector<8x1xf32>
    %309 = vector.broadcast %308 : vector<8x1xf32> to vector<8x16xf32>
    %310 = arith.subf %305, %309 : vector<8x16xf32>
    %311 = math.exp %310 : vector<8x16xf32>
    %cst_99 = arith.constant dense<0.000000e+00> : vector<8xf32>
    %312 = vector.multi_reduction <add>, %311, %cst_99 [1] : vector<8x16xf32> to vector<8xf32>
    %313 = vector.shape_cast %312 : vector<8xf32> to vector<8x1xf32>
    %314 = tpu.reciprocal %313 : vector<8x1xf32> -> vector<8x1xf32>
    %315 = vector.broadcast %314 : vector<8x1xf32> to vector<8x16xf32>
    %316 = arith.mulf %311, %315 : vector<8x16xf32>
    %317 = tpu.concatenate %316, %291, %289, %300, %306, %14 in 1 : vector<8x16xf32>, vector<8x8xf32>, vector<8x8xf32>, vector<8x1xf32>, vector<8x1xf32>, vector<8x94xf32> -> vector<8x128xf32>
    %c0_100 = arith.constant 0 : index
    %c3_101 = arith.constant 3 : index
    %c0_102 = arith.constant 0 : index
    %c0_103 = arith.constant 0 : index
    %318 = vector.load %arg5[%c0_100, %c3_101, %c0_102, %c0_103] : memref<1x8x8x128xf32, #tpu.memory_space<vmem>>, vector<1x1x8x128xf32>
    %319 = vector.shape_cast %318 : vector<1x1x8x128xf32> to vector<8x128xf32>
    %320 = vector.shape_cast %317 : vector<8x128xf32> to vector<1x1x8x128xf32>
    tpu.vector_store %arg5[%c0_100, %c3_101, %c0_102, %c0_103], %320 {strides = array<i32>} : memref<1x8x8x128xf32, #tpu.memory_space<vmem>>, vector<1x1x8x128xf32>,
    %c0_104 = arith.constant 0 : index
    %c4 = arith.constant 4 : index
    %c0_105 = arith.constant 0 : index
    %c0_106 = arith.constant 0 : index
    %321 = vector.load %arg2[%c0_104, %c4, %c0_105, %c0_106] : memref<1x8x8x18xf32, #tpu.memory_space<vmem>>, vector<1x1x8x18xf32>
    %322 = vector.shape_cast %321 : vector<1x1x8x18xf32> to vector<8x18xf32>
    %cst_107 = arith.constant dense<0.000000e+00> : vector<8x32xf32>
    %323 = tpu.matmul %322, %0, %cst_107 {dimension_numbers = #tpu.dot_dimension_numbers<[1], [0], [0], [1], [0, 0, 1, 1], [], []>} : vector<8x18xf32>, vector<18x32xf32>, vector<8x32xf32> -> vector<8x32xf32>
    %324 = vector.broadcast %1 : vector<1x32xf32> to vector<8x32xf32>
    %325 = arith.addf %323, %324 : vector<8x32xf32>
    %cst_108 = arith.constant 0.000000e+00 : f32
    %326 = vector.broadcast %cst_108 : f32 to vector<8x32xf32>
    %327 = arith.maximumf %325, %326 : vector<8x32xf32>
    %cst_109 = arith.constant dense<0.000000e+00> : vector<8x48xf32>
    %328 = tpu.matmul %327, %2, %cst_109 {dimension_numbers = #tpu.dot_dimension_numbers<[1], [0], [0], [1], [0, 0, 1, 1], [], []>} : vector<8x32xf32>, vector<32x48xf32>, vector<8x48xf32> -> vector<8x48xf32>
    %329 = vector.broadcast %3 : vector<1x48xf32> to vector<8x48xf32>
    %330 = arith.addf %328, %329 : vector<8x48xf32>
    %331 = vector.extract_strided_slice %330 {offsets = [0, 32], sizes = [8, 16], strides = [1, 1]} : vector<8x48xf32> to vector<8x16xf32>
    %cst_110 = arith.constant 0.000000e+00 : f32
    %332 = vector.broadcast %cst_110 : f32 to vector<8x16xf32>
    %333 = arith.maximumf %331, %332 : vector<8x16xf32>
    %334 = vector.extract_strided_slice %330 {offsets = [0, 0], sizes = [8, 32], strides = [1, 1]} : vector<8x48xf32> to vector<8x32xf32>
    %cst_111 = arith.constant dense<0.000000e+00> : vector<8x32xf32>
    %335 = tpu.matmul %333, %4, %cst_111 {dimension_numbers = #tpu.dot_dimension_numbers<[1], [0], [0], [1], [0, 0, 1, 1], [], []>} : vector<8x16xf32>, vector<16x32xf32>, vector<8x32xf32> -> vector<8x32xf32>
    %336 = arith.addf %334, %335 : vector<8x32xf32>
    %cst_112 = arith.constant 0.000000e+00 : f32
    %337 = vector.broadcast %cst_112 : f32 to vector<8x32xf32>
    %338 = arith.maximumf %336, %337 : vector<8x32xf32>
    %339 = tpu.concatenate %338, %291 in 1 : vector<8x32xf32>, vector<8x8xf32> -> vector<8x40xf32>
    %cst_113 = arith.constant dense<0.000000e+00> : vector<8x32xf32>
    %340 = tpu.matmul %339, %5, %cst_113 {dimension_numbers = #tpu.dot_dimension_numbers<[1], [0], [0], [1], [0, 0, 1, 1], [], []>} : vector<8x40xf32>, vector<40x32xf32>, vector<8x32xf32> -> vector<8x32xf32>
    %341 = vector.broadcast %6 : vector<1x32xf32> to vector<8x32xf32>
    %342 = arith.addf %340, %341 : vector<8x32xf32>
    %343 = vector.extract_strided_slice %342 {offsets = [0, 0], sizes = [8, 8], strides = [1, 1]} : vector<8x32xf32> to vector<8x8xf32>
    %344 = arith.negf %343 : vector<8x8xf32>
    %345 = math.exp %344 : vector<8x8xf32>
    %cst_114 = arith.constant 1.000000e+00 : f32
    %346 = vector.broadcast %cst_114 : f32 to vector<8x8xf32>
    %347 = arith.addf %346, %345 : vector<8x8xf32>
    %348 = arith.divf %346, %347 : vector<8x8xf32>
    %349 = vector.extract_strided_slice %342 {offsets = [0, 8], sizes = [8, 8], strides = [1, 1]} : vector<8x32xf32> to vector<8x8xf32>
    %350 = arith.negf %349 : vector<8x8xf32>
    %351 = math.exp %350 : vector<8x8xf32>
    %cst_115 = arith.constant 1.000000e+00 : f32
    %352 = vector.broadcast %cst_115 : f32 to vector<8x8xf32>
    %353 = arith.addf %352, %351 : vector<8x8xf32>
    %354 = arith.divf %352, %353 : vector<8x8xf32>
    %355 = vector.extract_strided_slice %342 {offsets = [0, 16], sizes = [8, 8], strides = [1, 1]} : vector<8x32xf32> to vector<8x8xf32>
    %356 = math.tanh %355 : vector<8x8xf32>
    %357 = vector.extract_strided_slice %342 {offsets = [0, 24], sizes = [8, 8], strides = [1, 1]} : vector<8x32xf32> to vector<8x8xf32>
    %358 = arith.negf %357 : vector<8x8xf32>
    %359 = math.exp %358 : vector<8x8xf32>
    %cst_116 = arith.constant 1.000000e+00 : f32
    %360 = vector.broadcast %cst_116 : f32 to vector<8x8xf32>
    %361 = arith.addf %360, %359 : vector<8x8xf32>
    %362 = arith.divf %360, %361 : vector<8x8xf32>
    %363 = arith.mulf %354, %289 : vector<8x8xf32>
    %364 = arith.mulf %348, %356 : vector<8x8xf32>
    %365 = arith.addf %363, %364 : vector<8x8xf32>
    %366 = math.tanh %365 : vector<8x8xf32>
    %367 = arith.mulf %362, %366 : vector<8x8xf32>
    %cst_117 = arith.constant dense<0.000000e+00> : vector<8x17xf32>
    %368 = tpu.matmul %367, %7, %cst_117 {dimension_numbers = #tpu.dot_dimension_numbers<[1], [0], [0], [1], [0, 0, 1, 1], [], []>} : vector<8x8xf32>, vector<8x17xf32>, vector<8x17xf32> -> vector<8x17xf32>
    %369 = vector.broadcast %8 : vector<1x17xf32> to vector<8x17xf32>
    %370 = arith.addf %368, %369 : vector<8x17xf32>
    %371 = vector.extract_strided_slice %370 {offsets = [0, 16], sizes = [8, 1], strides = [1, 1]} : vector<8x17xf32> to vector<8x1xf32>
    %372 = arith.negf %371 : vector<8x1xf32>
    %373 = math.exp %372 : vector<8x1xf32>
    %cst_118 = arith.constant 1.000000e+00 : f32
    %374 = vector.broadcast %cst_118 : f32 to vector<8x1xf32>
    %375 = arith.addf %374, %373 : vector<8x1xf32>
    %376 = arith.divf %374, %375 : vector<8x1xf32>
    %377 = vector.extract_strided_slice %370 {offsets = [0, 0], sizes = [8, 16], strides = [1, 1]} : vector<8x17xf32> to vector<8x16xf32>
    %cst_119 = arith.constant dense<0.000000e+00> : vector<8x17xf32>
    %378 = tpu.matmul %377, %9, %cst_119 {dimension_numbers = #tpu.dot_dimension_numbers<[1], [0], [0], [1], [0, 0, 1, 1], [], []>} : vector<8x16xf32>, vector<16x17xf32>, vector<8x17xf32> -> vector<8x17xf32>
    %379 = vector.broadcast %10 : vector<1x17xf32> to vector<8x17xf32>
    %380 = arith.addf %378, %379 : vector<8x17xf32>
    %381 = vector.extract_strided_slice %380 {offsets = [0, 0], sizes = [8, 16], strides = [1, 1]} : vector<8x17xf32> to vector<8x16xf32>
    %382 = vector.extract_strided_slice %380 {offsets = [0, 16], sizes = [8, 1], strides = [1, 1]} : vector<8x17xf32> to vector<8x1xf32>
    %cst_120 = arith.constant dense<0xFF800000> : vector<8xf32>
    %383 = vector.multi_reduction <maximumf>, %381, %cst_120 [1] : vector<8x16xf32> to vector<8xf32>
    %384 = vector.shape_cast %383 : vector<8xf32> to vector<8x1xf32>
    %385 = vector.broadcast %384 : vector<8x1xf32> to vector<8x16xf32>
    %386 = arith.subf %381, %385 : vector<8x16xf32>
    %387 = math.exp %386 : vector<8x16xf32>
    %cst_121 = arith.constant dense<0.000000e+00> : vector<8xf32>
    %388 = vector.multi_reduction <add>, %387, %cst_121 [1] : vector<8x16xf32> to vector<8xf32>
    %389 = vector.shape_cast %388 : vector<8xf32> to vector<8x1xf32>
    %390 = tpu.reciprocal %389 : vector<8x1xf32> -> vector<8x1xf32>
    %391 = vector.broadcast %390 : vector<8x1xf32> to vector<8x16xf32>
    %392 = arith.mulf %387, %391 : vector<8x16xf32>
    %393 = tpu.concatenate %392, %367, %365, %376, %382, %14 in 1 : vector<8x16xf32>, vector<8x8xf32>, vector<8x8xf32>, vector<8x1xf32>, vector<8x1xf32>, vector<8x94xf32> -> vector<8x128xf32>
    %c0_122 = arith.constant 0 : index
    %c4_123 = arith.constant 4 : index
    %c0_124 = arith.constant 0 : index
    %c0_125 = arith.constant 0 : index
    %394 = vector.load %arg5[%c0_122, %c4_123, %c0_124, %c0_125] : memref<1x8x8x128xf32, #tpu.memory_space<vmem>>, vector<1x1x8x128xf32>
    %395 = vector.shape_cast %394 : vector<1x1x8x128xf32> to vector<8x128xf32>
    %396 = vector.shape_cast %393 : vector<8x128xf32> to vector<1x1x8x128xf32>
    tpu.vector_store %arg5[%c0_122, %c4_123, %c0_124, %c0_125], %396 {strides = array<i32>} : memref<1x8x8x128xf32, #tpu.memory_space<vmem>>, vector<1x1x8x128xf32>,
    %c0_126 = arith.constant 0 : index
    %c5 = arith.constant 5 : index
    %c0_127 = arith.constant 0 : index
    %c0_128 = arith.constant 0 : index
    %397 = vector.load %arg2[%c0_126, %c5, %c0_127, %c0_128] : memref<1x8x8x18xf32, #tpu.memory_space<vmem>>, vector<1x1x8x18xf32>
    %398 = vector.shape_cast %397 : vector<1x1x8x18xf32> to vector<8x18xf32>
    %cst_129 = arith.constant dense<0.000000e+00> : vector<8x32xf32>
    %399 = tpu.matmul %398, %0, %cst_129 {dimension_numbers = #tpu.dot_dimension_numbers<[1], [0], [0], [1], [0, 0, 1, 1], [], []>} : vector<8x18xf32>, vector<18x32xf32>, vector<8x32xf32> -> vector<8x32xf32>
    %400 = vector.broadcast %1 : vector<1x32xf32> to vector<8x32xf32>
    %401 = arith.addf %399, %400 : vector<8x32xf32>
    %cst_130 = arith.constant 0.000000e+00 : f32
    %402 = vector.broadcast %cst_130 : f32 to vector<8x32xf32>
    %403 = arith.maximumf %401, %402 : vector<8x32xf32>
    %cst_131 = arith.constant dense<0.000000e+00> : vector<8x48xf32>
    %404 = tpu.matmul %403, %2, %cst_131 {dimension_numbers = #tpu.dot_dimension_numbers<[1], [0], [0], [1], [0, 0, 1, 1], [], []>} : vector<8x32xf32>, vector<32x48xf32>, vector<8x48xf32> -> vector<8x48xf32>
    %405 = vector.broadcast %3 : vector<1x48xf32> to vector<8x48xf32>
    %406 = arith.addf %404, %405 : vector<8x48xf32>
    %407 = vector.extract_strided_slice %406 {offsets = [0, 32], sizes = [8, 16], strides = [1, 1]} : vector<8x48xf32> to vector<8x16xf32>
    %cst_132 = arith.constant 0.000000e+00 : f32
    %408 = vector.broadcast %cst_132 : f32 to vector<8x16xf32>
    %409 = arith.maximumf %407, %408 : vector<8x16xf32>
    %410 = vector.extract_strided_slice %406 {offsets = [0, 0], sizes = [8, 32], strides = [1, 1]} : vector<8x48xf32> to vector<8x32xf32>
    %cst_133 = arith.constant dense<0.000000e+00> : vector<8x32xf32>
    %411 = tpu.matmul %409, %4, %cst_133 {dimension_numbers = #tpu.dot_dimension_numbers<[1], [0], [0], [1], [0, 0, 1, 1], [], []>} : vector<8x16xf32>, vector<16x32xf32>, vector<8x32xf32> -> vector<8x32xf32>
    %412 = arith.addf %410, %411 : vector<8x32xf32>
    %cst_134 = arith.constant 0.000000e+00 : f32
    %413 = vector.broadcast %cst_134 : f32 to vector<8x32xf32>
    %414 = arith.maximumf %412, %413 : vector<8x32xf32>
    %415 = tpu.concatenate %414, %367 in 1 : vector<8x32xf32>, vector<8x8xf32> -> vector<8x40xf32>
    %cst_135 = arith.constant dense<0.000000e+00> : vector<8x32xf32>
    %416 = tpu.matmul %415, %5, %cst_135 {dimension_numbers = #tpu.dot_dimension_numbers<[1], [0], [0], [1], [0, 0, 1, 1], [], []>} : vector<8x40xf32>, vector<40x32xf32>, vector<8x32xf32> -> vector<8x32xf32>
    %417 = vector.broadcast %6 : vector<1x32xf32> to vector<8x32xf32>
    %418 = arith.addf %416, %417 : vector<8x32xf32>
    %419 = vector.extract_strided_slice %418 {offsets = [0, 0], sizes = [8, 8], strides = [1, 1]} : vector<8x32xf32> to vector<8x8xf32>
    %420 = arith.negf %419 : vector<8x8xf32>
    %421 = math.exp %420 : vector<8x8xf32>
    %cst_136 = arith.constant 1.000000e+00 : f32
    %422 = vector.broadcast %cst_136 : f32 to vector<8x8xf32>
    %423 = arith.addf %422, %421 : vector<8x8xf32>
    %424 = arith.divf %422, %423 : vector<8x8xf32>
    %425 = vector.extract_strided_slice %418 {offsets = [0, 8], sizes = [8, 8], strides = [1, 1]} : vector<8x32xf32> to vector<8x8xf32>
    %426 = arith.negf %425 : vector<8x8xf32>
    %427 = math.exp %426 : vector<8x8xf32>
    %cst_137 = arith.constant 1.000000e+00 : f32
    %428 = vector.broadcast %cst_137 : f32 to vector<8x8xf32>
    %429 = arith.addf %428, %427 : vector<8x8xf32>
    %430 = arith.divf %428, %429 : vector<8x8xf32>
    %431 = vector.extract_strided_slice %418 {offsets = [0, 16], sizes = [8, 8], strides = [1, 1]} : vector<8x32xf32> to vector<8x8xf32>
    %432 = math.tanh %431 : vector<8x8xf32>
    %433 = vector.extract_strided_slice %418 {offsets = [0, 24], sizes = [8, 8], strides = [1, 1]} : vector<8x32xf32> to vector<8x8xf32>
    %434 = arith.negf %433 : vector<8x8xf32>
    %435 = math.exp %434 : vector<8x8xf32>
    %cst_138 = arith.constant 1.000000e+00 : f32
    %436 = vector.broadcast %cst_138 : f32 to vector<8x8xf32>
    %437 = arith.addf %436, %435 : vector<8x8xf32>
    %438 = arith.divf %436, %437 : vector<8x8xf32>
    %439 = arith.mulf %430, %365 : vector<8x8xf32>
    %440 = arith.mulf %424, %432 : vector<8x8xf32>
    %441 = arith.addf %439, %440 : vector<8x8xf32>
    %442 = math.tanh %441 : vector<8x8xf32>
    %443 = arith.mulf %438, %442 : vector<8x8xf32>
    %cst_139 = arith.constant dense<0.000000e+00> : vector<8x17xf32>
    %444 = tpu.matmul %443, %7, %cst_139 {dimension_numbers = #tpu.dot_dimension_numbers<[1], [0], [0], [1], [0, 0, 1, 1], [], []>} : vector<8x8xf32>, vector<8x17xf32>, vector<8x17xf32> -> vector<8x17xf32>
    %445 = vector.broadcast %8 : vector<1x17xf32> to vector<8x17xf32>
    %446 = arith.addf %444, %445 : vector<8x17xf32>
    %447 = vector.extract_strided_slice %446 {offsets = [0, 16], sizes = [8, 1], strides = [1, 1]} : vector<8x17xf32> to vector<8x1xf32>
    %448 = arith.negf %447 : vector<8x1xf32>
    %449 = math.exp %448 : vector<8x1xf32>
    %cst_140 = arith.constant 1.000000e+00 : f32
    %450 = vector.broadcast %cst_140 : f32 to vector<8x1xf32>
    %451 = arith.addf %450, %449 : vector<8x1xf32>
    %452 = arith.divf %450, %451 : vector<8x1xf32>
    %453 = vector.extract_strided_slice %446 {offsets = [0, 0], sizes = [8, 16], strides = [1, 1]} : vector<8x17xf32> to vector<8x16xf32>
    %cst_141 = arith.constant dense<0.000000e+00> : vector<8x17xf32>
    %454 = tpu.matmul %453, %9, %cst_141 {dimension_numbers = #tpu.dot_dimension_numbers<[1], [0], [0], [1], [0, 0, 1, 1], [], []>} : vector<8x16xf32>, vector<16x17xf32>, vector<8x17xf32> -> vector<8x17xf32>
    %455 = vector.broadcast %10 : vector<1x17xf32> to vector<8x17xf32>
    %456 = arith.addf %454, %455 : vector<8x17xf32>
    %457 = vector.extract_strided_slice %456 {offsets = [0, 0], sizes = [8, 16], strides = [1, 1]} : vector<8x17xf32> to vector<8x16xf32>
    %458 = vector.extract_strided_slice %456 {offsets = [0, 16], sizes = [8, 1], strides = [1, 1]} : vector<8x17xf32> to vector<8x1xf32>
    %cst_142 = arith.constant dense<0xFF800000> : vector<8xf32>
    %459 = vector.multi_reduction <maximumf>, %457, %cst_142 [1] : vector<8x16xf32> to vector<8xf32>
    %460 = vector.shape_cast %459 : vector<8xf32> to vector<8x1xf32>
    %461 = vector.broadcast %460 : vector<8x1xf32> to vector<8x16xf32>
    %462 = arith.subf %457, %461 : vector<8x16xf32>
    %463 = math.exp %462 : vector<8x16xf32>
    %cst_143 = arith.constant dense<0.000000e+00> : vector<8xf32>
    %464 = vector.multi_reduction <add>, %463, %cst_143 [1] : vector<8x16xf32> to vector<8xf32>
    %465 = vector.shape_cast %464 : vector<8xf32> to vector<8x1xf32>
    %466 = tpu.reciprocal %465 : vector<8x1xf32> -> vector<8x1xf32>
    %467 = vector.broadcast %466 : vector<8x1xf32> to vector<8x16xf32>
    %468 = arith.mulf %463, %467 : vector<8x16xf32>
    %469 = tpu.concatenate %468, %443, %441, %452, %458, %14 in 1 : vector<8x16xf32>, vector<8x8xf32>, vector<8x8xf32>, vector<8x1xf32>, vector<8x1xf32>, vector<8x94xf32> -> vector<8x128xf32>
    %c0_144 = arith.constant 0 : index
    %c5_145 = arith.constant 5 : index
    %c0_146 = arith.constant 0 : index
    %c0_147 = arith.constant 0 : index
    %470 = vector.load %arg5[%c0_144, %c5_145, %c0_146, %c0_147] : memref<1x8x8x128xf32, #tpu.memory_space<vmem>>, vector<1x1x8x128xf32>
    %471 = vector.shape_cast %470 : vector<1x1x8x128xf32> to vector<8x128xf32>
    %472 = vector.shape_cast %469 : vector<8x128xf32> to vector<1x1x8x128xf32>
    tpu.vector_store %arg5[%c0_144, %c5_145, %c0_146, %c0_147], %472 {strides = array<i32>} : memref<1x8x8x128xf32, #tpu.memory_space<vmem>>, vector<1x1x8x128xf32>,
    %c0_148 = arith.constant 0 : index
    %c6 = arith.constant 6 : index
    %c0_149 = arith.constant 0 : index
    %c0_150 = arith.constant 0 : index
    %473 = vector.load %arg2[%c0_148, %c6, %c0_149, %c0_150] : memref<1x8x8x18xf32, #tpu.memory_space<vmem>>, vector<1x1x8x18xf32>
    %474 = vector.shape_cast %473 : vector<1x1x8x18xf32> to vector<8x18xf32>
    %cst_151 = arith.constant dense<0.000000e+00> : vector<8x32xf32>
    %475 = tpu.matmul %474, %0, %cst_151 {dimension_numbers = #tpu.dot_dimension_numbers<[1], [0], [0], [1], [0, 0, 1, 1], [], []>} : vector<8x18xf32>, vector<18x32xf32>, vector<8x32xf32> -> vector<8x32xf32>
    %476 = vector.broadcast %1 : vector<1x32xf32> to vector<8x32xf32>
    %477 = arith.addf %475, %476 : vector<8x32xf32>
    %cst_152 = arith.constant 0.000000e+00 : f32
    %478 = vector.broadcast %cst_152 : f32 to vector<8x32xf32>
    %479 = arith.maximumf %477, %478 : vector<8x32xf32>
    %cst_153 = arith.constant dense<0.000000e+00> : vector<8x48xf32>
    %480 = tpu.matmul %479, %2, %cst_153 {dimension_numbers = #tpu.dot_dimension_numbers<[1], [0], [0], [1], [0, 0, 1, 1], [], []>} : vector<8x32xf32>, vector<32x48xf32>, vector<8x48xf32> -> vector<8x48xf32>
    %481 = vector.broadcast %3 : vector<1x48xf32> to vector<8x48xf32>
    %482 = arith.addf %480, %481 : vector<8x48xf32>
    %483 = vector.extract_strided_slice %482 {offsets = [0, 32], sizes = [8, 16], strides = [1, 1]} : vector<8x48xf32> to vector<8x16xf32>
    %cst_154 = arith.constant 0.000000e+00 : f32
    %484 = vector.broadcast %cst_154 : f32 to vector<8x16xf32>
    %485 = arith.maximumf %483, %484 : vector<8x16xf32>
    %486 = vector.extract_strided_slice %482 {offsets = [0, 0], sizes = [8, 32], strides = [1, 1]} : vector<8x48xf32> to vector<8x32xf32>
    %cst_155 = arith.constant dense<0.000000e+00> : vector<8x32xf32>
    %487 = tpu.matmul %485, %4, %cst_155 {dimension_numbers = #tpu.dot_dimension_numbers<[1], [0], [0], [1], [0, 0, 1, 1], [], []>} : vector<8x16xf32>, vector<16x32xf32>, vector<8x32xf32> -> vector<8x32xf32>
    %488 = arith.addf %486, %487 : vector<8x32xf32>
    %cst_156 = arith.constant 0.000000e+00 : f32
    %489 = vector.broadcast %cst_156 : f32 to vector<8x32xf32>
    %490 = arith.maximumf %488, %489 : vector<8x32xf32>
    %491 = tpu.concatenate %490, %443 in 1 : vector<8x32xf32>, vector<8x8xf32> -> vector<8x40xf32>
    %cst_157 = arith.constant dense<0.000000e+00> : vector<8x32xf32>
    %492 = tpu.matmul %491, %5, %cst_157 {dimension_numbers = #tpu.dot_dimension_numbers<[1], [0], [0], [1], [0, 0, 1, 1], [], []>} : vector<8x40xf32>, vector<40x32xf32>, vector<8x32xf32> -> vector<8x32xf32>
    %493 = vector.broadcast %6 : vector<1x32xf32> to vector<8x32xf32>
    %494 = arith.addf %492, %493 : vector<8x32xf32>
    %495 = vector.extract_strided_slice %494 {offsets = [0, 0], sizes = [8, 8], strides = [1, 1]} : vector<8x32xf32> to vector<8x8xf32>
    %496 = arith.negf %495 : vector<8x8xf32>
    %497 = math.exp %496 : vector<8x8xf32>
    %cst_158 = arith.constant 1.000000e+00 : f32
    %498 = vector.broadcast %cst_158 : f32 to vector<8x8xf32>
    %499 = arith.addf %498, %497 : vector<8x8xf32>
    %500 = arith.divf %498, %499 : vector<8x8xf32>
    %501 = vector.extract_strided_slice %494 {offsets = [0, 8], sizes = [8, 8], strides = [1, 1]} : vector<8x32xf32> to vector<8x8xf32>
    %502 = arith.negf %501 : vector<8x8xf32>
    %503 = math.exp %502 : vector<8x8xf32>
    %cst_159 = arith.constant 1.000000e+00 : f32
    %504 = vector.broadcast %cst_159 : f32 to vector<8x8xf32>
    %505 = arith.addf %504, %503 : vector<8x8xf32>
    %506 = arith.divf %504, %505 : vector<8x8xf32>
    %507 = vector.extract_strided_slice %494 {offsets = [0, 16], sizes = [8, 8], strides = [1, 1]} : vector<8x32xf32> to vector<8x8xf32>
    %508 = math.tanh %507 : vector<8x8xf32>
    %509 = vector.extract_strided_slice %494 {offsets = [0, 24], sizes = [8, 8], strides = [1, 1]} : vector<8x32xf32> to vector<8x8xf32>
    %510 = arith.negf %509 : vector<8x8xf32>
    %511 = math.exp %510 : vector<8x8xf32>
    %cst_160 = arith.constant 1.000000e+00 : f32
    %512 = vector.broadcast %cst_160 : f32 to vector<8x8xf32>
    %513 = arith.addf %512, %511 : vector<8x8xf32>
    %514 = arith.divf %512, %513 : vector<8x8xf32>
    %515 = arith.mulf %506, %441 : vector<8x8xf32>
    %516 = arith.mulf %500, %508 : vector<8x8xf32>
    %517 = arith.addf %515, %516 : vector<8x8xf32>
    %518 = math.tanh %517 : vector<8x8xf32>
    %519 = arith.mulf %514, %518 : vector<8x8xf32>
    %cst_161 = arith.constant dense<0.000000e+00> : vector<8x17xf32>
    %520 = tpu.matmul %519, %7, %cst_161 {dimension_numbers = #tpu.dot_dimension_numbers<[1], [0], [0], [1], [0, 0, 1, 1], [], []>} : vector<8x8xf32>, vector<8x17xf32>, vector<8x17xf32> -> vector<8x17xf32>
    %521 = vector.broadcast %8 : vector<1x17xf32> to vector<8x17xf32>
    %522 = arith.addf %520, %521 : vector<8x17xf32>
    %523 = vector.extract_strided_slice %522 {offsets = [0, 16], sizes = [8, 1], strides = [1, 1]} : vector<8x17xf32> to vector<8x1xf32>
    %524 = arith.negf %523 : vector<8x1xf32>
    %525 = math.exp %524 : vector<8x1xf32>
    %cst_162 = arith.constant 1.000000e+00 : f32
    %526 = vector.broadcast %cst_162 : f32 to vector<8x1xf32>
    %527 = arith.addf %526, %525 : vector<8x1xf32>
    %528 = arith.divf %526, %527 : vector<8x1xf32>
    %529 = vector.extract_strided_slice %522 {offsets = [0, 0], sizes = [8, 16], strides = [1, 1]} : vector<8x17xf32> to vector<8x16xf32>
    %cst_163 = arith.constant dense<0.000000e+00> : vector<8x17xf32>
    %530 = tpu.matmul %529, %9, %cst_163 {dimension_numbers = #tpu.dot_dimension_numbers<[1], [0], [0], [1], [0, 0, 1, 1], [], []>} : vector<8x16xf32>, vector<16x17xf32>, vector<8x17xf32> -> vector<8x17xf32>
    %531 = vector.broadcast %10 : vector<1x17xf32> to vector<8x17xf32>
    %532 = arith.addf %530, %531 : vector<8x17xf32>
    %533 = vector.extract_strided_slice %532 {offsets = [0, 0], sizes = [8, 16], strides = [1, 1]} : vector<8x17xf32> to vector<8x16xf32>
    %534 = vector.extract_strided_slice %532 {offsets = [0, 16], sizes = [8, 1], strides = [1, 1]} : vector<8x17xf32> to vector<8x1xf32>
    %cst_164 = arith.constant dense<0xFF800000> : vector<8xf32>
    %535 = vector.multi_reduction <maximumf>, %533, %cst_164 [1] : vector<8x16xf32> to vector<8xf32>
    %536 = vector.shape_cast %535 : vector<8xf32> to vector<8x1xf32>
    %537 = vector.broadcast %536 : vector<8x1xf32> to vector<8x16xf32>
    %538 = arith.subf %533, %537 : vector<8x16xf32>
    %539 = math.exp %538 : vector<8x16xf32>
    %cst_165 = arith.constant dense<0.000000e+00> : vector<8xf32>
    %540 = vector.multi_reduction <add>, %539, %cst_165 [1] : vector<8x16xf32> to vector<8xf32>
    %541 = vector.shape_cast %540 : vector<8xf32> to vector<8x1xf32>
    %542 = tpu.reciprocal %541 : vector<8x1xf32> -> vector<8x1xf32>
    %543 = vector.broadcast %542 : vector<8x1xf32> to vector<8x16xf32>
    %544 = arith.mulf %539, %543 : vector<8x16xf32>
    %545 = tpu.concatenate %544, %519, %517, %528, %534, %14 in 1 : vector<8x16xf32>, vector<8x8xf32>, vector<8x8xf32>, vector<8x1xf32>, vector<8x1xf32>, vector<8x94xf32> -> vector<8x128xf32>
    %c0_166 = arith.constant 0 : index
    %c6_167 = arith.constant 6 : index
    %c0_168 = arith.constant 0 : index
    %c0_169 = arith.constant 0 : index
    %546 = vector.load %arg5[%c0_166, %c6_167, %c0_168, %c0_169] : memref<1x8x8x128xf32, #tpu.memory_space<vmem>>, vector<1x1x8x128xf32>
    %547 = vector.shape_cast %546 : vector<1x1x8x128xf32> to vector<8x128xf32>
    %548 = vector.shape_cast %545 : vector<8x128xf32> to vector<1x1x8x128xf32>
    tpu.vector_store %arg5[%c0_166, %c6_167, %c0_168, %c0_169], %548 {strides = array<i32>} : memref<1x8x8x128xf32, #tpu.memory_space<vmem>>, vector<1x1x8x128xf32>,
    %c0_170 = arith.constant 0 : index
    %c7 = arith.constant 7 : index
    %c0_171 = arith.constant 0 : index
    %c0_172 = arith.constant 0 : index
    %549 = vector.load %arg2[%c0_170, %c7, %c0_171, %c0_172] : memref<1x8x8x18xf32, #tpu.memory_space<vmem>>, vector<1x1x8x18xf32>
    %550 = vector.shape_cast %549 : vector<1x1x8x18xf32> to vector<8x18xf32>
    %cst_173 = arith.constant dense<0.000000e+00> : vector<8x32xf32>
    %551 = tpu.matmul %550, %0, %cst_173 {dimension_numbers = #tpu.dot_dimension_numbers<[1], [0], [0], [1], [0, 0, 1, 1], [], []>} : vector<8x18xf32>, vector<18x32xf32>, vector<8x32xf32> -> vector<8x32xf32>
    %552 = vector.broadcast %1 : vector<1x32xf32> to vector<8x32xf32>
    %553 = arith.addf %551, %552 : vector<8x32xf32>
    %cst_174 = arith.constant 0.000000e+00 : f32
    %554 = vector.broadcast %cst_174 : f32 to vector<8x32xf32>
    %555 = arith.maximumf %553, %554 : vector<8x32xf32>
    %cst_175 = arith.constant dense<0.000000e+00> : vector<8x48xf32>
    %556 = tpu.matmul %555, %2, %cst_175 {dimension_numbers = #tpu.dot_dimension_numbers<[1], [0], [0], [1], [0, 0, 1, 1], [], []>} : vector<8x32xf32>, vector<32x48xf32>, vector<8x48xf32> -> vector<8x48xf32>
    %557 = vector.broadcast %3 : vector<1x48xf32> to vector<8x48xf32>
    %558 = arith.addf %556, %557 : vector<8x48xf32>
    %559 = vector.extract_strided_slice %558 {offsets = [0, 32], sizes = [8, 16], strides = [1, 1]} : vector<8x48xf32> to vector<8x16xf32>
    %cst_176 = arith.constant 0.000000e+00 : f32
    %560 = vector.broadcast %cst_176 : f32 to vector<8x16xf32>
    %561 = arith.maximumf %559, %560 : vector<8x16xf32>
    %562 = vector.extract_strided_slice %558 {offsets = [0, 0], sizes = [8, 32], strides = [1, 1]} : vector<8x48xf32> to vector<8x32xf32>
    %cst_177 = arith.constant dense<0.000000e+00> : vector<8x32xf32>
    %563 = tpu.matmul %561, %4, %cst_177 {dimension_numbers = #tpu.dot_dimension_numbers<[1], [0], [0], [1], [0, 0, 1, 1], [], []>} : vector<8x16xf32>, vector<16x32xf32>, vector<8x32xf32> -> vector<8x32xf32>
    %564 = arith.addf %562, %563 : vector<8x32xf32>
    %cst_178 = arith.constant 0.000000e+00 : f32
    %565 = vector.broadcast %cst_178 : f32 to vector<8x32xf32>
    %566 = arith.maximumf %564, %565 : vector<8x32xf32>
    %567 = tpu.concatenate %566, %519 in 1 : vector<8x32xf32>, vector<8x8xf32> -> vector<8x40xf32>
    %cst_179 = arith.constant dense<0.000000e+00> : vector<8x32xf32>
    %568 = tpu.matmul %567, %5, %cst_179 {dimension_numbers = #tpu.dot_dimension_numbers<[1], [0], [0], [1], [0, 0, 1, 1], [], []>} : vector<8x40xf32>, vector<40x32xf32>, vector<8x32xf32> -> vector<8x32xf32>
    %569 = vector.broadcast %6 : vector<1x32xf32> to vector<8x32xf32>
    %570 = arith.addf %568, %569 : vector<8x32xf32>
    %571 = vector.extract_strided_slice %570 {offsets = [0, 0], sizes = [8, 8], strides = [1, 1]} : vector<8x32xf32> to vector<8x8xf32>
    %572 = arith.negf %571 : vector<8x8xf32>
    %573 = math.exp %572 : vector<8x8xf32>
    %cst_180 = arith.constant 1.000000e+00 : f32
    %574 = vector.broadcast %cst_180 : f32 to vector<8x8xf32>
    %575 = arith.addf %574, %573 : vector<8x8xf32>
    %576 = arith.divf %574, %575 : vector<8x8xf32>
    %577 = vector.extract_strided_slice %570 {offsets = [0, 8], sizes = [8, 8], strides = [1, 1]} : vector<8x32xf32> to vector<8x8xf32>
    %578 = arith.negf %577 : vector<8x8xf32>
    %579 = math.exp %578 : vector<8x8xf32>
    %cst_181 = arith.constant 1.000000e+00 : f32
    %580 = vector.broadcast %cst_181 : f32 to vector<8x8xf32>
    %581 = arith.addf %580, %579 : vector<8x8xf32>
    %582 = arith.divf %580, %581 : vector<8x8xf32>
    %583 = vector.extract_strided_slice %570 {offsets = [0, 16], sizes = [8, 8], strides = [1, 1]} : vector<8x32xf32> to vector<8x8xf32>
    %584 = math.tanh %583 : vector<8x8xf32>
    %585 = vector.extract_strided_slice %570 {offsets = [0, 24], sizes = [8, 8], strides = [1, 1]} : vector<8x32xf32> to vector<8x8xf32>
    %586 = arith.negf %585 : vector<8x8xf32>
    %587 = math.exp %586 : vector<8x8xf32>
    %cst_182 = arith.constant 1.000000e+00 : f32
    %588 = vector.broadcast %cst_182 : f32 to vector<8x8xf32>
    %589 = arith.addf %588, %587 : vector<8x8xf32>
    %590 = arith.divf %588, %589 : vector<8x8xf32>
    %591 = arith.mulf %582, %517 : vector<8x8xf32>
    %592 = arith.mulf %576, %584 : vector<8x8xf32>
    %593 = arith.addf %591, %592 : vector<8x8xf32>
    %594 = math.tanh %593 : vector<8x8xf32>
    %595 = arith.mulf %590, %594 : vector<8x8xf32>
    %cst_183 = arith.constant dense<0.000000e+00> : vector<8x17xf32>
    %596 = tpu.matmul %595, %7, %cst_183 {dimension_numbers = #tpu.dot_dimension_numbers<[1], [0], [0], [1], [0, 0, 1, 1], [], []>} : vector<8x8xf32>, vector<8x17xf32>, vector<8x17xf32> -> vector<8x17xf32>
    %597 = vector.broadcast %8 : vector<1x17xf32> to vector<8x17xf32>
    %598 = arith.addf %596, %597 : vector<8x17xf32>
    %599 = vector.extract_strided_slice %598 {offsets = [0, 16], sizes = [8, 1], strides = [1, 1]} : vector<8x17xf32> to vector<8x1xf32>
    %600 = arith.negf %599 : vector<8x1xf32>
    %601 = math.exp %600 : vector<8x1xf32>
    %cst_184 = arith.constant 1.000000e+00 : f32
    %602 = vector.broadcast %cst_184 : f32 to vector<8x1xf32>
    %603 = arith.addf %602, %601 : vector<8x1xf32>
    %604 = arith.divf %602, %603 : vector<8x1xf32>
    %605 = vector.extract_strided_slice %598 {offsets = [0, 0], sizes = [8, 16], strides = [1, 1]} : vector<8x17xf32> to vector<8x16xf32>
    %cst_185 = arith.constant dense<0.000000e+00> : vector<8x17xf32>
    %606 = tpu.matmul %605, %9, %cst_185 {dimension_numbers = #tpu.dot_dimension_numbers<[1], [0], [0], [1], [0, 0, 1, 1], [], []>} : vector<8x16xf32>, vector<16x17xf32>, vector<8x17xf32> -> vector<8x17xf32>
    %607 = vector.broadcast %10 : vector<1x17xf32> to vector<8x17xf32>
    %608 = arith.addf %606, %607 : vector<8x17xf32>
    %609 = vector.extract_strided_slice %608 {offsets = [0, 0], sizes = [8, 16], strides = [1, 1]} : vector<8x17xf32> to vector<8x16xf32>
    %610 = vector.extract_strided_slice %608 {offsets = [0, 16], sizes = [8, 1], strides = [1, 1]} : vector<8x17xf32> to vector<8x1xf32>
    %cst_186 = arith.constant dense<0xFF800000> : vector<8xf32>
    %611 = vector.multi_reduction <maximumf>, %609, %cst_186 [1] : vector<8x16xf32> to vector<8xf32>
    %612 = vector.shape_cast %611 : vector<8xf32> to vector<8x1xf32>
    %613 = vector.broadcast %612 : vector<8x1xf32> to vector<8x16xf32>
    %614 = arith.subf %609, %613 : vector<8x16xf32>
    %615 = math.exp %614 : vector<8x16xf32>
    %cst_187 = arith.constant dense<0.000000e+00> : vector<8xf32>
    %616 = vector.multi_reduction <add>, %615, %cst_187 [1] : vector<8x16xf32> to vector<8xf32>
    %617 = vector.shape_cast %616 : vector<8xf32> to vector<8x1xf32>
    %618 = tpu.reciprocal %617 : vector<8x1xf32> -> vector<8x1xf32>
    %619 = vector.broadcast %618 : vector<8x1xf32> to vector<8x16xf32>
    %620 = arith.mulf %615, %619 : vector<8x16xf32>
    %621 = tpu.concatenate %620, %595, %593, %604, %610, %14 in 1 : vector<8x16xf32>, vector<8x8xf32>, vector<8x8xf32>, vector<8x1xf32>, vector<8x1xf32>, vector<8x94xf32> -> vector<8x128xf32>
    %c0_188 = arith.constant 0 : index
    %c7_189 = arith.constant 7 : index
    %c0_190 = arith.constant 0 : index
    %c0_191 = arith.constant 0 : index
    %622 = vector.load %arg5[%c0_188, %c7_189, %c0_190, %c0_191] : memref<1x8x8x128xf32, #tpu.memory_space<vmem>>, vector<1x1x8x128xf32>
    %623 = vector.shape_cast %622 : vector<1x1x8x128xf32> to vector<8x128xf32>
    %624 = vector.shape_cast %621 : vector<8x128xf32> to vector<1x1x8x128xf32>
    tpu.vector_store %arg5[%c0_188, %c7_189, %c0_190, %c0_191], %624 {strides = array<i32>} : memref<1x8x8x128xf32, #tpu.memory_space<vmem>>, vector<1x1x8x128xf32>,
    %625 = tpu.concatenate %595, %593 in 1 : vector<8x8xf32>, vector<8x8xf32> -> vector<8x16xf32>
    %c0_192 = arith.constant 0 : index
    %c0_193 = arith.constant 0 : index
    %626 = vector.load %arg6[%c0_192, %c0_193] : memref<8x16xf32, #tpu.memory_space<vmem>>, vector<8x16xf32>
    tpu.vector_store %arg6[%c0_192, %c0_193], %625 {strides = array<i32>} : memref<8x16xf32, #tpu.memory_space<vmem>>, vector<8x16xf32>,
    return
  }
  func.func @transform_0(%arg0: i32, %arg1: i32) -> (i32, i32, i32, i32) {
    %c0_i32 = arith.constant 0 : i32
    %c0_i32_0 = arith.constant 0 : i32
    %c0_i32_1 = arith.constant 0 : i32
    return %arg0, %arg1, %c0_i32, %c0_i32_0 : i32, i32, i32, i32
  }
  func.func @transform_1(%arg0: i32, %arg1: i32) -> (i32, i32, i32) {
    %c0_i32 = arith.constant 0 : i32
    %c0_i32_0 = arith.constant 0 : i32
    %c0_i32_1 = arith.constant 0 : i32
    return %arg0, %c0_i32, %c0_i32_0 : i32, i32, i32
  }
  func.func @transform_2(%arg0: i32, %arg1: i32) -> (i32, i32) {
    %c0_i32 = arith.constant 0 : i32
    %c0_i32_0 = arith.constant 0 : i32
    %c0_i32_1 = arith.constant 0 : i32
    return %c0_i32, %c0_i32_0 : i32, i32
  }
  func.func @transform_3(%arg0: i32, %arg1: i32) -> (i32, i32, i32, i32) {
    %c0_i32 = arith.constant 0 : i32
    %c0_i32_0 = arith.constant 0 : i32
    %c0_i32_1 = arith.constant 0 : i32
    return %arg0, %arg1, %c0_i32, %c0_i32_0 : i32, i32, i32, i32
  }
}

</mosaic_0001>

<llo_original>
// kernel: aria_forward_seq.1
$region0: #{aria_forward_seq.1}
  #allocation0 [shape = 'u32[]', space=smem, size = 0x4, offset = 0x4, fixed_abs, tag = 'smem constant byte address 0x4 - core index']
  #allocation1 [shape = 'u32[144,128]{1,0:T(1,128)}', space=vmem, size = 0x12000, scoped, tag = 'internal scratch']
  #allocation2 [shape = 'f32[8,16]{1,0:T(8,128)}', space=vmem, size = 0x1000, scoped, tag = 'scratch operand']
  %s0 = inlined_call_operand.vmem [shape: f32[2,32,8,18], index: 0, kind: input, shape index: {}]
  %s1 = inlined_call_operand.vmem [shape: f32[2,8,16], index: 1, kind: input, shape index: {}]
  %s2 = inlined_call_operand.vmem [shape: f32[176,128], index: 2, kind: input, shape index: {}]
  %s3 = inlined_call_operand.vmem [shape: f32[2,32,8,128], index: 3, kind: output, shape index: {}]
  %s4 = sld [smem:[#allocation0]]
  $region49: #{aria_forward_seq.1} parent=0
    _
  %s6 = ssub.s32 1, %s4
  %s7 = scalar_select 0, %s6, %s4
  loop: start=0, step=1, limit=10
  $region2: #{aria_forward_seq.1} parent=0 // loop_pre_header
    _
  $region3: #{aria_forward_seq.1} parent=0 // loop_header
    %s9 = sphi 0, %s13
    %p10 = scmp.ge.s32.totalorder %s9, 10
    %s16 = sphi 0, %s28
    %s17 = sphi 0, %s24
    %s18 = sphi 0, %s16
    %s19 = sphi 0, %s17
    %s20 = sphi 0, %s18
    %s21 = sphi 0, %s19
    %s33 = sphi 0, %s35
    %s36 = sphi 0, %s33
    %s37 = sphi 0, %s36
    %s53 = sphi 0, %s37
    %s59 = sphi 0, %s61
    %s62 = sphi 0, %s59
    %s63 = sphi 0, %s62
    %s79 = sphi 0, %s63
    %s83 = sphi 0, %s83
    %s85 = sphi 0, %s83
    %s86 = sphi 0, %s85
    %s100 = sphi 0, %s86
    %s108 = sphi 0, %s110
    %s111 = sphi 0, %s108
    %s112 = sphi 0, %s111
    %s128 = sphi 0, %s112
  $region4: #{aria_forward_seq.1} parent=0 // loop_header_branch
    %12 = sbr.rel (%p10) target = $region8
  $region5: #{aria_forward_seq.1} parent=0 // loop_body
    %s14 = ssub.s32 %s9, 1
    %s15 = ssub.s32 %s9, 2
    %s22 = sadd.s32 1, %s17
    %p23 = scmp.ge.s32.totalorder %s22, 4
    %s24 = scalar_select %p23, 0, %s22
    %s25 = sadd.s32 1, %s16
    %s26 = scalar_select %p23, %s25, %s16
    %p27 = scmp.ge.s32.totalorder %s26, 2
    %s28 = scalar_select %p27, 0, %s26
    %s29 = ssub.s32 %s16, %s28
    %s30 = ssub.s32 %s17, %s24
    %s31 = sor.u32 %s29, %s30
    %p32 = scmp.eq.s32.totalorder %s31, 0
    %s34 = sadd.s32 %s33, 1
    %s35 = scalar_select %p32, %s33, %s34
    %p38 = pneg %p32
    %p39 = scmp.eq.s32.totalorder %s9, 7
    %p40 = por %p38, %p39
    %p41 = scmp.ne.s32.totalorder %s33, %s36
    %p42 = scmp.eq.s32.totalorder %s9, 0
    %p43 = por %p41, %p42
    %p44 = scmp.ne.s32.totalorder %s33, %s36
    %p45 = scmp.eq.s32.totalorder %s14, 7
    %p46 = por %p44, %p45
    %p47 = scmp.ne.s32.totalorder %s36, %s37
    %p48 = scmp.eq.s32.totalorder %s14, 0
    %p49 = por %p47, %p48
    %p50 = scmp.ne.s32.totalorder %s36, %s37
    %p51 = scmp.eq.s32.totalorder %s15, 7
    %p52 = por %p50, %p51
    %p54 = scmp.ne.s32.totalorder %s37, %s53
    %p55 = scmp.eq.s32.totalorder %s15, 0
    %p56 = por %p54, %p55
    %s57 = ssub.s32 %s16, %s28
    %p58 = scmp.eq.s32.totalorder %s57, 0
    %s60 = sadd.s32 %s59, 1
    %s61 = scalar_select %p58, %s59, %s60
    %p64 = pneg %p58
    %p65 = scmp.eq.s32.totalorder %s9, 7
    %p66 = por %p64, %p65
    %p67 = scmp.ne.s32.totalorder %s59, %s62
    %p68 = scmp.eq.s32.totalorder %s9, 0
    %p69 = por %p67, %p68
    %p70 = scmp.ne.s32.totalorder %s59, %s62
    %p71 = scmp.eq.s32.totalorder %s14, 7
    %p72 = por %p70, %p71
    %p73 = scmp.ne.s32.totalorder %s62, %s63
    %p74 = scmp.eq.s32.totalorder %s14, 0
    %p75 = por %p73, %p74
    %p76 = scmp.ne.s32.totalorder %s62, %s63
    %p77 = scmp.eq.s32.totalorder %s15, 7
    %p78 = por %p76, %p77
    %p80 = scmp.ne.s32.totalorder %s63, %s79
    %p81 = scmp.eq.s32.totalorder %s15, 0
    %p82 = por %p80, %p81
    %s84 = sadd.s32 %s83, 1
    %p87 = scmp.eq.s32.totalorder %s9, 7
    %p88 = scmp.ne.s32.totalorder %s83, %s85
    %p89 = scmp.eq.s32.totalorder %s9, 0
    %p90 = por %p88, %p89
    %p91 = scmp.ne.s32.totalorder %s83, %s85
    %p92 = scmp.eq.s32.totalorder %s14, 7
    %p93 = por %p91, %p92
    %p94 = scmp.ne.s32.totalorder %s85, %s86
    %p95 = scmp.eq.s32.totalorder %s14, 0
    %p96 = por %p94, %p95
    %p97 = scmp.ne.s32.totalorder %s85, %s86
    %p98 = scmp.eq.s32.totalorder %s15, 7
    %p99 = por %p97, %p98
    %p101 = scmp.ne.s32.totalorder %s86, %s100
    %p102 = scmp.eq.s32.totalorder %s15, 0
    %p103 = por %p101, %p102
    %s104 = ssub.s32 %s16, %s28
    %s105 = ssub.s32 %s17, %s24
    %s106 = sor.u32 %s104, %s105
    %p107 = scmp.eq.s32.totalorder %s106, 0
    %s109 = sadd.s32 %s108, 1
    %s110 = scalar_select %p107, %s108, %s109
    %p113 = pneg %p107
    %p114 = scmp.eq.s32.totalorder %s9, 7
    %p115 = por %p113, %p114
    %p116 = scmp.ne.s32.totalorder %s108, %s111
    %p117 = scmp.eq.s32.totalorder %s9, 0
    %p118 = por %p116, %p117
    %p119 = scmp.ne.s32.totalorder %s108, %s111
    %p120 = scmp.eq.s32.totalorder %s14, 7
    %p121 = por %p119, %p120
    %p122 = scmp.ne.s32.totalorder %s111, %s112
    %p123 = scmp.eq.s32.totalorder %s14, 0
    %p124 = por %p122, %p123
    %p125 = scmp.ne.s32.totalorder %s111, %s112
    %p126 = scmp.eq.s32.totalorder %s15, 7
    %p127 = por %p125, %p126
    %p129 = scmp.ne.s32.totalorder %s112, %s128
    %p130 = scmp.eq.s32.totalorder %s15, 0
    %p131 = por %p129, %p130
    %p132 = scmp.le.s32.totalorder 1, %s9
    %p133 = scmp.lt.s32.totalorder %s9, 9
    %p134 = pnand %p132, %p133
    %p135 = pneg %p134
    // Predicated region
    $region9: #{aria_forward_seq.1} parent=5 // pred_check
      _
    $region10: #{aria_forward_seq.1} parent=5 // pred_check_branch
      %137 = sbr.rel (%p134) target = $region12
    $region11: #{aria_forward_seq.1} parent=5 // pred_region
      %s138 = ssub.s32 %s9, 1
      // Predicated region
      $region13: #{aria_forward_seq.1} parent=11 // pred_check
        %p139 = pneg %p96
      $region14: #{aria_forward_seq.1} parent=11 // pred_check_branch
        %141 = sbr.rel (%p139) target = $region16
      $region15: #{aria_forward_seq.1} parent=11 // pred_region
        _
      $region16: #{aria_forward_seq.1} parent=11 // pred_fallthru
        _
    $region12: #{aria_forward_seq.1} parent=5 // pred_fallthru
      _
    %p142 = scmp.lt.s32.totalorder %s9, 8
    // Predicated region
    $region17: #{aria_forward_seq.1} parent=5 // pred_check
      %p143 = pneg %p142
    $region18: #{aria_forward_seq.1} parent=5 // pred_check_branch
      %145 = sbr.rel (%p143) target = $region20
    $region19: #{aria_forward_seq.1} parent=5 // pred_region
      // Predicated region
      $region21: #{aria_forward_seq.1} parent=19 // pred_check
        %p146 = pneg %p43
      $region22: #{aria_forward_seq.1} parent=19 // pred_check_branch
        %148 = sbr.rel (%p146) target = $region24
      $region23: #{aria_forward_seq.1} parent=19 // pred_region
        %s149 = smul.u32 8, %s17
        %p150 = scmp.lt.s32.totalorder %s16, 1
        %s151 = scalar_select %p150, %s16, 1
        %p152 = scmp.lt.s32.totalorder %s149, 31
        %s153 = scalar_select %p152, %s149, 31
        %s154 = smul.addr %s151, 32
        %s155 = sadd.s32 %s153, %s154
        %s156 = smul.addr %s155, 8
        %s157 = scalar_lea.vmem %s0, %s156
        %s158 = smul.u32 8, %s17
      $region24: #{aria_forward_seq.1} parent=19 // pred_fallthru
        _
      // Predicated region
      $region25: #{aria_forward_seq.1} parent=19 // pred_check
        %p159 = pneg %p69
      $region26: #{aria_forward_seq.1} parent=19 // pred_check_branch
        %161 = sbr.rel (%p159) target = $region28
      $region27: #{aria_forward_seq.1} parent=19 // pred_region
        %p162 = scmp.lt.s32.totalorder %s16, 1
        %s163 = scalar_select %p162, %s16, 1
        %s164 = smul.addr %s163, 8
        %s165 = scalar_lea.vmem %s1, %s164
      $region28: #{aria_forward_seq.1} parent=19 // pred_fallthru
        _
    $region20: #{aria_forward_seq.1} parent=5 // pred_fallthru
      _
    %p166 = scmp.le.s32.totalorder 1, %s9
    %p167 = scmp.lt.s32.totalorder %s9, 9
    %p168 = pnand %p166, %p167
    %p169 = pneg %p168
    // Predicated region
    $region29: #{aria_forward_seq.1} parent=5 // pred_check
      _
    $region30: #{aria_forward_seq.1} parent=5 // pred_check_branch
      %171 = sbr.rel (%p168) target = $region32
    $region31: #{aria_forward_seq.1} parent=5 // pred_region
      %s172 = ssub.s32 %s9, 1
      %s173 = smul.u32 8, %s19
      %p174 = scmp.lt.s32.totalorder %s18, 1
      %s175 = scalar_select %p174, %s18, 1
      %p176 = scmp.lt.s32.totalorder %s173, 31
      %s177 = scalar_select %p176, %s173, 31
      %s178 = smul.addr %s175, 32
      %s179 = sadd.s32 %s177, %s178
      %s180 = smul.addr %s179, 8
      %s181 = scalar_lea.vmem %s0, %s180
      %p182 = pneg %p49
      %p183 = pneg %p46
      %p184 = scmp.lt.s32.totalorder %s18, 1
      %s185 = scalar_select %p184, %s18, 1
      %s186 = smul.addr %s185, 8
      %s187 = scalar_lea.vmem %s1, %s186
      %p188 = pneg %p75
      %p189 = pneg %p72
      %p190 = pneg %p96
      %p191 = pneg %p93
      %p192 = pneg %p124
      %p193 = pneg %p121
      %s194 = smul.u32 8, %s19
      %p195 = scmp.lt.s32.totalorder %s18, 1
      %s196 = scalar_select %p195, %s18, 1
      %p197 = scmp.lt.s32.totalorder %s194, 31
      %s198 = scalar_select %p197, %s194, 31
      %s199 = smul.addr %s196, 32
      %s200 = sadd.s32 %s198, %s199
      %s201 = smul.addr %s200, 8
      %s202 = scalar_lea.vmem %s3, %s201
      %s203 = smul.u32 8, %s19
      %p204 = scmp.lt.s32.totalorder %s18, 1
      %s205 = scalar_select %p204, %s18, 1
      %p206 = scmp.lt.s32.totalorder %s203, 31
      %s207 = scalar_select %p206, %s203, 31
      %s208 = smul.addr %s205, 32
      %s209 = sadd.s32 %s207, %s208
      %s210 = smul.addr %s209, 8
      %s211 = scalar_lea.vmem %s0, %s210
      %s212 = smul.u32 8, %s19
      %p213 = scmp.lt.s32.totalorder %s18, 1
      %s214 = scalar_select %p213, %s18, 1
      %s215 = smul.addr %s214, 8
      %s216 = scalar_lea.vmem %s1, %s215
      %s217 = smul.u32 8, %s19
      %p218 = scmp.lt.s32.totalorder %s18, 1
      %s219 = scalar_select %p218, %s18, 1
      %p220 = scmp.lt.s32.totalorder %s217, 31
      %s221 = scalar_select %p220, %s217, 31
      %s222 = smul.addr %s219, 32
      %s223 = sadd.s32 %s221, %s222
      %s224 = smul.addr %s223, 8
      %s225 = scalar_lea.vmem %s3, %s224
      %s226 = smul.u32 8, %s19
      %v227 = vld [vmem:[%s2] sm:$0xff]
      %v228 = vld [vmem:[%s2 + $0x8] sm:$0xff]
      %v229 = vld [vmem:[%s2 + $0x10] sm:$0x3]
      %v230 = vld [vmem:[%s2 + $0x18] sm:$0x1]
      %v231 = vld [vmem:[%s2 + $0x20] sm:$0xff]
      %v232 = vld [vmem:[%s2 + $0x28] sm:$0xff]
      %v233 = vld [vmem:[%s2 + $0x30] sm:$0xff]
      %v234 = vld [vmem:[%s2 + $0x38] sm:$0xff]
      %v235 = vld [vmem:[%s2 + $0x40] sm:$0x1]
      %v236 = vld [vmem:[%s2 + $0x48] sm:$0xff]
      %v237 = vld [vmem:[%s2 + $0x50] sm:$0xff]
      %v238 = vld [vmem:[%s2 + $0x58] sm:$0xff]
      %v239 = vld [vmem:[%s2 + $0x60] sm:$0xff]
      %v240 = vld [vmem:[%s2 + $0x68] sm:$0xff]
      %v241 = vld [vmem:[%s2 + $0x70] sm:$0xff]
      %v242 = vld [vmem:[%s2 + $0x78] sm:$0xff]
      %v243 = vld [vmem:[%s2 + $0x80] sm:$0x1]
      %v244 = vld [vmem:[%s2 + $0x88] sm:$0xff]
      %v245 = vld [vmem:[%s2 + $0x90] sm:$0x1]
      %v246 = vld [vmem:[%s2 + $0x98] sm:$0xff]
      %v247 = vld [vmem:[%s2 + $0xa0] sm:$0xff]
      %v248 = vld [vmem:[%s2 + $0xa8] sm:$0x1]
      %p249 = scmp.eq.s32.totalorder %s19, 0
      // Predicated region
      $region33: #{aria_forward_seq.1} parent=31 // pred_check
        %p250 = pneg %p249
      $region34: #{aria_forward_seq.1} parent=31 // pred_check_branch
        %252 = sbr.rel (%p250) target = $region36
      $region35: #{aria_forward_seq.1} parent=31 // pred_region
        %v253 = vld [vmem:[%s216] sm:$0xff]
        %vm254 = vcmask 130048
        %255 = vst.msk [vmem:[#allocation2] sm:$0xff] %vm254, %v253
      $region36: #{aria_forward_seq.1} parent=31 // pred_fallthru
        _
      %v256 = vld [vmem:[#allocation2] sm:$0xff]
      %v257 = vld [vmem:[%s211] sm:$0xff]
      %v258 = vlaneseq
      %v259 = vshrl.u32 %v258, 7
      %v260 = vsub.s32 0, %v259
      %v261 = vrot.slane %v230, %v260
      %vm262 = vcmask 146432
      %v264 = vsel %vm262, %v257, 0
      %vm266 = vcmask 1041408
      %v268 = vsel %vm266, %v229, 0
      %270 = vmatprep.subr.mxu0 0.0
      %271 = vmatpush1.msra.mxu0 0.0
      %272 = vmatprep.subr.mxu0 0.0
      %273 = vmatpush1.msra.mxu0 0.0
      %274 = vmatprep.subr.mxu0 0.0
      %275 = vmatpush1.msra.mxu0 0.0
      %276 = vmatprep.subr.mxu0 0.0
      %277 = vmatpush1.msra.mxu0 0.0
      %278 = vmatprep.subr.mxu0 0.0
      %279 = vmatpush1.msra.mxu0 0.0
      %280 = vmatprep.subr.mxu0 0.0
      %281 = vmatpush1.msra.mxu0 0.0
      %282 = vmatprep.subr.mxu0 0.0
      %283 = vmatpush1.msra.mxu0 0.0
      %284 = vmatprep.subr.mxu0 0.0
      %285 = vmatpush1.msra.mxu0 0.0
      %286 = vmatprep.subr.mxu0 0.0
      %287 = vmatpush1.msra.mxu0 0.0
      %288 = vmatprep.subr.mxu0 0.0
      %289 = vmatpush1.msra.mxu0 0.0
      %290 = vmatprep.subr.mxu0 0.0
      %291 = vmatpush1.msra.mxu0 0.0
      %292 = vmatprep.subr.mxu0 0.0
      %293 = vmatpush1.msra.mxu0 0.0
      %294 = vmatprep.subr.mxu0 0.0
      %295 = vmatpush1.msra.mxu0 0.0
      %296 = vmatprep.subr.mxu0 0.0
      %297 = vmatpush1.msra.mxu0 %v268
      %298 = vmatprep.subr.mxu0 0.0
      %299 = vmatpush1.msra.mxu0 %v228
      %300 = vmatprep.subr.mxu0 0.0
      %301 = vmatpush1.msra.mxu0 %v227
      %302 = vmatprep.subr.mxu0 0.0
      %303 = vmatpush2.msra.mxu0 0.0
      %304 = vmatprep.subr.mxu0 0.0
      %305 = vmatpush2.msra.mxu0 0.0
      %306 = vmatprep.subr.mxu0 0.0
      %307 = vmatpush2.msra.mxu0 0.0
      %308 = vmatprep.subr.mxu0 0.0
      %309 = vmatpush2.msra.mxu0 0.0
      %310 = vmatprep.subr.mxu0 0.0
      %311 = vmatpush2.msra.mxu0 0.0
      %312 = vmatprep.subr.mxu0 0.0
      %313 = vmatpush2.msra.mxu0 0.0
      %314 = vmatprep.subr.mxu0 0.0
      %315 = vmatpush2.msra.mxu0 0.0
      %316 = vmatprep.subr.mxu0 0.0
      %317 = vmatpush2.msra.mxu0 0.0
      %318 = vmatprep.subr.mxu0 0.0
      %319 = vmatpush2.msra.mxu0 0.0
      %320 = vmatprep.subr.mxu0 0.0
      %321 = vmatpush2.msra.mxu0 0.0
      %322 = vmatprep.subr.mxu0 0.0
      %323 = vmatpush2.msra.mxu0 0.0
      %324 = vmatprep.subr.mxu0 0.0
      %325 = vmatpush2.msra.mxu0 0.0
      %326 = vmatprep.subr.mxu0 0.0
      %327 = vmatpush2.msra.mxu0 0.0
      %328 = vmatprep.subr.mxu0 0.0
      %329 = vmatpush2.msra.mxu0 0.0
      %330 = vmatprep.subr.mxu0 0.0
      %331 = vmatpush2.msra.mxu0 0.0
      %332 = vmatprep.subr.mxu0 0.0
      %333 = vmatpush2.msra.mxu0 0.0
      %334 = vmatprep.mubr.f32.mxu0 0.0
      %335 = vmatmul.mubr.f32.gmra.mxu0 %v264
      %v336 = vpop.f32.mrf.mxu0
      %v337 = vadd.f32 %v261, %v336
      %v338 = vpop.f32.mrf.mxu0
      %339 = vdwg.mxu0
      %v340 = vmax.f32 %v337, 0.0
      %v341 = vlaneseq
      %v342 = vshrl.u32 %v341, 7
      %v343 = vsub.s32 0, %v342
      %v344 = vrot.slane %v235, %v343
      %vm345 = vcmask 261120
      %v347 = vsel %vm345, %v340, 0
      %349 = vmatprep.subr.mxu0 0.0
      %350 = vmatpush1.msra.mxu0 0.0
      %351 = vmatprep.subr.mxu0 0.0
      %352 = vmatpush1.msra.mxu0 0.0
      %353 = vmatprep.subr.mxu0 0.0
      %354 = vmatpush1.msra.mxu0 0.0
      %355 = vmatprep.subr.mxu0 0.0
      %356 = vmatpush1.msra.mxu0 0.0
      %357 = vmatprep.subr.mxu0 0.0
      %358 = vmatpush1.msra.mxu0 0.0
      %359 = vmatprep.subr.mxu0 0.0
      %360 = vmatpush1.msra.mxu0 0.0
      %361 = vmatprep.subr.mxu0 0.0
      %362 = vmatpush1.msra.mxu0 0.0
      %363 = vmatprep.subr.mxu0 0.0
      %364 = vmatpush1.msra.mxu0 0.0
      %365 = vmatprep.subr.mxu0 0.0
      %366 = vmatpush1.msra.mxu0 0.0
      %367 = vmatprep.subr.mxu0 0.0
      %368 = vmatpush1.msra.mxu0 0.0
      %369 = vmatprep.subr.mxu0 0.0
      %370 = vmatpush1.msra.mxu0 0.0
      %371 = vmatprep.subr.mxu0 0.0
      %372 = vmatpush1.msra.mxu0 0.0
      %373 = vmatprep.subr.mxu0 0.0
      %374 = vmatpush1.msra.mxu0 %v234
      %375 = vmatprep.subr.mxu0 0.0
      %376 = vmatpush1.msra.mxu0 %v233
      %377 = vmatprep.subr.mxu0 0.0
      %378 = vmatpush1.msra.mxu0 %v232
      %379 = vmatprep.subr.mxu0 0.0
      %380 = vmatpush1.msra.mxu0 %v231
      %381 = vmatprep.subr.mxu0 0.0
      %382 = vmatpush2.msra.mxu0 0.0
      %383 = vmatprep.subr.mxu0 0.0
      %384 = vmatpush2.msra.mxu0 0.0
      %385 = vmatprep.subr.mxu0 0.0
      %386 = vmatpush2.msra.mxu0 0.0
      %387 = vmatprep.subr.mxu0 0.0
      %388 = vmatpush2.msra.mxu0 0.0
      %389 = vmatprep.subr.mxu0 0.0
      %390 = vmatpush2.msra.mxu0 0.0
      %391 = vmatprep.subr.mxu0 0.0
      %392 = vmatpush2.msra.mxu0 0.0
      %393 = vmatprep.subr.mxu0 0.0
      %394 = vmatpush2.msra.mxu0 0.0
      %395 = vmatprep.subr.mxu0 0.0
      %396 = vmatpush2.msra.mxu0 0.0
      %397 = vmatprep.subr.mxu0 0.0
      %398 = vmatpush2.msra.mxu0 0.0
      %399 = vmatprep.subr.mxu0 0.0
      %400 = vmatpush2.msra.mxu0 0.0
      %401 = vmatprep.subr.mxu0 0.0
      %402 = vmatpush2.msra.mxu0 0.0
      %403 = vmatprep.subr.mxu0 0.0
      %404 = vmatpush2.msra.mxu0 0.0
      %405 = vmatprep.subr.mxu0 0.0
      %406 = vmatpush2.msra.mxu0 0.0
      %407 = vmatprep.subr.mxu0 0.0
      %408 = vmatpush2.msra.mxu0 0.0
      %409 = vmatprep.subr.mxu0 0.0
      %410 = vmatpush2.msra.mxu0 0.0
      %411 = vmatprep.subr.mxu0 0.0
      %412 = vmatpush2.msra.mxu0 0.0
      %413 = vmatprep.mubr.f32.mxu0 0.0
      %414 = vmatmul.mubr.f32.gmra.mxu0 %v347
      %v415 = vpop.f32.mrf.mxu0
      %v416 = vadd.f32 %v344, %v415
      %v417 = vpop.f32.mrf.mxu0
      %418 = vdwg.mxu0
      %v419 = vmax.f32 %v416, 0.0
      %421 = vrot.lane.b32.xlu0 %v419, 96
      %v422 = vpop.permute.xlu0 %421
      %vm423 = vcmask 130048
      %v424 = vsel %vm423, %v422, 0
      %426 = vmatprep.subr.mxu0 0.0
      %427 = vmatpush1.msra.mxu0 0.0
      %428 = vmatprep.subr.mxu0 0.0
      %429 = vmatpush1.msra.mxu0 0.0
      %430 = vmatprep.subr.mxu0 0.0
      %431 = vmatpush1.msra.mxu0 0.0
      %432 = vmatprep.subr.mxu0 0.0
      %433 = vmatpush1.msra.mxu0 0.0
      %434 = vmatprep.subr.mxu0 0.0
      %435 = vmatpush1.msra.mxu0 0.0
      %436 = vmatprep.subr.mxu0 0.0
      %437 = vmatpush1.msra.mxu0 0.0
      %438 = vmatprep.subr.mxu0 0.0
      %439 = vmatpush1.msra.mxu0 0.0
      %440 = vmatprep.subr.mxu0 0.0
      %441 = vmatpush1.msra.mxu0 0.0
      %442 = vmatprep.subr.mxu0 0.0
      %443 = vmatpush1.msra.mxu0 0.0
      %444 = vmatprep.subr.mxu0 0.0
      %445 = vmatpush1.msra.mxu0 0.0
      %446 = vmatprep.subr.mxu0 0.0
      %447 = vmatpush1.msra.mxu0 0.0
      %448 = vmatprep.subr.mxu0 0.0
      %449 = vmatpush1.msra.mxu0 0.0
      %450 = vmatprep.subr.mxu0 0.0
      %451 = vmatpush1.msra.mxu0 0.0
      %452 = vmatprep.subr.mxu0 0.0
      %453 = vmatpush1.msra.mxu0 0.0
      %454 = vmatprep.subr.mxu0 0.0
      %455 = vmatpush1.msra.mxu0 %v237
      %456 = vmatprep.subr.mxu0 0.0
      %457 = vmatpush1.msra.mxu0 %v236
      %458 = vmatprep.subr.mxu0 0.0
      %459 = vmatpush2.msra.mxu0 0.0
      %460 = vmatprep.subr.mxu0 0.0
      %461 = vmatpush2.msra.mxu0 0.0
      %462 = vmatprep.subr.mxu0 0.0
      %463 = vmatpush2.msra.mxu0 0.0
      %464 = vmatprep.subr.mxu0 0.0
      %465 = vmatpush2.msra.mxu0 0.0
      %466 = vmatprep.subr.mxu0 0.0
      %467 = vmatpush2.msra.mxu0 0.0
      %468 = vmatprep.subr.mxu0 0.0
      %469 = vmatpush2.msra.mxu0 0.0
      %470 = vmatprep.subr.mxu0 0.0
      %471 = vmatpush2.msra.mxu0 0.0
      %472 = vmatprep.subr.mxu0 0.0
      %473 = vmatpush2.msra.mxu0 0.0
      %474 = vmatprep.subr.mxu0 0.0
      %475 = vmatpush2.msra.mxu0 0.0
      %476 = vmatprep.subr.mxu0 0.0
      %477 = vmatpush2.msra.mxu0 0.0
      %478 = vmatprep.subr.mxu0 0.0
      %479 = vmatpush2.msra.mxu0 0.0
      %480 = vmatprep.subr.mxu0 0.0
      %481 = vmatpush2.msra.mxu0 0.0
      %482 = vmatprep.subr.mxu0 0.0
      %483 = vmatpush2.msra.mxu0 0.0
      %484 = vmatprep.subr.mxu0 0.0
      %485 = vmatpush2.msra.mxu0 0.0
      %486 = vmatprep.subr.mxu0 0.0
      %487 = vmatpush2.msra.mxu0 0.0
      %488 = vmatprep.subr.mxu0 0.0
      %489 = vmatpush2.msra.mxu0 0.0
      %490 = vmatprep.mubr.f32.mxu0 0.0
      %491 = vmatmul.mubr.f32.gmra.mxu0 %v424
      %v492 = vpop.f32.mrf.mxu0
      %v493 = vadd.f32 0.0, %v492
      %v494 = vpop.f32.mrf.mxu0
      %495 = vdwg.mxu0
      %v496 = vadd.f32 %v416, %v493
      %v497 = vmax.f32 %v496, 0.0
      %499 = vrot.lane.b32.xlu0 %v256, 32
      %v500 = vpop.permute.xlu0 %499
      %v502 = vsel %vm345, %v497, %v500
      %v503 = vlaneseq
      %v504 = vshrl.u32 %v503, 7
      %v505 = vsub.s32 0, %v504
      %v506 = vrot.slane %v243, %v505
      %vm507 = vcmask 326656
      %v509 = vsel %vm507, %v502, 0
      %511 = vmatprep.subr.mxu0 0.0
      %512 = vmatpush1.msra.mxu0 0.0
      %513 = vmatprep.subr.mxu0 0.0
      %514 = vmatpush1.msra.mxu0 0.0
      %515 = vmatprep.subr.mxu0 0.0
      %516 = vmatpush1.msra.mxu0 0.0
      %517 = vmatprep.subr.mxu0 0.0
      %518 = vmatpush1.msra.mxu0 0.0
      %519 = vmatprep.subr.mxu0 0.0
      %520 = vmatpush1.msra.mxu0 0.0
      %521 = vmatprep.subr.mxu0 0.0
      %522 = vmatpush1.msra.mxu0 0.0
      %523 = vmatprep.subr.mxu0 0.0
      %524 = vmatpush1.msra.mxu0 0.0
      %525 = vmatprep.subr.mxu0 0.0
      %526 = vmatpush1.msra.mxu0 0.0
      %527 = vmatprep.subr.mxu0 0.0
      %528 = vmatpush1.msra.mxu0 0.0
      %529 = vmatprep.subr.mxu0 0.0
      %530 = vmatpush1.msra.mxu0 0.0
      %531 = vmatprep.subr.mxu0 0.0
      %532 = vmatpush1.msra.mxu0 0.0
      %533 = vmatprep.subr.mxu0 0.0
      %534 = vmatpush1.msra.mxu0 %v242
      %535 = vmatprep.subr.mxu0 0.0
      %536 = vmatpush1.msra.mxu0 %v241
      %537 = vmatprep.subr.mxu0 0.0
      %538 = vmatpush1.msra.mxu0 %v240
      %539 = vmatprep.subr.mxu0 0.0
      %540 = vmatpush1.msra.mxu0 %v239
      %541 = vmatprep.subr.mxu0 0.0
      %542 = vmatpush1.msra.mxu0 %v238
      %543 = vmatprep.subr.mxu0 0.0
      %544 = vmatpush2.msra.mxu0 0.0
      %545 = vmatprep.subr.mxu0 0.0
      %546 = vmatpush2.msra.mxu0 0.0
      %547 = vmatprep.subr.mxu0 0.0
      %548 = vmatpush2.msra.mxu0 0.0
      %549 = vmatprep.subr.mxu0 0.0
      %550 = vmatpush2.msra.mxu0 0.0
      %551 = vmatprep.subr.mxu0 0.0
      %552 = vmatpush2.msra.mxu0 0.0
      %553 = vmatprep.subr.mxu0 0.0
      %554 = vmatpush2.msra.mxu0 0.0
      %555 = vmatprep.subr.mxu0 0.0
      %556 = vmatpush2.msra.mxu0 0.0
      %557 = vmatprep.subr.mxu0 0.0
      %558 = vmatpush2.msra.mxu0 0.0
      %559 = vmatprep.subr.mxu0 0.0
      %560 = vmatpush2.msra.mxu0 0.0
      %561 = vmatprep.subr.mxu0 0.0
      %562 = vmatpush2.msra.mxu0 0.0
      %563 = vmatprep.subr.mxu0 0.0
      %564 = vmatpush2.msra.mxu0 0.0
      %565 = vmatprep.subr.mxu0 0.0
      %566 = vmatpush2.msra.mxu0 0.0
      %567 = vmatprep.subr.mxu0 0.0
      %568 = vmatpush2.msra.mxu0 0.0
      %569 = vmatprep.subr.mxu0 0.0
      %570 = vmatpush2.msra.mxu0 0.0
      %571 = vmatprep.subr.mxu0 0.0
      %572 = vmatpush2.msra.mxu0 0.0
      %573 = vmatprep.subr.mxu0 0.0
      %574 = vmatpush2.msra.mxu0 0.0
      %575 = vmatprep.mubr.f32.mxu0 0.0
      %576 = vmatmul.mubr.f32.gmra.mxu0 %v509
      %v577 = vpop.f32.mrf.mxu0
      %v578 = vadd.f32 %v506, %v577
      %v579 = vpop.f32.mrf.mxu0
      %580 = vdwg.mxu0
      %v581 = vxor.u32 %v578, 2147483648
      %v582 = vmul.f32 %v581, 1.442695
      %v583 = vpow.pop %v582
      %v584 = vadd.f32 %v583, 1.0
      %v585 = vrcp.pop %v584
      %v586 = vmul.f32 1.0, %v585
      %v587 = vtanh.pop %v578
      %v588 = vmul.f32 %v586, %v256
      %590 = vrot.lane.b32.xlu0 %v587, 112
      %v591 = vpop.permute.xlu0 %590
      %v593 = vmul.f32 %v586, %v591
      %595 = vrot.lane.b32.xlu0 %v593, 8
      %v596 = vpop.permute.xlu0 %595
      %v598 = vadd.f32 %v588, %v596
      %v599 = vtanh.pop %v598
      %601 = vrot.lane.b32.xlu0 %v599, 16
      %v602 = vpop.permute.xlu0 %601
      %v604 = vmul.f32 %v586, %v602
      %v605 = vlaneseq
      %v606 = vshrl.u32 %v605, 7
      %v607 = vsub.s32 0, %v606
      %v608 = vrot.slane %v245, %v607
      %610 = vrot.lane.b32.xlu0 %v604, 104
      %v611 = vpop.permute.xlu0 %610
      %vm612 = vcmask 64512
      %v613 = vsel %vm612, %v611, 0
      %615 = vmatprep.subr.mxu0 0.0
      %616 = vmatpush1.msra.mxu0 0.0
      %617 = vmatprep.subr.mxu0 0.0
      %618 = vmatpush1.msra.mxu0 0.0
      %619 = vmatprep.subr.mxu0 0.0
      %620 = vmatpush1.msra.mxu0 0.0
      %621 = vmatprep.subr.mxu0 0.0
      %622 = vmatpush1.msra.mxu0 0.0
      %623 = vmatprep.subr.mxu0 0.0
      %624 = vmatpush1.msra.mxu0 0.0
      %625 = vmatprep.subr.mxu0 0.0
      %626 = vmatpush1.msra.mxu0 0.0
      %627 = vmatprep.subr.mxu0 0.0
      %628 = vmatpush1.msra.mxu0 0.0
      %629 = vmatprep.subr.mxu0 0.0
      %630 = vmatpush1.msra.mxu0 0.0
      %631 = vmatprep.subr.mxu0 0.0
      %632 = vmatpush1.msra.mxu0 0.0
      %633 = vmatprep.subr.mxu0 0.0
      %634 = vmatpush1.msra.mxu0 0.0
      %635 = vmatprep.subr.mxu0 0.0
      %636 = vmatpush1.msra.mxu0 0.0
      %637 = vmatprep.subr.mxu0 0.0
      %638 = vmatpush1.msra.mxu0 0.0
      %639 = vmatprep.subr.mxu0 0.0
      %640 = vmatpush1.msra.mxu0 0.0
      %641 = vmatprep.subr.mxu0 0.0
      %642 = vmatpush1.msra.mxu0 0.0
      %643 = vmatprep.subr.mxu0 0.0
      %644 = vmatpush1.msra.mxu0 0.0
      %645 = vmatprep.subr.mxu0 0.0
      %646 = vmatpush1.msra.mxu0 %v244
      %647 = vmatprep.subr.mxu0 0.0
      %648 = vmatpush2.msra.mxu0 0.0
      %649 = vmatprep.subr.mxu0 0.0
      %650 = vmatpush2.msra.mxu0 0.0
      %651 = vmatprep.subr.mxu0 0.0
      %652 = vmatpush2.msra.mxu0 0.0
      %653 = vmatprep.subr.mxu0 0.0
      %654 = vmatpush2.msra.mxu0 0.0
      %655 = vmatprep.subr.mxu0 0.0
      %656 = vmatpush2.msra.mxu0 0.0
      %657 = vmatprep.subr.mxu0 0.0
      %658 = vmatpush2.msra.mxu0 0.0
      %659 = vmatprep.subr.mxu0 0.0
      %660 = vmatpush2.msra.mxu0 0.0
      %661 = vmatprep.subr.mxu0 0.0
      %662 = vmatpush2.msra.mxu0 0.0
      %663 = vmatprep.subr.mxu0 0.0
      %664 = vmatpush2.msra.mxu0 0.0
      %665 = vmatprep.subr.mxu0 0.0
      %666 = vmatpush2.msra.mxu0 0.0
      %667 = vmatprep.subr.mxu0 0.0
      %668 = vmatpush2.msra.mxu0 0.0
      %669 = vmatprep.subr.mxu0 0.0
      %670 = vmatpush2.msra.mxu0 0.0
      %671 = vmatprep.subr.mxu0 0.0
      %672 = vmatpush2.msra.mxu0 0.0
      %673 = vmatprep.subr.mxu0 0.0
      %674 = vmatpush2.msra.mxu0 0.0
      %675 = vmatprep.subr.mxu0 0.0
      %676 = vmatpush2.msra.mxu0 0.0
      %677 = vmatprep.subr.mxu0 0.0
      %678 = vmatpush2.msra.mxu0 0.0
      %679 = vmatprep.mubr.f32.mxu0 0.0
      %680 = vmatmul.mubr.f32.gmra.mxu0 %v613
      %v681 = vpop.f32.mrf.mxu0
      %v682 = vadd.f32 %v608, %v681
      %v683 = vpop.f32.mrf.mxu0
      %684 = vdwg.mxu0
      %v685 = vxor.u32 %v682, 2147483648
      %v686 = vmul.f32 %v685, 1.442695
      %v687 = vpow.pop %v686
      %v688 = vadd.f32 %v687, 1.0
      %v689 = vrcp.pop %v688
      %v690 = vmul.f32 1.0, %v689
      %v691 = vlaneseq
      %v692 = vshrl.u32 %v691, 7
      %v693 = vsub.s32 0, %v692
      %v694 = vrot.slane %v248, %v693
      %v696 = vsel %vm423, %v682, 0
      %698 = vmatprep.subr.mxu0 0.0
      %699 = vmatpush1.msra.mxu0 0.0
      %700 = vmatprep.subr.mxu0 0.0
      %701 = vmatpush1.msra.mxu0 0.0
      %702 = vmatprep.subr.mxu0 0.0
      %703 = vmatpush1.msra.mxu0 0.0
      %704 = vmatprep.subr.mxu0 0.0
      %705 = vmatpush1.msra.mxu0 0.0
      %706 = vmatprep.subr.mxu0 0.0
      %707 = vmatpush1.msra.mxu0 0.0
      %708 = vmatprep.subr.mxu0 0.0
      %709 = vmatpush1.msra.mxu0 0.0
      %710 = vmatprep.subr.mxu0 0.0
      %711 = vmatpush1.msra.mxu0 0.0
      %712 = vmatprep.subr.mxu0 0.0
      %713 = vmatpush1.msra.mxu0 0.0
      %714 = vmatprep.subr.mxu0 0.0
      %715 = vmatpush1.msra.mxu0 0.0
      %716 = vmatprep.subr.mxu0 0.0
      %717 = vmatpush1.msra.mxu0 0.0
      %718 = vmatprep.subr.mxu0 0.0
      %719 = vmatpush1.msra.mxu0 0.0
      %720 = vmatprep.subr.mxu0 0.0
      %721 = vmatpush1.msra.mxu0 0.0
      %722 = vmatprep.subr.mxu0 0.0
      %723 = vmatpush1.msra.mxu0 0.0
      %724 = vmatprep.subr.mxu0 0.0
      %725 = vmatpush1.msra.mxu0 0.0
      %726 = vmatprep.subr.mxu0 0.0
      %727 = vmatpush1.msra.mxu0 %v247
      %728 = vmatprep.subr.mxu0 0.0
      %729 = vmatpush1.msra.mxu0 %v246
      %730 = vmatprep.subr.mxu0 0.0
      %731 = vmatpush2.msra.mxu0 0.0
      %732 = vmatprep.subr.mxu0 0.0
      %733 = vmatpush2.msra.mxu0 0.0
      %734 = vmatprep.subr.mxu0 0.0
      %735 = vmatpush2.msra.mxu0 0.0
      %736 = vmatprep.subr.mxu0 0.0
      %737 = vmatpush2.msra.mxu0 0.0
      %738 = vmatprep.subr.mxu0 0.0
      %739 = vmatpush2.msra.mxu0 0.0
      %740 = vmatprep.subr.mxu0 0.0
      %741 = vmatpush2.msra.mxu0 0.0
      %742 = vmatprep.subr.mxu0 0.0
      %743 = vmatpush2.msra.mxu0 0.0
      %744 = vmatprep.subr.mxu0 0.0
      %745 = vmatpush2.msra.mxu0 0.0
      %746 = vmatprep.subr.mxu0 0.0
      %747 = vmatpush2.msra.mxu0 0.0
      %748 = vmatprep.subr.mxu0 0.0
      %749 = vmatpush2.msra.mxu0 0.0
      %750 = vmatprep.subr.mxu0 0.0
      %751 = vmatpush2.msra.mxu0 0.0
      %752 = vmatprep.subr.mxu0 0.0
      %753 = vmatpush2.msra.mxu0 0.0
      %754 = vmatprep.subr.mxu0 0.0
      %755 = vmatpush2.msra.mxu0 0.0
      %756 = vmatprep.subr.mxu0 0.0
      %757 = vmatpush2.msra.mxu0 0.0
      %758 = vmatprep.subr.mxu0 0.0
      %759 = vmatpush2.msra.mxu0 0.0
      %760 = vmatprep.subr.mxu0 0.0
      %761 = vmatpush2.msra.mxu0 0.0
      %762 = vmatprep.mubr.f32.mxu0 0.0
      %763 = vmatmul.mubr.f32.gmra.mxu0 %v696
      %v764 = vpop.f32.mrf.mxu0
      %v765 = vadd.f32 %v694, %v764
      %v766 = vpop.f32.mrf.mxu0
      %767 = vdwg.mxu0
      %v768 = vsel %vm423, %v765, -inf
      %769 = vmax.xlane.f32.xlu0 %v768
      %v770 = vpop.xlane.xlu0 %769
      %v771 = vsub.f32 %v765, %v770
      %v772 = vmul.f32 %v771, 1.442695
      %v773 = vpow.pop %v772
      %v774 = vsel %vm423, %v773, 0.0
      %775 = vadd.xlane.f32.xlu0 %v774
      %v776 = vpop.xlane.xlu0 %775
      %v777 = vrcp.pop %v776
      %v778 = vmul.f32 %v773, %v777
      %779 = vrot.lane.b32.xlu0 %v604, 120
      %v780 = vpop.permute.xlu0 %779
      %783 = vrot.lane.b32.xlu0 %v598, 16
      %v784 = vpop.permute.xlu0 %783
      %787 = vrot.lane.b32.xlu0 %v690, 16
      %v788 = vpop.permute.xlu0 %787
      %791 = vrot.lane.b32.xlu0 %v765, 17
      %v792 = vpop.permute.xlu0 %791
      %v794 = vsel %vm423, %v778, %v780
      %vm795 = vcmask 195584
      %v796 = vsel %vm795, %v794, %v784
      %v797 = vsel %vm345, %v796, %v788
      %vm798 = vcmask 269312
      %v799 = vsel %vm798, %v797, %v792
      %vm800 = vcmask 277504
      %v801 = vsel %vm800, %v799, 0.0
      %802 = vst [vmem:[%s225] sm:$0xff] %v801
      %s803 = scalar_lea.vmem %s211, 8
      %v804 = vld [vmem:[%s803] sm:$0xff]
      %v806 = vsel %vm262, %v804, 0
      %808 = vmatprep.subr.mxu0 0.0
      %809 = vmatpush1.msra.mxu0 0.0
      %810 = vmatprep.subr.mxu0 0.0
      %811 = vmatpush1.msra.mxu0 0.0
      %812 = vmatprep.subr.mxu0 0.0
      %813 = vmatpush1.msra.mxu0 0.0
      %814 = vmatprep.subr.mxu0 0.0
      %815 = vmatpush1.msra.mxu0 0.0
      %816 = vmatprep.subr.mxu0 0.0
      %817 = vmatpush1.msra.mxu0 0.0
      %818 = vmatprep.subr.mxu0 0.0
      %819 = vmatpush1.msra.mxu0 0.0
      %820 = vmatprep.subr.mxu0 0.0
      %821 = vmatpush1.msra.mxu0 0.0
      %822 = vmatprep.subr.mxu0 0.0
      %823 = vmatpush1.msra.mxu0 0.0
      %824 = vmatprep.subr.mxu0 0.0
      %825 = vmatpush1.msra.mxu0 0.0
      %826 = vmatprep.subr.mxu0 0.0
      %827 = vmatpush1.msra.mxu0 0.0
      %828 = vmatprep.subr.mxu0 0.0
      %829 = vmatpush1.msra.mxu0 0.0
      %830 = vmatprep.subr.mxu0 0.0
      %831 = vmatpush1.msra.mxu0 0.0
      %832 = vmatprep.subr.mxu0 0.0
      %833 = vmatpush1.msra.mxu0 0.0
      %834 = vmatprep.subr.mxu0 0.0
      %835 = vmatpush1.msra.mxu0 %v268
      %836 = vmatprep.subr.mxu0 0.0
      %837 = vmatpush1.msra.mxu0 %v228
      %838 = vmatprep.subr.mxu0 0.0
      %839 = vmatpush1.msra.mxu0 %v227
      %840 = vmatprep.subr.mxu0 0.0
      %841 = vmatpush2.msra.mxu0 0.0
      %842 = vmatprep.subr.mxu0 0.0
      %843 = vmatpush2.msra.mxu0 0.0
      %844 = vmatprep.subr.mxu0 0.0
      %845 = vmatpush2.msra.mxu0 0.0
      %846 = vmatprep.subr.mxu0 0.0
      %847 = vmatpush2.msra.mxu0 0.0
      %848 = vmatprep.subr.mxu0 0.0
      %849 = vmatpush2.msra.mxu0 0.0
      %850 = vmatprep.subr.mxu0 0.0
      %851 = vmatpush2.msra.mxu0 0.0
      %852 = vmatprep.subr.mxu0 0.0
      %853 = vmatpush2.msra.mxu0 0.0
      %854 = vmatprep.subr.mxu0 0.0
      %855 = vmatpush2.msra.mxu0 0.0
      %856 = vmatprep.subr.mxu0 0.0
      %857 = vmatpush2.msra.mxu0 0.0
      %858 = vmatprep.subr.mxu0 0.0
      %859 = vmatpush2.msra.mxu0 0.0
      %860 = vmatprep.subr.mxu0 0.0
      %861 = vmatpush2.msra.mxu0 0.0
      %862 = vmatprep.subr.mxu0 0.0
      %863 = vmatpush2.msra.mxu0 0.0
      %864 = vmatprep.subr.mxu0 0.0
      %865 = vmatpush2.msra.mxu0 0.0
      %866 = vmatprep.subr.mxu0 0.0
      %867 = vmatpush2.msra.mxu0 0.0
      %868 = vmatprep.subr.mxu0 0.0
      %869 = vmatpush2.msra.mxu0 0.0
      %870 = vmatprep.subr.mxu0 0.0
      %871 = vmatpush2.msra.mxu0 0.0
      %872 = vmatprep.mubr.f32.mxu0 0.0
      %873 = vmatmul.mubr.f32.gmra.mxu0 %v806
      %v874 = vpop.f32.mrf.mxu0
      %v875 = vadd.f32 %v261, %v874
      %v876 = vpop.f32.mrf.mxu0
      %877 = vdwg.mxu0
      %v878 = vmax.f32 %v875, 0.0
      %v880 = vsel %vm345, %v878, 0
      %882 = vmatprep.subr.mxu0 0.0
      %883 = vmatpush1.msra.mxu0 0.0
      %884 = vmatprep.subr.mxu0 0.0
      %885 = vmatpush1.msra.mxu0 0.0
      %886 = vmatprep.subr.mxu0 0.0
      %887 = vmatpush1.msra.mxu0 0.0
      %888 = vmatprep.subr.mxu0 0.0
      %889 = vmatpush1.msra.mxu0 0.0
      %890 = vmatprep.subr.mxu0 0.0
      %891 = vmatpush1.msra.mxu0 0.0
      %892 = vmatprep.subr.mxu0 0.0
      %893 = vmatpush1.msra.mxu0 0.0
      %894 = vmatprep.subr.mxu0 0.0
      %895 = vmatpush1.msra.mxu0 0.0
      %896 = vmatprep.subr.mxu0 0.0
      %897 = vmatpush1.msra.mxu0 0.0
      %898 = vmatprep.subr.mxu0 0.0
      %899 = vmatpush1.msra.mxu0 0.0
      %900 = vmatprep.subr.mxu0 0.0
      %901 = vmatpush1.msra.mxu0 0.0
      %902 = vmatprep.subr.mxu0 0.0
      %903 = vmatpush1.msra.mxu0 0.0
      %904 = vmatprep.subr.mxu0 0.0
      %905 = vmatpush1.msra.mxu0 0.0
      %906 = vmatprep.subr.mxu0 0.0
      %907 = vmatpush1.msra.mxu0 %v234
      %908 = vmatprep.subr.mxu0 0.0
      %909 = vmatpush1.msra.mxu0 %v233
      %910 = vmatprep.subr.mxu0 0.0
      %911 = vmatpush1.msra.mxu0 %v232
      %912 = vmatprep.subr.mxu0 0.0
      %913 = vmatpush1.msra.mxu0 %v231
      %914 = vmatprep.subr.mxu0 0.0
      %915 = vmatpush2.msra.mxu0 0.0
      %916 = vmatprep.subr.mxu0 0.0
      %917 = vmatpush2.msra.mxu0 0.0
      %918 = vmatprep.subr.mxu0 0.0
      %919 = vmatpush2.msra.mxu0 0.0
      %920 = vmatprep.subr.mxu0 0.0
      %921 = vmatpush2.msra.mxu0 0.0
      %922 = vmatprep.subr.mxu0 0.0
      %923 = vmatpush2.msra.mxu0 0.0
      %924 = vmatprep.subr.mxu0 0.0
      %925 = vmatpush2.msra.mxu0 0.0
      %926 = vmatprep.subr.mxu0 0.0
      %927 = vmatpush2.msra.mxu0 0.0
      %928 = vmatprep.subr.mxu0 0.0
      %929 = vmatpush2.msra.mxu0 0.0
      %930 = vmatprep.subr.mxu0 0.0
      %931 = vmatpush2.msra.mxu0 0.0
      %932 = vmatprep.subr.mxu0 0.0
      %933 = vmatpush2.msra.mxu0 0.0
      %934 = vmatprep.subr.mxu0 0.0
      %935 = vmatpush2.msra.mxu0 0.0
      %936 = vmatprep.subr.mxu0 0.0
      %937 = vmatpush2.msra.mxu0 0.0
      %938 = vmatprep.subr.mxu0 0.0
      %939 = vmatpush2.msra.mxu0 0.0
      %940 = vmatprep.subr.mxu0 0.0
      %941 = vmatpush2.msra.mxu0 0.0
      %942 = vmatprep.subr.mxu0 0.0
      %943 = vmatpush2.msra.mxu0 0.0
      %944 = vmatprep.subr.mxu0 0.0
      %945 = vmatpush2.msra.mxu0 0.0
      %946 = vmatprep.mubr.f32.mxu0 0.0
      %947 = vmatmul.mubr.f32.gmra.mxu0 %v880
      %v948 = vpop.f32.mrf.mxu0
      %v949 = vadd.f32 %v344, %v948
      %v950 = vpop.f32.mrf.mxu0
      %951 = vdwg.mxu0
      %v952 = vmax.f32 %v949, 0.0
      %954 = vrot.lane.b32.xlu0 %v952, 96
      %v955 = vpop.permute.xlu0 %954
      %v956 = vsel %vm423, %v955, 0
      %958 = vmatprep.subr.mxu0 0.0
      %959 = vmatpush1.msra.mxu0 0.0
      %960 = vmatprep.subr.mxu0 0.0
      %961 = vmatpush1.msra.mxu0 0.0
      %962 = vmatprep.subr.mxu0 0.0
      %963 = vmatpush1.msra.mxu0 0.0
      %964 = vmatprep.subr.mxu0 0.0
      %965 = vmatpush1.msra.mxu0 0.0
      %966 = vmatprep.subr.mxu0 0.0
      %967 = vmatpush1.msra.mxu0 0.0
      %968 = vmatprep.subr.mxu0 0.0
      %969 = vmatpush1.msra.mxu0 0.0
      %970 = vmatprep.subr.mxu0 0.0
      %971 = vmatpush1.msra.mxu0 0.0
      %972 = vmatprep.subr.mxu0 0.0
      %973 = vmatpush1.msra.mxu0 0.0
      %974 = vmatprep.subr.mxu0 0.0
      %975 = vmatpush1.msra.mxu0 0.0
      %976 = vmatprep.subr.mxu0 0.0
      %977 = vmatpush1.msra.mxu0 0.0
      %978 = vmatprep.subr.mxu0 0.0
      %979 = vmatpush1.msra.mxu0 0.0
      %980 = vmatprep.subr.mxu0 0.0
      %981 = vmatpush1.msra.mxu0 0.0
      %982 = vmatprep.subr.mxu0 0.0
      %983 = vmatpush1.msra.mxu0 0.0
      %984 = vmatprep.subr.mxu0 0.0
      %985 = vmatpush1.msra.mxu0 0.0
      %986 = vmatprep.subr.mxu0 0.0
      %987 = vmatpush1.msra.mxu0 %v237
      %988 = vmatprep.subr.mxu0 0.0
      %989 = vmatpush1.msra.mxu0 %v236
      %990 = vmatprep.subr.mxu0 0.0
      %991 = vmatpush2.msra.mxu0 0.0
      %992 = vmatprep.subr.mxu0 0.0
      %993 = vmatpush2.msra.mxu0 0.0
      %994 = vmatprep.subr.mxu0 0.0
      %995 = vmatpush2.msra.mxu0 0.0
      %996 = vmatprep.subr.mxu0 0.0
      %997 = vmatpush2.msra.mxu0 0.0
      %998 = vmatprep.subr.mxu0 0.0
      %999 = vmatpush2.msra.mxu0 0.0
      %1000 = vmatprep.subr.mxu0 0.0
      %1001 = vmatpush2.msra.mxu0 0.0
      %1002 = vmatprep.subr.mxu0 0.0
      %1003 = vmatpush2.msra.mxu0 0.0
      %1004 = vmatprep.subr.mxu0 0.0
      %1005 = vmatpush2.msra.mxu0 0.0
      %1006 = vmatprep.subr.mxu0 0.0
      %1007 = vmatpush2.msra.mxu0 0.0
      %1008 = vmatprep.subr.mxu0 0.0
      %1009 = vmatpush2.msra.mxu0 0.0
      %1010 = vmatprep.subr.mxu0 0.0
      %1011 = vmatpush2.msra.mxu0 0.0
      %1012 = vmatprep.subr.mxu0 0.0
      %1013 = vmatpush2.msra.mxu0 0.0
      %1014 = vmatprep.subr.mxu0 0.0
      %1015 = vmatpush2.msra.mxu0 0.0
      %1016 = vmatprep.subr.mxu0 0.0
      %1017 = vmatpush2.msra.mxu0 0.0
      %1018 = vmatprep.subr.mxu0 0.0
      %1019 = vmatpush2.msra.mxu0 0.0
      %1020 = vmatprep.subr.mxu0 0.0
      %1021 = vmatpush2.msra.mxu0 0.0
      %1022 = vmatprep.mubr.f32.mxu0 0.0
      %1023 = vmatmul.mubr.f32.gmra.mxu0 %v956
      %v1024 = vpop.f32.mrf.mxu0
      %v1025 = vadd.f32 0.0, %v1024
      %v1026 = vpop.f32.mrf.mxu0
      %1027 = vdwg.mxu0
      %v1028 = vadd.f32 %v949, %v1025
      %v1029 = vmax.f32 %v1028, 0.0
      %1030 = vrot.lane.b32.xlu0 %v604, 8
      %v1031 = vpop.permute.xlu0 %1030
      %v1033 = vsel %vm345, %v1029, %v1031
      %v1035 = vsel %vm507, %v1033, 0
      %1037 = vmatprep.subr.mxu0 0.0
      %1038 = vmatpush1.msra.mxu0 0.0
      %1039 = vmatprep.subr.mxu0 0.0
      %1040 = vmatpush1.msra.mxu0 0.0
      %1041 = vmatprep.subr.mxu0 0.0
      %1042 = vmatpush1.msra.mxu0 0.0
      %1043 = vmatprep.subr.mxu0 0.0
      %1044 = vmatpush1.msra.mxu0 0.0
      %1045 = vmatprep.subr.mxu0 0.0
      %1046 = vmatpush1.msra.mxu0 0.0
      %1047 = vmatprep.subr.mxu0 0.0
      %1048 = vmatpush1.msra.mxu0 0.0
      %1049 = vmatprep.subr.mxu0 0.0
      %1050 = vmatpush1.msra.mxu0 0.0
      %1051 = vmatprep.subr.mxu0 0.0
      %1052 = vmatpush1.msra.mxu0 0.0
      %1053 = vmatprep.subr.mxu0 0.0
      %1054 = vmatpush1.msra.mxu0 0.0
      %1055 = vmatprep.subr.mxu0 0.0
      %1056 = vmatpush1.msra.mxu0 0.0
      %1057 = vmatprep.subr.mxu0 0.0
      %1058 = vmatpush1.msra.mxu0 0.0
      %1059 = vmatprep.subr.mxu0 0.0
      %1060 = vmatpush1.msra.mxu0 %v242
      %1061 = vmatprep.subr.mxu0 0.0
      %1062 = vmatpush1.msra.mxu0 %v241
      %1063 = vmatprep.subr.mxu0 0.0
      %1064 = vmatpush1.msra.mxu0 %v240
      %1065 = vmatprep.subr.mxu0 0.0
      %1066 = vmatpush1.msra.mxu0 %v239
      %1067 = vmatprep.subr.mxu0 0.0
      %1068 = vmatpush1.msra.mxu0 %v238
      %1069 = vmatprep.subr.mxu0 0.0
      %1070 = vmatpush2.msra.mxu0 0.0
      %1071 = vmatprep.subr.mxu0 0.0
      %1072 = vmatpush2.msra.mxu0 0.0
      %1073 = vmatprep.subr.mxu0 0.0
      %1074 = vmatpush2.msra.mxu0 0.0
      %1075 = vmatprep.subr.mxu0 0.0
      %1076 = vmatpush2.msra.mxu0 0.0
      %1077 = vmatprep.subr.mxu0 0.0
      %1078 = vmatpush2.msra.mxu0 0.0
      %1079 = vmatprep.subr.mxu0 0.0
      %1080 = vmatpush2.msra.mxu0 0.0
      %1081 = vmatprep.subr.mxu0 0.0
      %1082 = vmatpush2.msra.mxu0 0.0
      %1083 = vmatprep.subr.mxu0 0.0
      %1084 = vmatpush2.msra.mxu0 0.0
      %1085 = vmatprep.subr.mxu0 0.0
      %1086 = vmatpush2.msra.mxu0 0.0
      %1087 = vmatprep.subr.mxu0 0.0
      %1088 = vmatpush2.msra.mxu0 0.0
      %1089 = vmatprep.subr.mxu0 0.0
      %1090 = vmatpush2.msra.mxu0 0.0
      %1091 = vmatprep.subr.mxu0 0.0
      %1092 = vmatpush2.msra.mxu0 0.0
      %1093 = vmatprep.subr.mxu0 0.0
      %1094 = vmatpush2.msra.mxu0 0.0
      %1095 = vmatprep.subr.mxu0 0.0
      %1096 = vmatpush2.msra.mxu0 0.0
      %1097 = vmatprep.subr.mxu0 0.0
      %1098 = vmatpush2.msra.mxu0 0.0
      %1099 = vmatprep.subr.mxu0 0.0
      %1100 = vmatpush2.msra.mxu0 0.0
      %1101 = vmatprep.mubr.f32.mxu0 0.0
      %1102 = vmatmul.mubr.f32.gmra.mxu0 %v1035
      %v1103 = vpop.f32.mrf.mxu0
      %v1104 = vadd.f32 %v506, %v1103
      %v1105 = vpop.f32.mrf.mxu0
      %1106 = vdwg.mxu0
      %v1107 = vxor.u32 %v1104, 2147483648
      %v1108 = vmul.f32 %v1107, 1.442695
      %v1109 = vpow.pop %v1108
      %v1110 = vadd.f32 %v1109, 1.0
      %v1111 = vrcp.pop %v1110
      %v1112 = vmul.f32 1.0, %v1111
      %v1113 = vtanh.pop %v1104
      %v1114 = vmul.f32 %v1112, %v598
      %1116 = vrot.lane.b32.xlu0 %v1113, 112
      %v1117 = vpop.permute.xlu0 %1116
      %v1119 = vmul.f32 %v1112, %v1117
      %1121 = vrot.lane.b32.xlu0 %v1119, 8
      %v1122 = vpop.permute.xlu0 %1121
      %v1124 = vadd.f32 %v1114, %v1122
      %v1125 = vtanh.pop %v1124
      %1127 = vrot.lane.b32.xlu0 %v1125, 16
      %v1128 = vpop.permute.xlu0 %1127
      %v1130 = vmul.f32 %v1112, %v1128
      %1132 = vrot.lane.b32.xlu0 %v1130, 104
      %v1133 = vpop.permute.xlu0 %1132
      %v1134 = vsel %vm612, %v1133, 0
      %1136 = vmatprep.subr.mxu0 0.0
      %1137 = vmatpush1.msra.mxu0 0.0
      %1138 = vmatprep.subr.mxu0 0.0
      %1139 = vmatpush1.msra.mxu0 0.0
      %1140 = vmatprep.subr.mxu0 0.0
      %1141 = vmatpush1.msra.mxu0 0.0
      %1142 = vmatprep.subr.mxu0 0.0
      %1143 = vmatpush1.msra.mxu0 0.0
      %1144 = vmatprep.subr.mxu0 0.0
      %1145 = vmatpush1.msra.mxu0 0.0
      %1146 = vmatprep.subr.mxu0 0.0
      %1147 = vmatpush1.msra.mxu0 0.0
      %1148 = vmatprep.subr.mxu0 0.0
      %1149 = vmatpush1.msra.mxu0 0.0
      %1150 = vmatprep.subr.mxu0 0.0
      %1151 = vmatpush1.msra.mxu0 0.0
      %1152 = vmatprep.subr.mxu0 0.0
      %1153 = vmatpush1.msra.mxu0 0.0
      %1154 = vmatprep.subr.mxu0 0.0
      %1155 = vmatpush1.msra.mxu0 0.0
      %1156 = vmatprep.subr.mxu0 0.0
      %1157 = vmatpush1.msra.mxu0 0.0
      %1158 = vmatprep.subr.mxu0 0.0
      %1159 = vmatpush1.msra.mxu0 0.0
      %1160 = vmatprep.subr.mxu0 0.0
      %1161 = vmatpush1.msra.mxu0 0.0
      %1162 = vmatprep.subr.mxu0 0.0
      %1163 = vmatpush1.msra.mxu0 0.0
      %1164 = vmatprep.subr.mxu0 0.0
      %1165 = vmatpush1.msra.mxu0 0.0
      %1166 = vmatprep.subr.mxu0 0.0
      %1167 = vmatpush1.msra.mxu0 %v244
      %1168 = vmatprep.subr.mxu0 0.0
      %1169 = vmatpush2.msra.mxu0 0.0
      %1170 = vmatprep.subr.mxu0 0.0
      %1171 = vmatpush2.msra.mxu0 0.0
      %1172 = vmatprep.subr.mxu0 0.0
      %1173 = vmatpush2.msra.mxu0 0.0
      %1174 = vmatprep.subr.mxu0 0.0
      %1175 = vmatpush2.msra.mxu0 0.0
      %1176 = vmatprep.subr.mxu0 0.0
      %1177 = vmatpush2.msra.mxu0 0.0
      %1178 = vmatprep.subr.mxu0 0.0
      %1179 = vmatpush2.msra.mxu0 0.0
      %1180 = vmatprep.subr.mxu0 0.0
      %1181 = vmatpush2.msra.mxu0 0.0
      %1182 = vmatprep.subr.mxu0 0.0
      %1183 = vmatpush2.msra.mxu0 0.0
      %1184 = vmatprep.subr.mxu0 0.0
      %1185 = vmatpush2.msra.mxu0 0.0
      %1186 = vmatprep.subr.mxu0 0.0
      %1187 = vmatpush2.msra.mxu0 0.0
      %1188 = vmatprep.subr.mxu0 0.0
      %1189 = vmatpush2.msra.mxu0 0.0
      %1190 = vmatprep.subr.mxu0 0.0
      %1191 = vmatpush2.msra.mxu0 0.0
      %1192 = vmatprep.subr.mxu0 0.0
      %1193 = vmatpush2.msra.mxu0 0.0
      %1194 = vmatprep.subr.mxu0 0.0
      %1195 = vmatpush2.msra.mxu0 0.0
      %1196 = vmatprep.subr.mxu0 0.0
      %1197 = vmatpush2.msra.mxu0 0.0
      %1198 = vmatprep.subr.mxu0 0.0
      %1199 = vmatpush2.msra.mxu0 0.0
      %1200 = vmatprep.mubr.f32.mxu0 0.0
      %1201 = vmatmul.mubr.f32.gmra.mxu0 %v1134
      %v1202 = vpop.f32.mrf.mxu0
      %v1203 = vadd.f32 %v608, %v1202
      %v1204 = vpop.f32.mrf.mxu0
      %1205 = vdwg.mxu0
      %v1206 = vxor.u32 %v1203, 2147483648
      %v1207 = vmul.f32 %v1206, 1.442695
      %v1208 = vpow.pop %v1207
      %v1209 = vadd.f32 %v1208, 1.0
      %v1210 = vrcp.pop %v1209
      %v1211 = vmul.f32 1.0, %v1210
      %v1213 = vsel %vm423, %v1203, 0
      %1215 = vmatprep.subr.mxu0 0.0
      %1216 = vmatpush1.msra.mxu0 0.0
      %1217 = vmatprep.subr.mxu0 0.0
      %1218 = vmatpush1.msra.mxu0 0.0
      %1219 = vmatprep.subr.mxu0 0.0
      %1220 = vmatpush1.msra.mxu0 0.0
      %1221 = vmatprep.subr.mxu0 0.0
      %1222 = vmatpush1.msra.mxu0 0.0
      %1223 = vmatprep.subr.mxu0 0.0
      %1224 = vmatpush1.msra.mxu0 0.0
      %1225 = vmatprep.subr.mxu0 0.0
      %1226 = vmatpush1.msra.mxu0 0.0
      %1227 = vmatprep.subr.mxu0 0.0
      %1228 = vmatpush1.msra.mxu0 0.0
      %1229 = vmatprep.subr.mxu0 0.0
      %1230 = vmatpush1.msra.mxu0 0.0
      %1231 = vmatprep.subr.mxu0 0.0
      %1232 = vmatpush1.msra.mxu0 0.0
      %1233 = vmatprep.subr.mxu0 0.0
      %1234 = vmatpush1.msra.mxu0 0.0
      %1235 = vmatprep.subr.mxu0 0.0
      %1236 = vmatpush1.msra.mxu0 0.0
      %1237 = vmatprep.subr.mxu0 0.0
      %1238 = vmatpush1.msra.mxu0 0.0
      %1239 = vmatprep.subr.mxu0 0.0
      %1240 = vmatpush1.msra.mxu0 0.0
      %1241 = vmatprep.subr.mxu0 0.0
      %1242 = vmatpush1.msra.mxu0 0.0
      %1243 = vmatprep.subr.mxu0 0.0
      %1244 = vmatpush1.msra.mxu0 %v247
      %1245 = vmatprep.subr.mxu0 0.0
      %1246 = vmatpush1.msra.mxu0 %v246
      %1247 = vmatprep.subr.mxu0 0.0
      %1248 = vmatpush2.msra.mxu0 0.0
      %1249 = vmatprep.subr.mxu0 0.0
      %1250 = vmatpush2.msra.mxu0 0.0
      %1251 = vmatprep.subr.mxu0 0.0
      %1252 = vmatpush2.msra.mxu0 0.0
      %1253 = vmatprep.subr.mxu0 0.0
      %1254 = vmatpush2.msra.mxu0 0.0
      %1255 = vmatprep.subr.mxu0 0.0
      %1256 = vmatpush2.msra.mxu0 0.0
      %1257 = vmatprep.subr.mxu0 0.0
      %1258 = vmatpush2.msra.mxu0 0.0
      %1259 = vmatprep.subr.mxu0 0.0
      %1260 = vmatpush2.msra.mxu0 0.0
      %1261 = vmatprep.subr.mxu0 0.0
      %1262 = vmatpush2.msra.mxu0 0.0
      %1263 = vmatprep.subr.mxu0 0.0
      %1264 = vmatpush2.msra.mxu0 0.0
      %1265 = vmatprep.subr.mxu0 0.0
      %1266 = vmatpush2.msra.mxu0 0.0
      %1267 = vmatprep.subr.mxu0 0.0
      %1268 = vmatpush2.msra.mxu0 0.0
      %1269 = vmatprep.subr.mxu0 0.0
      %1270 = vmatpush2.msra.mxu0 0.0
      %1271 = vmatprep.subr.mxu0 0.0
      %1272 = vmatpush2.msra.mxu0 0.0
      %1273 = vmatprep.subr.mxu0 0.0
      %1274 = vmatpush2.msra.mxu0 0.0
      %1275 = vmatprep.subr.mxu0 0.0
      %1276 = vmatpush2.msra.mxu0 0.0
      %1277 = vmatprep.subr.mxu0 0.0
      %1278 = vmatpush2.msra.mxu0 0.0
      %1279 = vmatprep.mubr.f32.mxu0 0.0
      %1280 = vmatmul.mubr.f32.gmra.mxu0 %v1213
      %v1281 = vpop.f32.mrf.mxu0
      %v1282 = vadd.f32 %v694, %v1281
      %v1283 = vpop.f32.mrf.mxu0
      %1284 = vdwg.mxu0
      %v1285 = vsel %vm423, %v1282, -inf
      %1286 = vmax.xlane.f32.xlu0 %v1285
      %v1287 = vpop.xlane.xlu0 %1286
      %v1288 = vsub.f32 %v1282, %v1287
      %v1289 = vmul.f32 %v1288, 1.442695
      %v1290 = vpow.pop %v1289
      %v1291 = vsel %vm423, %v1290, 0.0
      %1292 = vadd.xlane.f32.xlu0 %v1291
      %v1293 = vpop.xlane.xlu0 %1292
      %v1294 = vrcp.pop %v1293
      %v1295 = vmul.f32 %v1290, %v1294
      %1296 = vrot.lane.b32.xlu0 %v1130, 120
      %v1297 = vpop.permute.xlu0 %1296
      %1300 = vrot.lane.b32.xlu0 %v1124, 16
      %v1301 = vpop.permute.xlu0 %1300
      %1304 = vrot.lane.b32.xlu0 %v1211, 16
      %v1305 = vpop.permute.xlu0 %1304
      %1308 = vrot.lane.b32.xlu0 %v1282, 17
      %v1309 = vpop.permute.xlu0 %1308
      %v1311 = vsel %vm423, %v1295, %v1297
      %v1312 = vsel %vm795, %v1311, %v1301
      %v1313 = vsel %vm345, %v1312, %v1305
      %v1314 = vsel %vm798, %v1313, %v1309
      %v1315 = vsel %vm800, %v1314, 0.0
      %s1316 = scalar_lea.vmem %s225, 8
      %1317 = vst [vmem:[%s1316] sm:$0xff] %v1315
      %s1318 = scalar_lea.vmem %s211, 16
      %v1319 = vld [vmem:[%s1318] sm:$0xff]
      %v1321 = vsel %vm262, %v1319, 0
      %1323 = vmatprep.subr.mxu0 0.0
      %1324 = vmatpush1.msra.mxu0 0.0
      %1325 = vmatprep.subr.mxu0 0.0
      %1326 = vmatpush1.msra.mxu0 0.0
      %1327 = vmatprep.subr.mxu0 0.0
      %1328 = vmatpush1.msra.mxu0 0.0
      %1329 = vmatprep.subr.mxu0 0.0
      %1330 = vmatpush1.msra.mxu0 0.0
      %1331 = vmatprep.subr.mxu0 0.0
      %1332 = vmatpush1.msra.mxu0 0.0
      %1333 = vmatprep.subr.mxu0 0.0
      %1334 = vmatpush1.msra.mxu0 0.0
      %1335 = vmatprep.subr.mxu0 0.0
      %1336 = vmatpush1.msra.mxu0 0.0
      %1337 = vmatprep.subr.mxu0 0.0
      %1338 = vmatpush1.msra.mxu0 0.0
      %1339 = vmatprep.subr.mxu0 0.0
      %1340 = vmatpush1.msra.mxu0 0.0
      %1341 = vmatprep.subr.mxu0 0.0
      %1342 = vmatpush1.msra.mxu0 0.0
      %1343 = vmatprep.subr.mxu0 0.0
      %1344 = vmatpush1.msra.mxu0 0.0
      %1345 = vmatprep.subr.mxu0 0.0
      %1346 = vmatpush1.msra.mxu0 0.0
      %1347 = vmatprep.subr.mxu0 0.0
      %1348 = vmatpush1.msra.mxu0 0.0
      %1349 = vmatprep.subr.mxu0 0.0
      %1350 = vmatpush1.msra.mxu0 %v268
      %1351 = vmatprep.subr.mxu0 0.0
      %1352 = vmatpush1.msra.mxu0 %v228
      %1353 = vmatprep.subr.mxu0 0.0
      %1354 = vmatpush1.msra.mxu0 %v227
      %1355 = vmatprep.subr.mxu0 0.0
      %1356 = vmatpush2.msra.mxu0 0.0
      %1357 = vmatprep.subr.mxu0 0.0
      %1358 = vmatpush2.msra.mxu0 0.0
      %1359 = vmatprep.subr.mxu0 0.0
      %1360 = vmatpush2.msra.mxu0 0.0
      %1361 = vmatprep.subr.mxu0 0.0
      %1362 = vmatpush2.msra.mxu0 0.0
      %1363 = vmatprep.subr.mxu0 0.0
      %1364 = vmatpush2.msra.mxu0 0.0
      %1365 = vmatprep.subr.mxu0 0.0
      %1366 = vmatpush2.msra.mxu0 0.0
      %1367 = vmatprep.subr.mxu0 0.0
      %1368 = vmatpush2.msra.mxu0 0.0
      %1369 = vmatprep.subr.mxu0 0.0
      %1370 = vmatpush2.msra.mxu0 0.0
      %1371 = vmatprep.subr.mxu0 0.0
      %1372 = vmatpush2.msra.mxu0 0.0
      %1373 = vmatprep.subr.mxu0 0.0
      %1374 = vmatpush2.msra.mxu0 0.0
      %1375 = vmatprep.subr.mxu0 0.0
      %1376 = vmatpush2.msra.mxu0 0.0
      %1377 = vmatprep.subr.mxu0 0.0
      %1378 = vmatpush2.msra.mxu0 0.0
      %1379 = vmatprep.subr.mxu0 0.0
      %1380 = vmatpush2.msra.mxu0 0.0
      %1381 = vmatprep.subr.mxu0 0.0
      %1382 = vmatpush2.msra.mxu0 0.0
      %1383 = vmatprep.subr.mxu0 0.0
      %1384 = vmatpush2.msra.mxu0 0.0
      %1385 = vmatprep.subr.mxu0 0.0
      %1386 = vmatpush2.msra.mxu0 0.0
      %1387 = vmatprep.mubr.f32.mxu0 0.0
      %1388 = vmatmul.mubr.f32.gmra.mxu0 %v1321
      %v1389 = vpop.f32.mrf.mxu0
      %v1390 = vadd.f32 %v261, %v1389
      %v1391 = vpop.f32.mrf.mxu0
      %1392 = vdwg.mxu0
      %v1393 = vmax.f32 %v1390, 0.0
      %v1395 = vsel %vm345, %v1393, 0
      %1397 = vmatprep.subr.mxu0 0.0
      %1398 = vmatpush1.msra.mxu0 0.0
      %1399 = vmatprep.subr.mxu0 0.0
      %1400 = vmatpush1.msra.mxu0 0.0
      %1401 = vmatprep.subr.mxu0 0.0
      %1402 = vmatpush1.msra.mxu0 0.0
      %1403 = vmatprep.subr.mxu0 0.0
      %1404 = vmatpush1.msra.mxu0 0.0
      %1405 = vmatprep.subr.mxu0 0.0
      %1406 = vmatpush1.msra.mxu0 0.0
      %1407 = vmatprep.subr.mxu0 0.0
      %1408 = vmatpush1.msra.mxu0 0.0
      %1409 = vmatprep.subr.mxu0 0.0
      %1410 = vmatpush1.msra.mxu0 0.0
      %1411 = vmatprep.subr.mxu0 0.0
      %1412 = vmatpush1.msra.mxu0 0.0
      %1413 = vmatprep.subr.mxu0 0.0
      %1414 = vmatpush1.msra.mxu0 0.0
      %1415 = vmatprep.subr.mxu0 0.0
      %1416 = vmatpush1.msra.mxu0 0.0
      %1417 = vmatprep.subr.mxu0 0.0
      %1418 = vmatpush1.msra.mxu0 0.0
      %1419 = vmatprep.subr.mxu0 0.0
      %1420 = vmatpush1.msra.mxu0 0.0
      %1421 = vmatprep.subr.mxu0 0.0
      %1422 = vmatpush1.msra.mxu0 %v234
      %1423 = vmatprep.subr.mxu0 0.0
      %1424 = vmatpush1.msra.mxu0 %v233
      %1425 = vmatprep.subr.mxu0 0.0
      %1426 = vmatpush1.msra.mxu0 %v232
      %1427 = vmatprep.subr.mxu0 0.0
      %1428 = vmatpush1.msra.mxu0 %v231
      %1429 = vmatprep.subr.mxu0 0.0
      %1430 = vmatpush2.msra.mxu0 0.0
      %1431 = vmatprep.subr.mxu0 0.0
      %1432 = vmatpush2.msra.mxu0 0.0
      %1433 = vmatprep.subr.mxu0 0.0
      %1434 = vmatpush2.msra.mxu0 0.0
      %1435 = vmatprep.subr.mxu0 0.0
      %1436 = vmatpush2.msra.mxu0 0.0
      %1437 = vmatprep.subr.mxu0 0.0
      %1438 = vmatpush2.msra.mxu0 0.0
      %1439 = vmatprep.subr.mxu0 0.0
      %1440 = vmatpush2.msra.mxu0 0.0
      %1441 = vmatprep.subr.mxu0 0.0
      %1442 = vmatpush2.msra.mxu0 0.0
      %1443 = vmatprep.subr.mxu0 0.0
      %1444 = vmatpush2.msra.mxu0 0.0
      %1445 = vmatprep.subr.mxu0 0.0
      %1446 = vmatpush2.msra.mxu0 0.0
      %1447 = vmatprep.subr.mxu0 0.0
      %1448 = vmatpush2.msra.mxu0 0.0
      %1449 = vmatprep.subr.mxu0 0.0
      %1450 = vmatpush2.msra.mxu0 0.0
      %1451 = vmatprep.subr.mxu0 0.0
      %1452 = vmatpush2.msra.mxu0 0.0
      %1453 = vmatprep.subr.mxu0 0.0
      %1454 = vmatpush2.msra.mxu0 0.0
      %1455 = vmatprep.subr.mxu0 0.0
      %1456 = vmatpush2.msra.mxu0 0.0
      %1457 = vmatprep.subr.mxu0 0.0
      %1458 = vmatpush2.msra.mxu0 0.0
      %1459 = vmatprep.subr.mxu0 0.0
      %1460 = vmatpush2.msra.mxu0 0.0
      %1461 = vmatprep.mubr.f32.mxu0 0.0
      %1462 = vmatmul.mubr.f32.gmra.mxu0 %v1395
      %v1463 = vpop.f32.mrf.mxu0
      %v1464 = vadd.f32 %v344, %v1463
      %v1465 = vpop.f32.mrf.mxu0
      %1466 = vdwg.mxu0
      %v1467 = vmax.f32 %v1464, 0.0
      %1469 = vrot.lane.b32.xlu0 %v1467, 96
      %v1470 = vpop.permute.xlu0 %1469
      %v1471 = vsel %vm423, %v1470, 0
      %1473 = vmatprep.subr.mxu0 0.0
      %1474 = vmatpush1.msra.mxu0 0.0
      %1475 = vmatprep.subr.mxu0 0.0
      %1476 = vmatpush1.msra.mxu0 0.0
      %1477 = vmatprep.subr.mxu0 0.0
      %1478 = vmatpush1.msra.mxu0 0.0
      %1479 = vmatprep.subr.mxu0 0.0
      %1480 = vmatpush1.msra.mxu0 0.0
      %1481 = vmatprep.subr.mxu0 0.0
      %1482 = vmatpush1.msra.mxu0 0.0
      %1483 = vmatprep.subr.mxu0 0.0
      %1484 = vmatpush1.msra.mxu0 0.0
      %1485 = vmatprep.subr.mxu0 0.0
      %1486 = vmatpush1.msra.mxu0 0.0
      %1487 = vmatprep.subr.mxu0 0.0
      %1488 = vmatpush1.msra.mxu0 0.0
      %1489 = vmatprep.subr.mxu0 0.0
      %1490 = vmatpush1.msra.mxu0 0.0
      %1491 = vmatprep.subr.mxu0 0.0
      %1492 = vmatpush1.msra.mxu0 0.0
      %1493 = vmatprep.subr.mxu0 0.0
      %1494 = vmatpush1.msra.mxu0 0.0
      %1495 = vmatprep.subr.mxu0 0.0
      %1496 = vmatpush1.msra.mxu0 0.0
      %1497 = vmatprep.subr.mxu0 0.0
      %1498 = vmatpush1.msra.mxu0 0.0
      %1499 = vmatprep.subr.mxu0 0.0
      %1500 = vmatpush1.msra.mxu0 0.0
      %1501 = vmatprep.subr.mxu0 0.0
      %1502 = vmatpush1.msra.mxu0 %v237
      %1503 = vmatprep.subr.mxu0 0.0
      %1504 = vmatpush1.msra.mxu0 %v236
      %1505 = vmatprep.subr.mxu0 0.0
      %1506 = vmatpush2.msra.mxu0 0.0
      %1507 = vmatprep.subr.mxu0 0.0
      %1508 = vmatpush2.msra.mxu0 0.0
      %1509 = vmatprep.subr.mxu0 0.0
      %1510 = vmatpush2.msra.mxu0 0.0
      %1511 = vmatprep.subr.mxu0 0.0
      %1512 = vmatpush2.msra.mxu0 0.0
      %1513 = vmatprep.subr.mxu0 0.0
      %1514 = vmatpush2.msra.mxu0 0.0
      %1515 = vmatprep.subr.mxu0 0.0
      %1516 = vmatpush2.msra.mxu0 0.0
      %1517 = vmatprep.subr.mxu0 0.0
      %1518 = vmatpush2.msra.mxu0 0.0
      %1519 = vmatprep.subr.mxu0 0.0
      %1520 = vmatpush2.msra.mxu0 0.0
      %1521 = vmatprep.subr.mxu0 0.0
      %1522 = vmatpush2.msra.mxu0 0.0
      %1523 = vmatprep.subr.mxu0 0.0
      %1524 = vmatpush2.msra.mxu0 0.0
      %1525 = vmatprep.subr.mxu0 0.0
      %1526 = vmatpush2.msra.mxu0 0.0
      %1527 = vmatprep.subr.mxu0 0.0
      %1528 = vmatpush2.msra.mxu0 0.0
      %1529 = vmatprep.subr.mxu0 0.0
      %1530 = vmatpush2.msra.mxu0 0.0
      %1531 = vmatprep.subr.mxu0 0.0
      %1532 = vmatpush2.msra.mxu0 0.0
      %1533 = vmatprep.subr.mxu0 0.0
      %1534 = vmatpush2.msra.mxu0 0.0
      %1535 = vmatprep.subr.mxu0 0.0
      %1536 = vmatpush2.msra.mxu0 0.0
      %1537 = vmatprep.mubr.f32.mxu0 0.0
      %1538 = vmatmul.mubr.f32.gmra.mxu0 %v1471
      %v1539 = vpop.f32.mrf.mxu0
      %v1540 = vadd.f32 0.0, %v1539
      %v1541 = vpop.f32.mrf.mxu0
      %1542 = vdwg.mxu0
      %v1543 = vadd.f32 %v1464, %v1540
      %v1544 = vmax.f32 %v1543, 0.0
      %1545 = vrot.lane.b32.xlu0 %v1130, 8
      %v1546 = vpop.permute.xlu0 %1545
      %v1548 = vsel %vm345, %v1544, %v1546
      %v1550 = vsel %vm507, %v1548, 0
      %1552 = vmatprep.subr.mxu0 0.0
      %1553 = vmatpush1.msra.mxu0 0.0
      %1554 = vmatprep.subr.mxu0 0.0
      %1555 = vmatpush1.msra.mxu0 0.0
      %1556 = vmatprep.subr.mxu0 0.0
      %1557 = vmatpush1.msra.mxu0 0.0
      %1558 = vmatprep.subr.mxu0 0.0
      %1559 = vmatpush1.msra.mxu0 0.0
      %1560 = vmatprep.subr.mxu0 0.0
      %1561 = vmatpush1.msra.mxu0 0.0
      %1562 = vmatprep.subr.mxu0 0.0
      %1563 = vmatpush1.msra.mxu0 0.0
      %1564 = vmatprep.subr.mxu0 0.0
      %1565 = vmatpush1.msra.mxu0 0.0
      %1566 = vmatprep.subr.mxu0 0.0
      %1567 = vmatpush1.msra.mxu0 0.0
      %1568 = vmatprep.subr.mxu0 0.0
      %1569 = vmatpush1.msra.mxu0 0.0
      %1570 = vmatprep.subr.mxu0 0.0
      %1571 = vmatpush1.msra.mxu0 0.0
      %1572 = vmatprep.subr.mxu0 0.0
      %1573 = vmatpush1.msra.mxu0 0.0
      %1574 = vmatprep.subr.mxu0 0.0
      %1575 = vmatpush1.msra.mxu0 %v242
      %1576 = vmatprep.subr.mxu0 0.0
      %1577 = vmatpush1.msra.mxu0 %v241
      %1578 = vmatprep.subr.mxu0 0.0
      %1579 = vmatpush1.msra.mxu0 %v240
      %1580 = vmatprep.subr.mxu0 0.0
      %1581 = vmatpush1.msra.mxu0 %v239
      %1582 = vmatprep.subr.mxu0 0.0
      %1583 = vmatpush1.msra.mxu0 %v238
      %1584 = vmatprep.subr.mxu0 0.0
      %1585 = vmatpush2.msra.mxu0 0.0
      %1586 = vmatprep.subr.mxu0 0.0
      %1587 = vmatpush2.msra.mxu0 0.0
      %1588 = vmatprep.subr.mxu0 0.0
      %1589 = vmatpush2.msra.mxu0 0.0
      %1590 = vmatprep.subr.mxu0 0.0
      %1591 = vmatpush2.msra.mxu0 0.0
      %1592 = vmatprep.subr.mxu0 0.0
      %1593 = vmatpush2.msra.mxu0 0.0
      %1594 = vmatprep.subr.mxu0 0.0
      %1595 = vmatpush2.msra.mxu0 0.0
      %1596 = vmatprep.subr.mxu0 0.0
      %1597 = vmatpush2.msra.mxu0 0.0
      %1598 = vmatprep.subr.mxu0 0.0
      %1599 = vmatpush2.msra.mxu0 0.0
      %1600 = vmatprep.subr.mxu0 0.0
      %1601 = vmatpush2.msra.mxu0 0.0
      %1602 = vmatprep.subr.mxu0 0.0
      %1603 = vmatpush2.msra.mxu0 0.0
      %1604 = vmatprep.subr.mxu0 0.0
      %1605 = vmatpush2.msra.mxu0 0.0
      %1606 = vmatprep.subr.mxu0 0.0
      %1607 = vmatpush2.msra.mxu0 0.0
      %1608 = vmatprep.subr.mxu0 0.0
      %1609 = vmatpush2.msra.mxu0 0.0
      %1610 = vmatprep.subr.mxu0 0.0
      %1611 = vmatpush2.msra.mxu0 0.0
      %1612 = vmatprep.subr.mxu0 0.0
      %1613 = vmatpush2.msra.mxu0 0.0
      %1614 = vmatprep.subr.mxu0 0.0
      %1615 = vmatpush2.msra.mxu0 0.0
      %1616 = vmatprep.mubr.f32.mxu0 0.0
      %1617 = vmatmul.mubr.f32.gmra.mxu0 %v1550
      %v1618 = vpop.f32.mrf.mxu0
      %v1619 = vadd.f32 %v506, %v1618
      %v1620 = vpop.f32.mrf.mxu0
      %1621 = vdwg.mxu0
      %v1622 = vxor.u32 %v1619, 2147483648
      %v1623 = vmul.f32 %v1622, 1.442695
      %v1624 = vpow.pop %v1623
      %v1625 = vadd.f32 %v1624, 1.0
      %v1626 = vrcp.pop %v1625
      %v1627 = vmul.f32 1.0, %v1626
      %v1628 = vtanh.pop %v1619
      %v1629 = vmul.f32 %v1627, %v1124
      %1631 = vrot.lane.b32.xlu0 %v1628, 112
      %v1632 = vpop.permute.xlu0 %1631
      %v1634 = vmul.f32 %v1627, %v1632
      %1636 = vrot.lane.b32.xlu0 %v1634, 8
      %v1637 = vpop.permute.xlu0 %1636
      %v1639 = vadd.f32 %v1629, %v1637
      %v1640 = vtanh.pop %v1639
      %1642 = vrot.lane.b32.xlu0 %v1640, 16
      %v1643 = vpop.permute.xlu0 %1642
      %v1645 = vmul.f32 %v1627, %v1643
      %1647 = vrot.lane.b32.xlu0 %v1645, 104
      %v1648 = vpop.permute.xlu0 %1647
      %v1649 = vsel %vm612, %v1648, 0
      %1651 = vmatprep.subr.mxu0 0.0
      %1652 = vmatpush1.msra.mxu0 0.0
      %1653 = vmatprep.subr.mxu0 0.0
      %1654 = vmatpush1.msra.mxu0 0.0
      %1655 = vmatprep.subr.mxu0 0.0
      %1656 = vmatpush1.msra.mxu0 0.0
      %1657 = vmatprep.subr.mxu0 0.0
      %1658 = vmatpush1.msra.mxu0 0.0
      %1659 = vmatprep.subr.mxu0 0.0
      %1660 = vmatpush1.msra.mxu0 0.0
      %1661 = vmatprep.subr.mxu0 0.0
      %1662 = vmatpush1.msra.mxu0 0.0
      %1663 = vmatprep.subr.mxu0 0.0
      %1664 = vmatpush1.msra.mxu0 0.0
      %1665 = vmatprep.subr.mxu0 0.0
      %1666 = vmatpush1.msra.mxu0 0.0
      %1667 = vmatprep.subr.mxu0 0.0
      %1668 = vmatpush1.msra.mxu0 0.0
      %1669 = vmatprep.subr.mxu0 0.0
      %1670 = vmatpush1.msra.mxu0 0.0
      %1671 = vmatprep.subr.mxu0 0.0
      %1672 = vmatpush1.msra.mxu0 0.0
      %1673 = vmatprep.subr.mxu0 0.0
      %1674 = vmatpush1.msra.mxu0 0.0
      %1675 = vmatprep.subr.mxu0 0.0
      %1676 = vmatpush1.msra.mxu0 0.0
      %1677 = vmatprep.subr.mxu0 0.0
      %1678 = vmatpush1.msra.mxu0 0.0
      %1679 = vmatprep.subr.mxu0 0.0
      %1680 = vmatpush1.msra.mxu0 0.0
      %1681 = vmatprep.subr.mxu0 0.0
      %1682 = vmatpush1.msra.mxu0 %v244
      %1683 = vmatprep.subr.mxu0 0.0
      %1684 = vmatpush2.msra.mxu0 0.0
      %1685 = vmatprep.subr.mxu0 0.0
      %1686 = vmatpush2.msra.mxu0 0.0
      %1687 = vmatprep.subr.mxu0 0.0
      %1688 = vmatpush2.msra.mxu0 0.0
      %1689 = vmatprep.subr.mxu0 0.0
      %1690 = vmatpush2.msra.mxu0 0.0
      %1691 = vmatprep.subr.mxu0 0.0
      %1692 = vmatpush2.msra.mxu0 0.0
      %1693 = vmatprep.subr.mxu0 0.0
      %1694 = vmatpush2.msra.mxu0 0.0
      %1695 = vmatprep.subr.mxu0 0.0
      %1696 = vmatpush2.msra.mxu0 0.0
      %1697 = vmatprep.subr.mxu0 0.0
      %1698 = vmatpush2.msra.mxu0 0.0
      %1699 = vmatprep.subr.mxu0 0.0
      %1700 = vmatpush2.msra.mxu0 0.0
      %1701 = vmatprep.subr.mxu0 0.0
      %1702 = vmatpush2.msra.mxu0 0.0
      %1703 = vmatprep.subr.mxu0 0.0
      %1704 = vmatpush2.msra.mxu0 0.0
      %1705 = vmatprep.subr.mxu0 0.0
      %1706 = vmatpush2.msra.mxu0 0.0
      %1707 = vmatprep.subr.mxu0 0.0
      %1708 = vmatpush2.msra.mxu0 0.0
      %1709 = vmatprep.subr.mxu0 0.0
      %1710 = vmatpush2.msra.mxu0 0.0
      %1711 = vmatprep.subr.mxu0 0.0
      %1712 = vmatpush2.msra.mxu0 0.0
      %1713 = vmatprep.subr.mxu0 0.0
      %1714 = vmatpush2.msra.mxu0 0.0
      %1715 = vmatprep.mubr.f32.mxu0 0.0
      %1716 = vmatmul.mubr.f32.gmra.mxu0 %v1649
      %v1717 = vpop.f32.mrf.mxu0
      %v1718 = vadd.f32 %v608, %v1717
      %v1719 = vpop.f32.mrf.mxu0
      %1720 = vdwg.mxu0
      %v1721 = vxor.u32 %v1718, 2147483648
      %v1722 = vmul.f32 %v1721, 1.442695
      %v1723 = vpow.pop %v1722
      %v1724 = vadd.f32 %v1723, 1.0
      %v1725 = vrcp.pop %v1724
      %v1726 = vmul.f32 1.0, %v1725
      %v1728 = vsel %vm423, %v1718, 0
      %1730 = vmatprep.subr.mxu0 0.0
      %1731 = vmatpush1.msra.mxu0 0.0
      %1732 = vmatprep.subr.mxu0 0.0
      %1733 = vmatpush1.msra.mxu0 0.0
      %1734 = vmatprep.subr.mxu0 0.0
      %1735 = vmatpush1.msra.mxu0 0.0
      %1736 = vmatprep.subr.mxu0 0.0
      %1737 = vmatpush1.msra.mxu0 0.0
      %1738 = vmatprep.subr.mxu0 0.0
      %1739 = vmatpush1.msra.mxu0 0.0
      %1740 = vmatprep.subr.mxu0 0.0
      %1741 = vmatpush1.msra.mxu0 0.0
      %1742 = vmatprep.subr.mxu0 0.0
      %1743 = vmatpush1.msra.mxu0 0.0
      %1744 = vmatprep.subr.mxu0 0.0
      %1745 = vmatpush1.msra.mxu0 0.0
      %1746 = vmatprep.subr.mxu0 0.0
      %1747 = vmatpush1.msra.mxu0 0.0
      %1748 = vmatprep.subr.mxu0 0.0
      %1749 = vmatpush1.msra.mxu0 0.0
      %1750 = vmatprep.subr.mxu0 0.0
      %1751 = vmatpush1.msra.mxu0 0.0
      %1752 = vmatprep.subr.mxu0 0.0
      %1753 = vmatpush1.msra.mxu0 0.0
      %1754 = vmatprep.subr.mxu0 0.0
      %1755 = vmatpush1.msra.mxu0 0.0
      %1756 = vmatprep.subr.mxu0 0.0
      %1757 = vmatpush1.msra.mxu0 0.0
      %1758 = vmatprep.subr.mxu0 0.0
      %1759 = vmatpush1.msra.mxu0 %v247
      %1760 = vmatprep.subr.mxu0 0.0
      %1761 = vmatpush1.msra.mxu0 %v246
      %1762 = vmatprep.subr.mxu0 0.0
      %1763 = vmatpush2.msra.mxu0 0.0
      %1764 = vmatprep.subr.mxu0 0.0
      %1765 = vmatpush2.msra.mxu0 0.0
      %1766 = vmatprep.subr.mxu0 0.0
      %1767 = vmatpush2.msra.mxu0 0.0
      %1768 = vmatprep.subr.mxu0 0.0
      %1769 = vmatpush2.msra.mxu0 0.0
      %1770 = vmatprep.subr.mxu0 0.0
      %1771 = vmatpush2.msra.mxu0 0.0
      %1772 = vmatprep.subr.mxu0 0.0
      %1773 = vmatpush2.msra.mxu0 0.0
      %1774 = vmatprep.subr.mxu0 0.0
      %1775 = vmatpush2.msra.mxu0 0.0
      %1776 = vmatprep.subr.mxu0 0.0
      %1777 = vmatpush2.msra.mxu0 0.0
      %1778 = vmatprep.subr.mxu0 0.0
      %1779 = vmatpush2.msra.mxu0 0.0
      %1780 = vmatprep.subr.mxu0 0.0
      %1781 = vmatpush2.msra.mxu0 0.0
      %1782 = vmatprep.subr.mxu0 0.0
      %1783 = vmatpush2.msra.mxu0 0.0
      %1784 = vmatprep.subr.mxu0 0.0
      %1785 = vmatpush2.msra.mxu0 0.0
      %1786 = vmatprep.subr.mxu0 0.0
      %1787 = vmatpush2.msra.mxu0 0.0
      %1788 = vmatprep.subr.mxu0 0.0
      %1789 = vmatpush2.msra.mxu0 0.0
      %1790 = vmatprep.subr.mxu0 0.0
      %1791 = vmatpush2.msra.mxu0 0.0
      %1792 = vmatprep.subr.mxu0 0.0
      %1793 = vmatpush2.msra.mxu0 0.0
      %1794 = vmatprep.mubr.f32.mxu0 0.0
      %1795 = vmatmul.mubr.f32.gmra.mxu0 %v1728
      %v1796 = vpop.f32.mrf.mxu0
      %v1797 = vadd.f32 %v694, %v1796
      %v1798 = vpop.f32.mrf.mxu0
      %1799 = vdwg.mxu0
      %v1800 = vsel %vm423, %v1797, -inf
      %1801 = vmax.xlane.f32.xlu0 %v1800
      %v1802 = vpop.xlane.xlu0 %1801
      %v1803 = vsub.f32 %v1797, %v1802
      %v1804 = vmul.f32 %v1803, 1.442695
      %v1805 = vpow.pop %v1804
      %v1806 = vsel %vm423, %v1805, 0.0
      %1807 = vadd.xlane.f32.xlu0 %v1806
      %v1808 = vpop.xlane.xlu0 %1807
      %v1809 = vrcp.pop %v1808
      %v1810 = vmul.f32 %v1805, %v1809
      %1811 = vrot.lane.b32.xlu0 %v1645, 120
      %v1812 = vpop.permute.xlu0 %1811
      %1815 = vrot.lane.b32.xlu0 %v1639, 16
      %v1816 = vpop.permute.xlu0 %1815
      %1819 = vrot.lane.b32.xlu0 %v1726, 16
      %v1820 = vpop.permute.xlu0 %1819
      %1823 = vrot.lane.b32.xlu0 %v1797, 17
      %v1824 = vpop.permute.xlu0 %1823
      %v1826 = vsel %vm423, %v1810, %v1812
      %v1827 = vsel %vm795, %v1826, %v1816
      %v1828 = vsel %vm345, %v1827, %v1820
      %v1829 = vsel %vm798, %v1828, %v1824
      %v1830 = vsel %vm800, %v1829, 0.0
      %s1831 = scalar_lea.vmem %s225, 16
      %1832 = vst [vmem:[%s1831] sm:$0xff] %v1830
      %s1833 = scalar_lea.vmem %s211, 24
      %v1834 = vld [vmem:[%s1833] sm:$0xff]
      %v1836 = vsel %vm262, %v1834, 0
      %1838 = vmatprep.subr.mxu0 0.0
      %1839 = vmatpush1.msra.mxu0 0.0
      %1840 = vmatprep.subr.mxu0 0.0
      %1841 = vmatpush1.msra.mxu0 0.0
      %1842 = vmatprep.subr.mxu0 0.0
      %1843 = vmatpush1.msra.mxu0 0.0
      %1844 = vmatprep.subr.mxu0 0.0
      %1845 = vmatpush1.msra.mxu0 0.0
      %1846 = vmatprep.subr.mxu0 0.0
      %1847 = vmatpush1.msra.mxu0 0.0
      %1848 = vmatprep.subr.mxu0 0.0
      %1849 = vmatpush1.msra.mxu0 0.0
      %1850 = vmatprep.subr.mxu0 0.0
      %1851 = vmatpush1.msra.mxu0 0.0
      %1852 = vmatprep.subr.mxu0 0.0
      %1853 = vmatpush1.msra.mxu0 0.0
      %1854 = vmatprep.subr.mxu0 0.0
      %1855 = vmatpush1.msra.mxu0 0.0
      %1856 = vmatprep.subr.mxu0 0.0
      %1857 = vmatpush1.msra.mxu0 0.0
      %1858 = vmatprep.subr.mxu0 0.0
      %1859 = vmatpush1.msra.mxu0 0.0
      %1860 = vmatprep.subr.mxu0 0.0
      %1861 = vmatpush1.msra.mxu0 0.0
      %1862 = vmatprep.subr.mxu0 0.0
      %1863 = vmatpush1.msra.mxu0 0.0
      %1864 = vmatprep.subr.mxu0 0.0
      %1865 = vmatpush1.msra.mxu0 %v268
      %1866 = vmatprep.subr.mxu0 0.0
      %1867 = vmatpush1.msra.mxu0 %v228
      %1868 = vmatprep.subr.mxu0 0.0
      %1869 = vmatpush1.msra.mxu0 %v227
      %1870 = vmatprep.subr.mxu0 0.0
      %1871 = vmatpush2.msra.mxu0 0.0
      %1872 = vmatprep.subr.mxu0 0.0
      %1873 = vmatpush2.msra.mxu0 0.0
      %1874 = vmatprep.subr.mxu0 0.0
      %1875 = vmatpush2.msra.mxu0 0.0
      %1876 = vmatprep.subr.mxu0 0.0
      %1877 = vmatpush2.msra.mxu0 0.0
      %1878 = vmatprep.subr.mxu0 0.0
      %1879 = vmatpush2.msra.mxu0 0.0
      %1880 = vmatprep.subr.mxu0 0.0
      %1881 = vmatpush2.msra.mxu0 0.0
      %1882 = vmatprep.subr.mxu0 0.0
      %1883 = vmatpush2.msra.mxu0 0.0
      %1884 = vmatprep.subr.mxu0 0.0
      %1885 = vmatpush2.msra.mxu0 0.0
      %1886 = vmatprep.subr.mxu0 0.0
      %1887 = vmatpush2.msra.mxu0 0.0
      %1888 = vmatprep.subr.mxu0 0.0
      %1889 = vmatpush2.msra.mxu0 0.0
      %1890 = vmatprep.subr.mxu0 0.0
      %1891 = vmatpush2.msra.mxu0 0.0
      %1892 = vmatprep.subr.mxu0 0.0
      %1893 = vmatpush2.msra.mxu0 0.0
      %1894 = vmatprep.subr.mxu0 0.0
      %1895 = vmatpush2.msra.mxu0 0.0
      %1896 = vmatprep.subr.mxu0 0.0
      %1897 = vmatpush2.msra.mxu0 0.0
      %1898 = vmatprep.subr.mxu0 0.0
      %1899 = vmatpush2.msra.mxu0 0.0
      %1900 = vmatprep.subr.mxu0 0.0
      %1901 = vmatpush2.msra.mxu0 0.0
      %1902 = vmatprep.mubr.f32.mxu0 0.0
      %1903 = vmatmul.mubr.f32.gmra.mxu0 %v1836
      %v1904 = vpop.f32.mrf.mxu0
      %v1905 = vadd.f32 %v261, %v1904
      %v1906 = vpop.f32.mrf.mxu0
      %1907 = vdwg.mxu0
      %v1908 = vmax.f32 %v1905, 0.0
      %v1910 = vsel %vm345, %v1908, 0
      %1912 = vmatprep.subr.mxu0 0.0
      %1913 = vmatpush1.msra.mxu0 0.0
      %1914 = vmatprep.subr.mxu0 0.0
      %1915 = vmatpush1.msra.mxu0 0.0
      %1916 = vmatprep.subr.mxu0 0.0
      %1917 = vmatpush1.msra.mxu0 0.0
      %1918 = vmatprep.subr.mxu0 0.0
      %1919 = vmatpush1.msra.mxu0 0.0
      %1920 = vmatprep.subr.mxu0 0.0
      %1921 = vmatpush1.msra.mxu0 0.0
      %1922 = vmatprep.subr.mxu0 0.0
      %1923 = vmatpush1.msra.mxu0 0.0
      %1924 = vmatprep.subr.mxu0 0.0
      %1925 = vmatpush1.msra.mxu0 0.0
      %1926 = vmatprep.subr.mxu0 0.0
      %1927 = vmatpush1.msra.mxu0 0.0
      %1928 = vmatprep.subr.mxu0 0.0
      %1929 = vmatpush1.msra.mxu0 0.0
      %1930 = vmatprep.subr.mxu0 0.0
      %1931 = vmatpush1.msra.mxu0 0.0
      %1932 = vmatprep.subr.mxu0 0.0
      %1933 = vmatpush1.msra.mxu0 0.0
      %1934 = vmatprep.subr.mxu0 0.0
      %1935 = vmatpush1.msra.mxu0 0.0
      %1936 = vmatprep.subr.mxu0 0.0
      %1937 = vmatpush1.msra.mxu0 %v234
      %1938 = vmatprep.subr.mxu0 0.0
      %1939 = vmatpush1.msra.mxu0 %v233
      %1940 = vmatprep.subr.mxu0 0.0
      %1941 = vmatpush1.msra.mxu0 %v232
      %1942 = vmatprep.subr.mxu0 0.0
      %1943 = vmatpush1.msra.mxu0 %v231
      %1944 = vmatprep.subr.mxu0 0.0
      %1945 = vmatpush2.msra.mxu0 0.0
      %1946 = vmatprep.subr.mxu0 0.0
      %1947 = vmatpush2.msra.mxu0 0.0
      %1948 = vmatprep.subr.mxu0 0.0
      %1949 = vmatpush2.msra.mxu0 0.0
      %1950 = vmatprep.subr.mxu0 0.0
      %1951 = vmatpush2.msra.mxu0 0.0
      %1952 = vmatprep.subr.mxu0 0.0
      %1953 = vmatpush2.msra.mxu0 0.0
      %1954 = vmatprep.subr.mxu0 0.0
      %1955 = vmatpush2.msra.mxu0 0.0
      %1956 = vmatprep.subr.mxu0 0.0
      %1957 = vmatpush2.msra.mxu0 0.0
      %1958 = vmatprep.subr.mxu0 0.0
      %1959 = vmatpush2.msra.mxu0 0.0
      %1960 = vmatprep.subr.mxu0 0.0
      %1961 = vmatpush2.msra.mxu0 0.0
      %1962 = vmatprep.subr.mxu0 0.0
      %1963 = vmatpush2.msra.mxu0 0.0
      %1964 = vmatprep.subr.mxu0 0.0
      %1965 = vmatpush2.msra.mxu0 0.0
      %1966 = vmatprep.subr.mxu0 0.0
      %1967 = vmatpush2.msra.mxu0 0.0
      %1968 = vmatprep.subr.mxu0 0.0
      %1969 = vmatpush2.msra.mxu0 0.0
      %1970 = vmatprep.subr.mxu0 0.0
      %1971 = vmatpush2.msra.mxu0 0.0
      %1972 = vmatprep.subr.mxu0 0.0
      %1973 = vmatpush2.msra.mxu0 0.0
      %1974 = vmatprep.subr.mxu0 0.0
      %1975 = vmatpush2.msra.mxu0 0.0
      %1976 = vmatprep.mubr.f32.mxu0 0.0
      %1977 = vmatmul.mubr.f32.gmra.mxu0 %v1910
      %v1978 = vpop.f32.mrf.mxu0
      %v1979 = vadd.f32 %v344, %v1978
      %v1980 = vpop.f32.mrf.mxu0
      %1981 = vdwg.mxu0
      %v1982 = vmax.f32 %v1979, 0.0
      %1984 = vrot.lane.b32.xlu0 %v1982, 96
      %v1985 = vpop.permute.xlu0 %1984
      %v1986 = vsel %vm423, %v1985, 0
      %1988 = vmatprep.subr.mxu0 0.0
      %1989 = vmatpush1.msra.mxu0 0.0
      %1990 = vmatprep.subr.mxu0 0.0
      %1991 = vmatpush1.msra.mxu0 0.0
      %1992 = vmatprep.subr.mxu0 0.0
      %1993 = vmatpush1.msra.mxu0 0.0
      %1994 = vmatprep.subr.mxu0 0.0
      %1995 = vmatpush1.msra.mxu0 0.0
      %1996 = vmatprep.subr.mxu0 0.0
      %1997 = vmatpush1.msra.mxu0 0.0
      %1998 = vmatprep.subr.mxu0 0.0
      %1999 = vmatpush1.msra.mxu0 0.0
      %2000 = vmatprep.subr.mxu0 0.0
      %2001 = vmatpush1.msra.mxu0 0.0
      %2002 = vmatprep.subr.mxu0 0.0
      %2003 = vmatpush1.msra.mxu0 0.0
      %2004 = vmatprep.subr.mxu0 0.0
      %2005 = vmatpush1.msra.mxu0 0.0
      %2006 = vmatprep.subr.mxu0 0.0
      %2007 = vmatpush1.msra.mxu0 0.0
      %2008 = vmatprep.subr.mxu0 0.0
      %2009 = vmatpush1.msra.mxu0 0.0
      %2010 = vmatprep.subr.mxu0 0.0
      %2011 = vmatpush1.msra.mxu0 0.0
      %2012 = vmatprep.subr.mxu0 0.0
      %2013 = vmatpush1.msra.mxu0 0.0
      %2014 = vmatprep.subr.mxu0 0.0
      %2015 = vmatpush1.msra.mxu0 0.0
      %2016 = vmatprep.subr.mxu0 0.0
      %2017 = vmatpush1.msra.mxu0 %v237
      %2018 = vmatprep.subr.mxu0 0.0
      %2019 = vmatpush1.msra.mxu0 %v236
      %2020 = vmatprep.subr.mxu0 0.0
      %2021 = vmatpush2.msra.mxu0 0.0
      %2022 = vmatprep.subr.mxu0 0.0
      %2023 = vmatpush2.msra.mxu0 0.0
      %2024 = vmatprep.subr.mxu0 0.0
      %2025 = vmatpush2.msra.mxu0 0.0
      %2026 = vmatprep.subr.mxu0 0.0
      %2027 = vmatpush2.msra.mxu0 0.0
      %2028 = vmatprep.subr.mxu0 0.0
      %2029 = vmatpush2.msra.mxu0 0.0
      %2030 = vmatprep.subr.mxu0 0.0
      %2031 = vmatpush2.msra.mxu0 0.0
      %2032 = vmatprep.subr.mxu0 0.0
      %2033 = vmatpush2.msra.mxu0 0.0
      %2034 = vmatprep.subr.mxu0 0.0
      %2035 = vmatpush2.msra.mxu0 0.0
      %2036 = vmatprep.subr.mxu0 0.0
      %2037 = vmatpush2.msra.mxu0 0.0
      %2038 = vmatprep.subr.mxu0 0.0
      %2039 = vmatpush2.msra.mxu0 0.0
      %2040 = vmatprep.subr.mxu0 0.0
      %2041 = vmatpush2.msra.mxu0 0.0
      %2042 = vmatprep.subr.mxu0 0.0
      %2043 = vmatpush2.msra.mxu0 0.0
      %2044 = vmatprep.subr.mxu0 0.0
      %2045 = vmatpush2.msra.mxu0 0.0
      %2046 = vmatprep.subr.mxu0 0.0
      %2047 = vmatpush2.msra.mxu0 0.0
      %2048 = vmatprep.subr.mxu0 0.0
      %2049 = vmatpush2.msra.mxu0 0.0
      %2050 = vmatprep.subr.mxu0 0.0
      %2051 = vmatpush2.msra.mxu0 0.0
      %2052 = vmatprep.mubr.f32.mxu0 0.0
      %2053 = vmatmul.mubr.f32.gmra.mxu0 %v1986
      %v2054 = vpop.f32.mrf.mxu0
      %v2055 = vadd.f32 0.0, %v2054
      %v2056 = vpop.f32.mrf.mxu0
      %2057 = vdwg.mxu0
      %v2058 = vadd.f32 %v1979, %v2055
      %v2059 = vmax.f32 %v2058, 0.0
      %2060 = vrot.lane.b32.xlu0 %v1645, 8
      %v2061 = vpop.permute.xlu0 %2060
      %v2063 = vsel %vm345, %v2059, %v2061
      %v2065 = vsel %vm507, %v2063, 0
      %2067 = vmatprep.subr.mxu0 0.0
      %2068 = vmatpush1.msra.mxu0 0.0
      %2069 = vmatprep.subr.mxu0 0.0
      %2070 = vmatpush1.msra.mxu0 0.0
      %2071 = vmatprep.subr.mxu0 0.0
      %2072 = vmatpush1.msra.mxu0 0.0
      %2073 = vmatprep.subr.mxu0 0.0
      %2074 = vmatpush1.msra.mxu0 0.0
      %2075 = vmatprep.subr.mxu0 0.0
      %2076 = vmatpush1.msra.mxu0 0.0
      %2077 = vmatprep.subr.mxu0 0.0
      %2078 = vmatpush1.msra.mxu0 0.0
      %2079 = vmatprep.subr.mxu0 0.0
      %2080 = vmatpush1.msra.mxu0 0.0
      %2081 = vmatprep.subr.mxu0 0.0
      %2082 = vmatpush1.msra.mxu0 0.0
      %2083 = vmatprep.subr.mxu0 0.0
      %2084 = vmatpush1.msra.mxu0 0.0
      %2085 = vmatprep.subr.mxu0 0.0
      %2086 = vmatpush1.msra.mxu0 0.0
      %2087 = vmatprep.subr.mxu0 0.0
      %2088 = vmatpush1.msra.mxu0 0.0
      %2089 = vmatprep.subr.mxu0 0.0
      %2090 = vmatpush1.msra.mxu0 %v242
      %2091 = vmatprep.subr.mxu0 0.0
      %2092 = vmatpush1.msra.mxu0 %v241
      %2093 = vmatprep.subr.mxu0 0.0
      %2094 = vmatpush1.msra.mxu0 %v240
      %2095 = vmatprep.subr.mxu0 0.0
      %2096 = vmatpush1.msra.mxu0 %v239
      %2097 = vmatprep.subr.mxu0 0.0
      %2098 = vmatpush1.msra.mxu0 %v238
      %2099 = vmatprep.subr.mxu0 0.0
      %2100 = vmatpush2.msra.mxu0 0.0
      %2101 = vmatprep.subr.mxu0 0.0
      %2102 = vmatpush2.msra.mxu0 0.0
      %2103 = vmatprep.subr.mxu0 0.0
      %2104 = vmatpush2.msra.mxu0 0.0
      %2105 = vmatprep.subr.mxu0 0.0
      %2106 = vmatpush2.msra.mxu0 0.0
      %2107 = vmatprep.subr.mxu0 0.0
      %2108 = vmatpush2.msra.mxu0 0.0
      %2109 = vmatprep.subr.mxu0 0.0
      %2110 = vmatpush2.msra.mxu0 0.0
      %2111 = vmatprep.subr.mxu0 0.0
      %2112 = vmatpush2.msra.mxu0 0.0
      %2113 = vmatprep.subr.mxu0 0.0
      %2114 = vmatpush2.msra.mxu0 0.0
      %2115 = vmatprep.subr.mxu0 0.0
      %2116 = vmatpush2.msra.mxu0 0.0
      %2117 = vmatprep.subr.mxu0 0.0
      %2118 = vmatpush2.msra.mxu0 0.0
      %2119 = vmatprep.subr.mxu0 0.0
      %2120 = vmatpush2.msra.mxu0 0.0
      %2121 = vmatprep.subr.mxu0 0.0
      %2122 = vmatpush2.msra.mxu0 0.0
      %2123 = vmatprep.subr.mxu0 0.0
      %2124 = vmatpush2.msra.mxu0 0.0
      %2125 = vmatprep.subr.mxu0 0.0
      %2126 = vmatpush2.msra.mxu0 0.0
      %2127 = vmatprep.subr.mxu0 0.0
      %2128 = vmatpush2.msra.mxu0 0.0
      %2129 = vmatprep.subr.mxu0 0.0
      %2130 = vmatpush2.msra.mxu0 0.0
      %2131 = vmatprep.mubr.f32.mxu0 0.0
      %2132 = vmatmul.mubr.f32.gmra.mxu0 %v2065
      %v2133 = vpop.f32.mrf.mxu0
      %v2134 = vadd.f32 %v506, %v2133
      %v2135 = vpop.f32.mrf.mxu0
      %2136 = vdwg.mxu0
      %v2137 = vxor.u32 %v2134, 2147483648
      %v2138 = vmul.f32 %v2137, 1.442695
      %v2139 = vpow.pop %v2138
      %v2140 = vadd.f32 %v2139, 1.0
      %v2141 = vrcp.pop %v2140
      %v2142 = vmul.f32 1.0, %v2141
      %v2143 = vtanh.pop %v2134
      %v2144 = vmul.f32 %v2142, %v1639
      %2146 = vrot.lane.b32.xlu0 %v2143, 112
      %v2147 = vpop.permute.xlu0 %2146
      %v2149 = vmul.f32 %v2142, %v2147
      %2151 = vrot.lane.b32.xlu0 %v2149, 8
      %v2152 = vpop.permute.xlu0 %2151
      %v2154 = vadd.f32 %v2144, %v2152
      %v2155 = vtanh.pop %v2154
      %2157 = vrot.lane.b32.xlu0 %v2155, 16
      %v2158 = vpop.permute.xlu0 %2157
      %v2160 = vmul.f32 %v2142, %v2158
      %2162 = vrot.lane.b32.xlu0 %v2160, 104
      %v2163 = vpop.permute.xlu0 %2162
      %v2164 = vsel %vm612, %v2163, 0
      %2166 = vmatprep.subr.mxu0 0.0
      %2167 = vmatpush1.msra.mxu0 0.0
      %2168 = vmatprep.subr.mxu0 0.0
      %2169 = vmatpush1.msra.mxu0 0.0
      %2170 = vmatprep.subr.mxu0 0.0
      %2171 = vmatpush1.msra.mxu0 0.0
      %2172 = vmatprep.subr.mxu0 0.0
      %2173 = vmatpush1.msra.mxu0 0.0
      %2174 = vmatprep.subr.mxu0 0.0
      %2175 = vmatpush1.msra.mxu0 0.0
      %2176 = vmatprep.subr.mxu0 0.0
      %2177 = vmatpush1.msra.mxu0 0.0
      %2178 = vmatprep.subr.mxu0 0.0
      %2179 = vmatpush1.msra.mxu0 0.0
      %2180 = vmatprep.subr.mxu0 0.0
      %2181 = vmatpush1.msra.mxu0 0.0
      %2182 = vmatprep.subr.mxu0 0.0
      %2183 = vmatpush1.msra.mxu0 0.0
      %2184 = vmatprep.subr.mxu0 0.0
      %2185 = vmatpush1.msra.mxu0 0.0
      %2186 = vmatprep.subr.mxu0 0.0
      %2187 = vmatpush1.msra.mxu0 0.0
      %2188 = vmatprep.subr.mxu0 0.0
      %2189 = vmatpush1.msra.mxu0 0.0
      %2190 = vmatprep.subr.mxu0 0.0
      %2191 = vmatpush1.msra.mxu0 0.0
      %2192 = vmatprep.subr.mxu0 0.0
      %2193 = vmatpush1.msra.mxu0 0.0
      %2194 = vmatprep.subr.mxu0 0.0
      %2195 = vmatpush1.msra.mxu0 0.0
      %2196 = vmatprep.subr.mxu0 0.0
      %2197 = vmatpush1.msra.mxu0 %v244
      %2198 = vmatprep.subr.mxu0 0.0
      %2199 = vmatpush2.msra.mxu0 0.0
      %2200 = vmatprep.subr.mxu0 0.0
      %2201 = vmatpush2.msra.mxu0 0.0
      %2202 = vmatprep.subr.mxu0 0.0
      %2203 = vmatpush2.msra.mxu0 0.0
      %2204 = vmatprep.subr.mxu0 0.0
      %2205 = vmatpush2.msra.mxu0 0.0
      %2206 = vmatprep.subr.mxu0 0.0
      %2207 = vmatpush2.msra.mxu0 0.0
      %2208 = vmatprep.subr.mxu0 0.0
      %2209 = vmatpush2.msra.mxu0 0.0
      %2210 = vmatprep.subr.mxu0 0.0
      %2211 = vmatpush2.msra.mxu0 0.0
      %2212 = vmatprep.subr.mxu0 0.0
      %2213 = vmatpush2.msra.mxu0 0.0
      %2214 = vmatprep.subr.mxu0 0.0
      %2215 = vmatpush2.msra.mxu0 0.0
      %2216 = vmatprep.subr.mxu0 0.0
      %2217 = vmatpush2.msra.mxu0 0.0
      %2218 = vmatprep.subr.mxu0 0.0
      %2219 = vmatpush2.msra.mxu0 0.0
      %2220 = vmatprep.subr.mxu0 0.0
      %2221 = vmatpush2.msra.mxu0 0.0
      %2222 = vmatprep.subr.mxu0 0.0
      %2223 = vmatpush2.msra.mxu0 0.0
      %2224 = vmatprep.subr.mxu0 0.0
      %2225 = vmatpush2.msra.mxu0 0.0
      %2226 = vmatprep.subr.mxu0 0.0
      %2227 = vmatpush2.msra.mxu0 0.0
      %2228 = vmatprep.subr.mxu0 0.0
      %2229 = vmatpush2.msra.mxu0 0.0
      %2230 = vmatprep.mubr.f32.mxu0 0.0
      %2231 = vmatmul.mubr.f32.gmra.mxu0 %v2164
      %v2232 = vpop.f32.mrf.mxu0
      %v2233 = vadd.f32 %v608, %v2232
      %v2234 = vpop.f32.mrf.mxu0
      %2235 = vdwg.mxu0
      %v2236 = vxor.u32 %v2233, 2147483648
      %v2237 = vmul.f32 %v2236, 1.442695
      %v2238 = vpow.pop %v2237
      %v2239 = vadd.f32 %v2238, 1.0
      %v2240 = vrcp.pop %v2239
      %v2241 = vmul.f32 1.0, %v2240
      %v2243 = vsel %vm423, %v2233, 0
      %2245 = vmatprep.subr.mxu0 0.0
      %2246 = vmatpush1.msra.mxu0 0.0
      %2247 = vmatprep.subr.mxu0 0.0
      %2248 = vmatpush1.msra.mxu0 0.0
      %2249 = vmatprep.subr.mxu0 0.0
      %2250 = vmatpush1.msra.mxu0 0.0
      %2251 = vmatprep.subr.mxu0 0.0
      %2252 = vmatpush1.msra.mxu0 0.0
      %2253 = vmatprep.subr.mxu0 0.0
      %2254 = vmatpush1.msra.mxu0 0.0
      %2255 = vmatprep.subr.mxu0 0.0
      %2256 = vmatpush1.msra.mxu0 0.0
      %2257 = vmatprep.subr.mxu0 0.0
      %2258 = vmatpush1.msra.mxu0 0.0
      %2259 = vmatprep.subr.mxu0 0.0
      %2260 = vmatpush1.msra.mxu0 0.0
      %2261 = vmatprep.subr.mxu0 0.0
      %2262 = vmatpush1.msra.mxu0 0.0
      %2263 = vmatprep.subr.mxu0 0.0
      %2264 = vmatpush1.msra.mxu0 0.0
      %2265 = vmatprep.subr.mxu0 0.0
      %2266 = vmatpush1.msra.mxu0 0.0
      %2267 = vmatprep.subr.mxu0 0.0
      %2268 = vmatpush1.msra.mxu0 0.0
      %2269 = vmatprep.subr.mxu0 0.0
      %2270 = vmatpush1.msra.mxu0 0.0
      %2271 = vmatprep.subr.mxu0 0.0
      %2272 = vmatpush1.msra.mxu0 0.0
      %2273 = vmatprep.subr.mxu0 0.0
      %2274 = vmatpush1.msra.mxu0 %v247
      %2275 = vmatprep.subr.mxu0 0.0
      %2276 = vmatpush1.msra.mxu0 %v246
      %2277 = vmatprep.subr.mxu0 0.0
      %2278 = vmatpush2.msra.mxu0 0.0
      %2279 = vmatprep.subr.mxu0 0.0
      %2280 = vmatpush2.msra.mxu0 0.0
      %2281 = vmatprep.subr.mxu0 0.0
      %2282 = vmatpush2.msra.mxu0 0.0
      %2283 = vmatprep.subr.mxu0 0.0
      %2284 = vmatpush2.msra.mxu0 0.0
      %2285 = vmatprep.subr.mxu0 0.0
      %2286 = vmatpush2.msra.mxu0 0.0
      %2287 = vmatprep.subr.mxu0 0.0
      %2288 = vmatpush2.msra.mxu0 0.0
      %2289 = vmatprep.subr.mxu0 0.0
      %2290 = vmatpush2.msra.mxu0 0.0
      %2291 = vmatprep.subr.mxu0 0.0
      %2292 = vmatpush2.msra.mxu0 0.0
      %2293 = vmatprep.subr.mxu0 0.0
      %2294 = vmatpush2.msra.mxu0 0.0
      %2295 = vmatprep.subr.mxu0 0.0
      %2296 = vmatpush2.msra.mxu0 0.0
      %2297 = vmatprep.subr.mxu0 0.0
      %2298 = vmatpush2.msra.mxu0 0.0
      %2299 = vmatprep.subr.mxu0 0.0
      %2300 = vmatpush2.msra.mxu0 0.0
      %2301 = vmatprep.subr.mxu0 0.0
      %2302 = vmatpush2.msra.mxu0 0.0
      %2303 = vmatprep.subr.mxu0 0.0
      %2304 = vmatpush2.msra.mxu0 0.0
      %2305 = vmatprep.subr.mxu0 0.0
      %2306 = vmatpush2.msra.mxu0 0.0
      %2307 = vmatprep.subr.mxu0 0.0
      %2308 = vmatpush2.msra.mxu0 0.0
      %2309 = vmatprep.mubr.f32.mxu0 0.0
      %2310 = vmatmul.mubr.f32.gmra.mxu0 %v2243
      %v2311 = vpop.f32.mrf.mxu0
      %v2312 = vadd.f32 %v694, %v2311
      %v2313 = vpop.f32.mrf.mxu0
      %2314 = vdwg.mxu0
      %v2315 = vsel %vm423, %v2312, -inf
      %2316 = vmax.xlane.f32.xlu0 %v2315
      %v2317 = vpop.xlane.xlu0 %2316
      %v2318 = vsub.f32 %v2312, %v2317
      %v2319 = vmul.f32 %v2318, 1.442695
      %v2320 = vpow.pop %v2319
      %v2321 = vsel %vm423, %v2320, 0.0
      %2322 = vadd.xlane.f32.xlu0 %v2321
      %v2323 = vpop.xlane.xlu0 %2322
      %v2324 = vrcp.pop %v2323
      %v2325 = vmul.f32 %v2320, %v2324
      %2326 = vrot.lane.b32.xlu0 %v2160, 120
      %v2327 = vpop.permute.xlu0 %2326
      %2330 = vrot.lane.b32.xlu0 %v2154, 16
      %v2331 = vpop.permute.xlu0 %2330
      %2334 = vrot.lane.b32.xlu0 %v2241, 16
      %v2335 = vpop.permute.xlu0 %2334
      %2338 = vrot.lane.b32.xlu0 %v2312, 17
      %v2339 = vpop.permute.xlu0 %2338
      %v2341 = vsel %vm423, %v2325, %v2327
      %v2342 = vsel %vm795, %v2341, %v2331
      %v2343 = vsel %vm345, %v2342, %v2335
      %v2344 = vsel %vm798, %v2343, %v2339
      %v2345 = vsel %vm800, %v2344, 0.0
      %s2346 = scalar_lea.vmem %s225, 24
      %2347 = vst [vmem:[%s2346] sm:$0xff] %v2345
      %s2348 = scalar_lea.vmem %s211, 32
      %v2349 = vld [vmem:[%s2348] sm:$0xff]
      %v2351 = vsel %vm262, %v2349, 0
      %2353 = vmatprep.subr.mxu0 0.0
      %2354 = vmatpush1.msra.mxu0 0.0
      %2355 = vmatprep.subr.mxu0 0.0
      %2356 = vmatpush1.msra.mxu0 0.0
      %2357 = vmatprep.subr.mxu0 0.0
      %2358 = vmatpush1.msra.mxu0 0.0
      %2359 = vmatprep.subr.mxu0 0.0
      %2360 = vmatpush1.msra.mxu0 0.0
      %2361 = vmatprep.subr.mxu0 0.0
      %2362 = vmatpush1.msra.mxu0 0.0
      %2363 = vmatprep.subr.mxu0 0.0
      %2364 = vmatpush1.msra.mxu0 0.0
      %2365 = vmatprep.subr.mxu0 0.0
      %2366 = vmatpush1.msra.mxu0 0.0
      %2367 = vmatprep.subr.mxu0 0.0
      %2368 = vmatpush1.msra.mxu0 0.0
      %2369 = vmatprep.subr.mxu0 0.0
      %2370 = vmatpush1.msra.mxu0 0.0
      %2371 = vmatprep.subr.mxu0 0.0
      %2372 = vmatpush1.msra.mxu0 0.0
      %2373 = vmatprep.subr.mxu0 0.0
      %2374 = vmatpush1.msra.mxu0 0.0
      %2375 = vmatprep.subr.mxu0 0.0
      %2376 = vmatpush1.msra.mxu0 0.0
      %2377 = vmatprep.subr.mxu0 0.0
      %2378 = vmatpush1.msra.mxu0 0.0
      %2379 = vmatprep.subr.mxu0 0.0
      %2380 = vmatpush1.msra.mxu0 %v268
      %2381 = vmatprep.subr.mxu0 0.0
      %2382 = vmatpush1.msra.mxu0 %v228
      %2383 = vmatprep.subr.mxu0 0.0
      %2384 = vmatpush1.msra.mxu0 %v227
      %2385 = vmatprep.subr.mxu0 0.0
      %2386 = vmatpush2.msra.mxu0 0.0
      %2387 = vmatprep.subr.mxu0 0.0
      %2388 = vmatpush2.msra.mxu0 0.0
      %2389 = vmatprep.subr.mxu0 0.0
      %2390 = vmatpush2.msra.mxu0 0.0
      %2391 = vmatprep.subr.mxu0 0.0
      %2392 = vmatpush2.msra.mxu0 0.0
      %2393 = vmatprep.subr.mxu0 0.0
      %2394 = vmatpush2.msra.mxu0 0.0
      %2395 = vmatprep.subr.mxu0 0.0
      %2396 = vmatpush2.msra.mxu0 0.0
      %2397 = vmatprep.subr.mxu0 0.0
      %2398 = vmatpush2.msra.mxu0 0.0
      %2399 = vmatprep.subr.mxu0 0.0
      %2400 = vmatpush2.msra.mxu0 0.0
      %2401 = vmatprep.subr.mxu0 0.0
      %2402 = vmatpush2.msra.mxu0 0.0
      %2403 = vmatprep.subr.mxu0 0.0
      %2404 = vmatpush2.msra.mxu0 0.0
      %2405 = vmatprep.subr.mxu0 0.0
      %2406 = vmatpush2.msra.mxu0 0.0
      %2407 = vmatprep.subr.mxu0 0.0
      %2408 = vmatpush2.msra.mxu0 0.0
      %2409 = vmatprep.subr.mxu0 0.0
      %2410 = vmatpush2.msra.mxu0 0.0
      %2411 = vmatprep.subr.mxu0 0.0
      %2412 = vmatpush2.msra.mxu0 0.0
      %2413 = vmatprep.subr.mxu0 0.0
      %2414 = vmatpush2.msra.mxu0 0.0
      %2415 = vmatprep.subr.mxu0 0.0
      %2416 = vmatpush2.msra.mxu0 0.0
      %2417 = vmatprep.mubr.f32.mxu0 0.0
      %2418 = vmatmul.mubr.f32.gmra.mxu0 %v2351
      %v2419 = vpop.f32.mrf.mxu0
      %v2420 = vadd.f32 %v261, %v2419
      %v2421 = vpop.f32.mrf.mxu0
      %2422 = vdwg.mxu0
      %v2423 = vmax.f32 %v2420, 0.0
      %v2425 = vsel %vm345, %v2423, 0
      %2427 = vmatprep.subr.mxu0 0.0
      %2428 = vmatpush1.msra.mxu0 0.0
      %2429 = vmatprep.subr.mxu0 0.0
      %2430 = vmatpush1.msra.mxu0 0.0
      %2431 = vmatprep.subr.mxu0 0.0
      %2432 = vmatpush1.msra.mxu0 0.0
      %2433 = vmatprep.subr.mxu0 0.0
      %2434 = vmatpush1.msra.mxu0 0.0
      %2435 = vmatprep.subr.mxu0 0.0
      %2436 = vmatpush1.msra.mxu0 0.0
      %2437 = vmatprep.subr.mxu0 0.0
      %2438 = vmatpush1.msra.mxu0 0.0
      %2439 = vmatprep.subr.mxu0 0.0
      %2440 = vmatpush1.msra.mxu0 0.0
      %2441 = vmatprep.subr.mxu0 0.0
      %2442 = vmatpush1.msra.mxu0 0.0
      %2443 = vmatprep.subr.mxu0 0.0
      %2444 = vmatpush1.msra.mxu0 0.0
      %2445 = vmatprep.subr.mxu0 0.0
      %2446 = vmatpush1.msra.mxu0 0.0
      %2447 = vmatprep.subr.mxu0 0.0
      %2448 = vmatpush1.msra.mxu0 0.0
      %2449 = vmatprep.subr.mxu0 0.0
      %2450 = vmatpush1.msra.mxu0 0.0
      %2451 = vmatprep.subr.mxu0 0.0
      %2452 = vmatpush1.msra.mxu0 %v234
      %2453 = vmatprep.subr.mxu0 0.0
      %2454 = vmatpush1.msra.mxu0 %v233
      %2455 = vmatprep.subr.mxu0 0.0
      %2456 = vmatpush1.msra.mxu0 %v232
      %2457 = vmatprep.subr.mxu0 0.0
      %2458 = vmatpush1.msra.mxu0 %v231
      %2459 = vmatprep.subr.mxu0 0.0
      %2460 = vmatpush2.msra.mxu0 0.0
      %2461 = vmatprep.subr.mxu0 0.0
      %2462 = vmatpush2.msra.mxu0 0.0
      %2463 = vmatprep.subr.mxu0 0.0
      %2464 = vmatpush2.msra.mxu0 0.0
      %2465 = vmatprep.subr.mxu0 0.0
      %2466 = vmatpush2.msra.mxu0 0.0
      %2467 = vmatprep.subr.mxu0 0.0
      %2468 = vmatpush2.msra.mxu0 0.0
      %2469 = vmatprep.subr.mxu0 0.0
      %2470 = vmatpush2.msra.mxu0 0.0
      %2471 = vmatprep.subr.mxu0 0.0
      %2472 = vmatpush2.msra.mxu0 0.0
      %2473 = vmatprep.subr.mxu0 0.0
      %2474 = vmatpush2.msra.mxu0 0.0
      %2475 = vmatprep.subr.mxu0 0.0
      %2476 = vmatpush2.msra.mxu0 0.0
      %2477 = vmatprep.subr.mxu0 0.0
      %2478 = vmatpush2.msra.mxu0 0.0
      %2479 = vmatprep.subr.mxu0 0.0
      %2480 = vmatpush2.msra.mxu0 0.0
      %2481 = vmatprep.subr.mxu0 0.0
      %2482 = vmatpush2.msra.mxu0 0.0
      %2483 = vmatprep.subr.mxu0 0.0
      %2484 = vmatpush2.msra.mxu0 0.0
      %2485 = vmatprep.subr.mxu0 0.0
      %2486 = vmatpush2.msra.mxu0 0.0
      %2487 = vmatprep.subr.mxu0 0.0
      %2488 = vmatpush2.msra.mxu0 0.0
      %2489 = vmatprep.subr.mxu0 0.0
      %2490 = vmatpush2.msra.mxu0 0.0
      %2491 = vmatprep.mubr.f32.mxu0 0.0
      %2492 = vmatmul.mubr.f32.gmra.mxu0 %v2425
      %v2493 = vpop.f32.mrf.mxu0
      %v2494 = vadd.f32 %v344, %v2493
      %v2495 = vpop.f32.mrf.mxu0
      %2496 = vdwg.mxu0
      %v2497 = vmax.f32 %v2494, 0.0
      %2499 = vrot.lane.b32.xlu0 %v2497, 96
      %v2500 = vpop.permute.xlu0 %2499
      %v2501 = vsel %vm423, %v2500, 0
      %2503 = vmatprep.subr.mxu0 0.0
      %2504 = vmatpush1.msra.mxu0 0.0
      %2505 = vmatprep.subr.mxu0 0.0
      %2506 = vmatpush1.msra.mxu0 0.0
      %2507 = vmatprep.subr.mxu0 0.0
      %2508 = vmatpush1.msra.mxu0 0.0
      %2509 = vmatprep.subr.mxu0 0.0
      %2510 = vmatpush1.msra.mxu0 0.0
      %2511 = vmatprep.subr.mxu0 0.0
      %2512 = vmatpush1.msra.mxu0 0.0
      %2513 = vmatprep.subr.mxu0 0.0
      %2514 = vmatpush1.msra.mxu0 0.0
      %2515 = vmatprep.subr.mxu0 0.0
      %2516 = vmatpush1.msra.mxu0 0.0
      %2517 = vmatprep.subr.mxu0 0.0
      %2518 = vmatpush1.msra.mxu0 0.0
      %2519 = vmatprep.subr.mxu0 0.0
      %2520 = vmatpush1.msra.mxu0 0.0
      %2521 = vmatprep.subr.mxu0 0.0
      %2522 = vmatpush1.msra.mxu0 0.0
      %2523 = vmatprep.subr.mxu0 0.0
      %2524 = vmatpush1.msra.mxu0 0.0
      %2525 = vmatprep.subr.mxu0 0.0
      %2526 = vmatpush1.msra.mxu0 0.0
      %2527 = vmatprep.subr.mxu0 0.0
      %2528 = vmatpush1.msra.mxu0 0.0
      %2529 = vmatprep.subr.mxu0 0.0
      %2530 = vmatpush1.msra.mxu0 0.0
      %2531 = vmatprep.subr.mxu0 0.0
      %2532 = vmatpush1.msra.mxu0 %v237
      %2533 = vmatprep.subr.mxu0 0.0
      %2534 = vmatpush1.msra.mxu0 %v236
      %2535 = vmatprep.subr.mxu0 0.0
      %2536 = vmatpush2.msra.mxu0 0.0
      %2537 = vmatprep.subr.mxu0 0.0
      %2538 = vmatpush2.msra.mxu0 0.0
      %2539 = vmatprep.subr.mxu0 0.0
      %2540 = vmatpush2.msra.mxu0 0.0
      %2541 = vmatprep.subr.mxu0 0.0
      %2542 = vmatpush2.msra.mxu0 0.0
      %2543 = vmatprep.subr.mxu0 0.0
      %2544 = vmatpush2.msra.mxu0 0.0
      %2545 = vmatprep.subr.mxu0 0.0
      %2546 = vmatpush2.msra.mxu0 0.0
      %2547 = vmatprep.subr.mxu0 0.0
      %2548 = vmatpush2.msra.mxu0 0.0
      %2549 = vmatprep.subr.mxu0 0.0
      %2550 = vmatpush2.msra.mxu0 0.0
      %2551 = vmatprep.subr.mxu0 0.0
      %2552 = vmatpush2.msra.mxu0 0.0
      %2553 = vmatprep.subr.mxu0 0.0
      %2554 = vmatpush2.msra.mxu0 0.0
      %2555 = vmatprep.subr.mxu0 0.0
      %2556 = vmatpush2.msra.mxu0 0.0
      %2557 = vmatprep.subr.mxu0 0.0
      %2558 = vmatpush2.msra.mxu0 0.0
      %2559 = vmatprep.subr.mxu0 0.0
      %2560 = vmatpush2.msra.mxu0 0.0
      %2561 = vmatprep.subr.mxu0 0.0
      %2562 = vmatpush2.msra.mxu0 0.0
      %2563 = vmatprep.subr.mxu0 0.0
      %2564 = vmatpush2.msra.mxu0 0.0
      %2565 = vmatprep.subr.mxu0 0.0
      %2566 = vmatpush2.msra.mxu0 0.0
      %2567 = vmatprep.mubr.f32.mxu0 0.0
      %2568 = vmatmul.mubr.f32.gmra.mxu0 %v2501
      %v2569 = vpop.f32.mrf.mxu0
      %v2570 = vadd.f32 0.0, %v2569
      %v2571 = vpop.f32.mrf.mxu0
      %2572 = vdwg.mxu0
      %v2573 = vadd.f32 %v2494, %v2570
      %v2574 = vmax.f32 %v2573, 0.0
      %2575 = vrot.lane.b32.xlu0 %v2160, 8
      %v2576 = vpop.permute.xlu0 %2575
      %v2578 = vsel %vm345, %v2574, %v2576
      %v2580 = vsel %vm507, %v2578, 0
      %2582 = vmatprep.subr.mxu0 0.0
      %2583 = vmatpush1.msra.mxu0 0.0
      %2584 = vmatprep.subr.mxu0 0.0
      %2585 = vmatpush1.msra.mxu0 0.0
      %2586 = vmatprep.subr.mxu0 0.0
      %2587 = vmatpush1.msra.mxu0 0.0
      %2588 = vmatprep.subr.mxu0 0.0
      %2589 = vmatpush1.msra.mxu0 0.0
      %2590 = vmatprep.subr.mxu0 0.0
      %2591 = vmatpush1.msra.mxu0 0.0
      %2592 = vmatprep.subr.mxu0 0.0
      %2593 = vmatpush1.msra.mxu0 0.0
      %2594 = vmatprep.subr.mxu0 0.0
      %2595 = vmatpush1.msra.mxu0 0.0
      %2596 = vmatprep.subr.mxu0 0.0
      %2597 = vmatpush1.msra.mxu0 0.0
      %2598 = vmatprep.subr.mxu0 0.0
      %2599 = vmatpush1.msra.mxu0 0.0
      %2600 = vmatprep.subr.mxu0 0.0
      %2601 = vmatpush1.msra.mxu0 0.0
      %2602 = vmatprep.subr.mxu0 0.0
      %2603 = vmatpush1.msra.mxu0 0.0
      %2604 = vmatprep.subr.mxu0 0.0
      %2605 = vmatpush1.msra.mxu0 %v242
      %2606 = vmatprep.subr.mxu0 0.0
      %2607 = vmatpush1.msra.mxu0 %v241
      %2608 = vmatprep.subr.mxu0 0.0
      %2609 = vmatpush1.msra.mxu0 %v240
      %2610 = vmatprep.subr.mxu0 0.0
      %2611 = vmatpush1.msra.mxu0 %v239
      %2612 = vmatprep.subr.mxu0 0.0
      %2613 = vmatpush1.msra.mxu0 %v238
      %2614 = vmatprep.subr.mxu0 0.0
      %2615 = vmatpush2.msra.mxu0 0.0
      %2616 = vmatprep.subr.mxu0 0.0
      %2617 = vmatpush2.msra.mxu0 0.0
      %2618 = vmatprep.subr.mxu0 0.0
      %2619 = vmatpush2.msra.mxu0 0.0
      %2620 = vmatprep.subr.mxu0 0.0
      %2621 = vmatpush2.msra.mxu0 0.0
      %2622 = vmatprep.subr.mxu0 0.0
      %2623 = vmatpush2.msra.mxu0 0.0
      %2624 = vmatprep.subr.mxu0 0.0
      %2625 = vmatpush2.msra.mxu0 0.0
      %2626 = vmatprep.subr.mxu0 0.0
      %2627 = vmatpush2.msra.mxu0 0.0
      %2628 = vmatprep.subr.mxu0 0.0
      %2629 = vmatpush2.msra.mxu0 0.0
      %2630 = vmatprep.subr.mxu0 0.0
      %2631 = vmatpush2.msra.mxu0 0.0
      %2632 = vmatprep.subr.mxu0 0.0
      %2633 = vmatpush2.msra.mxu0 0.0
      %2634 = vmatprep.subr.mxu0 0.0
      %2635 = vmatpush2.msra.mxu0 0.0
      %2636 = vmatprep.subr.mxu0 0.0
      %2637 = vmatpush2.msra.mxu0 0.0
      %2638 = vmatprep.subr.mxu0 0.0
      %2639 = vmatpush2.msra.mxu0 0.0
      %2640 = vmatprep.subr.mxu0 0.0
      %2641 = vmatpush2.msra.mxu0 0.0
      %2642 = vmatprep.subr.mxu0 0.0
      %2643 = vmatpush2.msra.mxu0 0.0
      %2644 = vmatprep.subr.mxu0 0.0
      %2645 = vmatpush2.msra.mxu0 0.0
      %2646 = vmatprep.mubr.f32.mxu0 0.0
      %2647 = vmatmul.mubr.f32.gmra.mxu0 %v2580
      %v2648 = vpop.f32.mrf.mxu0
      %v2649 = vadd.f32 %v506, %v2648
      %v2650 = vpop.f32.mrf.mxu0
      %2651 = vdwg.mxu0
      %v2652 = vxor.u32 %v2649, 2147483648
      %v2653 = vmul.f32 %v2652, 1.442695
      %v2654 = vpow.pop %v2653
      %v2655 = vadd.f32 %v2654, 1.0
      %v2656 = vrcp.pop %v2655
      %v2657 = vmul.f32 1.0, %v2656
      %v2658 = vtanh.pop %v2649
      %v2659 = vmul.f32 %v2657, %v2154
      %2661 = vrot.lane.b32.xlu0 %v2658, 112
      %v2662 = vpop.permute.xlu0 %2661
      %v2664 = vmul.f32 %v2657, %v2662
      %2666 = vrot.lane.b32.xlu0 %v2664, 8
      %v2667 = vpop.permute.xlu0 %2666
      %v2669 = vadd.f32 %v2659, %v2667
      %v2670 = vtanh.pop %v2669
      %2672 = vrot.lane.b32.xlu0 %v2670, 16
      %v2673 = vpop.permute.xlu0 %2672
      %v2675 = vmul.f32 %v2657, %v2673
      %2677 = vrot.lane.b32.xlu0 %v2675, 104
      %v2678 = vpop.permute.xlu0 %2677
      %v2679 = vsel %vm612, %v2678, 0
      %2681 = vmatprep.subr.mxu0 0.0
      %2682 = vmatpush1.msra.mxu0 0.0
      %2683 = vmatprep.subr.mxu0 0.0
      %2684 = vmatpush1.msra.mxu0 0.0
      %2685 = vmatprep.subr.mxu0 0.0
      %2686 = vmatpush1.msra.mxu0 0.0
      %2687 = vmatprep.subr.mxu0 0.0
      %2688 = vmatpush1.msra.mxu0 0.0
      %2689 = vmatprep.subr.mxu0 0.0
      %2690 = vmatpush1.msra.mxu0 0.0
      %2691 = vmatprep.subr.mxu0 0.0
      %2692 = vmatpush1.msra.mxu0 0.0
      %2693 = vmatprep.subr.mxu0 0.0
      %2694 = vmatpush1.msra.mxu0 0.0
      %2695 = vmatprep.subr.mxu0 0.0
      %2696 = vmatpush1.msra.mxu0 0.0
      %2697 = vmatprep.subr.mxu0 0.0
      %2698 = vmatpush1.msra.mxu0 0.0
      %2699 = vmatprep.subr.mxu0 0.0
      %2700 = vmatpush1.msra.mxu0 0.0
      %2701 = vmatprep.subr.mxu0 0.0
      %2702 = vmatpush1.msra.mxu0 0.0
      %2703 = vmatprep.subr.mxu0 0.0
      %2704 = vmatpush1.msra.mxu0 0.0
      %2705 = vmatprep.subr.mxu0 0.0
      %2706 = vmatpush1.msra.mxu0 0.0
      %2707 = vmatprep.subr.mxu0 0.0
      %2708 = vmatpush1.msra.mxu0 0.0
      %2709 = vmatprep.subr.mxu0 0.0
      %2710 = vmatpush1.msra.mxu0 0.0
      %2711 = vmatprep.subr.mxu0 0.0
      %2712 = vmatpush1.msra.mxu0 %v244
      %2713 = vmatprep.subr.mxu0 0.0
      %2714 = vmatpush2.msra.mxu0 0.0
      %2715 = vmatprep.subr.mxu0 0.0
      %2716 = vmatpush2.msra.mxu0 0.0
      %2717 = vmatprep.subr.mxu0 0.0
      %2718 = vmatpush2.msra.mxu0 0.0
      %2719 = vmatprep.subr.mxu0 0.0
      %2720 = vmatpush2.msra.mxu0 0.0
      %2721 = vmatprep.subr.mxu0 0.0
      %2722 = vmatpush2.msra.mxu0 0.0
      %2723 = vmatprep.subr.mxu0 0.0
      %2724 = vmatpush2.msra.mxu0 0.0
      %2725 = vmatprep.subr.mxu0 0.0
      %2726 = vmatpush2.msra.mxu0 0.0
      %2727 = vmatprep.subr.mxu0 0.0
      %2728 = vmatpush2.msra.mxu0 0.0
      %2729 = vmatprep.subr.mxu0 0.0
      %2730 = vmatpush2.msra.mxu0 0.0
      %2731 = vmatprep.subr.mxu0 0.0
      %2732 = vmatpush2.msra.mxu0 0.0
      %2733 = vmatprep.subr.mxu0 0.0
      %2734 = vmatpush2.msra.mxu0 0.0
      %2735 = vmatprep.subr.mxu0 0.0
      %2736 = vmatpush2.msra.mxu0 0.0
      %2737 = vmatprep.subr.mxu0 0.0
      %2738 = vmatpush2.msra.mxu0 0.0
      %2739 = vmatprep.subr.mxu0 0.0
      %2740 = vmatpush2.msra.mxu0 0.0
      %2741 = vmatprep.subr.mxu0 0.0
      %2742 = vmatpush2.msra.mxu0 0.0
      %2743 = vmatprep.subr.mxu0 0.0
      %2744 = vmatpush2.msra.mxu0 0.0
      %2745 = vmatprep.mubr.f32.mxu0 0.0
      %2746 = vmatmul.mubr.f32.gmra.mxu0 %v2679
      %v2747 = vpop.f32.mrf.mxu0
      %v2748 = vadd.f32 %v608, %v2747
      %v2749 = vpop.f32.mrf.mxu0
      %2750 = vdwg.mxu0
      %v2751 = vxor.u32 %v2748, 2147483648
      %v2752 = vmul.f32 %v2751, 1.442695
      %v2753 = vpow.pop %v2752
      %v2754 = vadd.f32 %v2753, 1.0
      %v2755 = vrcp.pop %v2754
      %v2756 = vmul.f32 1.0, %v2755
      %v2758 = vsel %vm423, %v2748, 0
      %2760 = vmatprep.subr.mxu0 0.0
      %2761 = vmatpush1.msra.mxu0 0.0
      %2762 = vmatprep.subr.mxu0 0.0
      %2763 = vmatpush1.msra.mxu0 0.0
      %2764 = vmatprep.subr.mxu0 0.0
      %2765 = vmatpush1.msra.mxu0 0.0
      %2766 = vmatprep.subr.mxu0 0.0
      %2767 = vmatpush1.msra.mxu0 0.0
      %2768 = vmatprep.subr.mxu0 0.0
      %2769 = vmatpush1.msra.mxu0 0.0
      %2770 = vmatprep.subr.mxu0 0.0
      %2771 = vmatpush1.msra.mxu0 0.0
      %2772 = vmatprep.subr.mxu0 0.0
      %2773 = vmatpush1.msra.mxu0 0.0
      %2774 = vmatprep.subr.mxu0 0.0
      %2775 = vmatpush1.msra.mxu0 0.0
      %2776 = vmatprep.subr.mxu0 0.0
      %2777 = vmatpush1.msra.mxu0 0.0
      %2778 = vmatprep.subr.mxu0 0.0
      %2779 = vmatpush1.msra.mxu0 0.0
      %2780 = vmatprep.subr.mxu0 0.0
      %2781 = vmatpush1.msra.mxu0 0.0
      %2782 = vmatprep.subr.mxu0 0.0
      %2783 = vmatpush1.msra.mxu0 0.0
      %2784 = vmatprep.subr.mxu0 0.0
      %2785 = vmatpush1.msra.mxu0 0.0
      %2786 = vmatprep.subr.mxu0 0.0
      %2787 = vmatpush1.msra.mxu0 0.0
      %2788 = vmatprep.subr.mxu0 0.0
      %2789 = vmatpush1.msra.mxu0 %v247
      %2790 = vmatprep.subr.mxu0 0.0
      %2791 = vmatpush1.msra.mxu0 %v246
      %2792 = vmatprep.subr.mxu0 0.0
      %2793 = vmatpush2.msra.mxu0 0.0
      %2794 = vmatprep.subr.mxu0 0.0
      %2795 = vmatpush2.msra.mxu0 0.0
      %2796 = vmatprep.subr.mxu0 0.0
      %2797 = vmatpush2.msra.mxu0 0.0
      %2798 = vmatprep.subr.mxu0 0.0
      %2799 = vmatpush2.msra.mxu0 0.0
      %2800 = vmatprep.subr.mxu0 0.0
      %2801 = vmatpush2.msra.mxu0 0.0
      %2802 = vmatprep.subr.mxu0 0.0
      %2803 = vmatpush2.msra.mxu0 0.0
      %2804 = vmatprep.subr.mxu0 0.0
      %2805 = vmatpush2.msra.mxu0 0.0
      %2806 = vmatprep.subr.mxu0 0.0
      %2807 = vmatpush2.msra.mxu0 0.0
      %2808 = vmatprep.subr.mxu0 0.0
      %2809 = vmatpush2.msra.mxu0 0.0
      %2810 = vmatprep.subr.mxu0 0.0
      %2811 = vmatpush2.msra.mxu0 0.0
      %2812 = vmatprep.subr.mxu0 0.0
      %2813 = vmatpush2.msra.mxu0 0.0
      %2814 = vmatprep.subr.mxu0 0.0
      %2815 = vmatpush2.msra.mxu0 0.0
      %2816 = vmatprep.subr.mxu0 0.0
      %2817 = vmatpush2.msra.mxu0 0.0
      %2818 = vmatprep.subr.mxu0 0.0
      %2819 = vmatpush2.msra.mxu0 0.0
      %2820 = vmatprep.subr.mxu0 0.0
      %2821 = vmatpush2.msra.mxu0 0.0
      %2822 = vmatprep.subr.mxu0 0.0
      %2823 = vmatpush2.msra.mxu0 0.0
      %2824 = vmatprep.mubr.f32.mxu0 0.0
      %2825 = vmatmul.mubr.f32.gmra.mxu0 %v2758
      %v2826 = vpop.f32.mrf.mxu0
      %v2827 = vadd.f32 %v694, %v2826
      %v2828 = vpop.f32.mrf.mxu0
      %2829 = vdwg.mxu0
      %v2830 = vsel %vm423, %v2827, -inf
      %2831 = vmax.xlane.f32.xlu0 %v2830
      %v2832 = vpop.xlane.xlu0 %2831
      %v2833 = vsub.f32 %v2827, %v2832
      %v2834 = vmul.f32 %v2833, 1.442695
      %v2835 = vpow.pop %v2834
      %v2836 = vsel %vm423, %v2835, 0.0
      %2837 = vadd.xlane.f32.xlu0 %v2836
      %v2838 = vpop.xlane.xlu0 %2837
      %v2839 = vrcp.pop %v2838
      %v2840 = vmul.f32 %v2835, %v2839
      %2841 = vrot.lane.b32.xlu0 %v2675, 120
      %v2842 = vpop.permute.xlu0 %2841
      %2845 = vrot.lane.b32.xlu0 %v2669, 16
      %v2846 = vpop.permute.xlu0 %2845
      %2849 = vrot.lane.b32.xlu0 %v2756, 16
      %v2850 = vpop.permute.xlu0 %2849
      %2853 = vrot.lane.b32.xlu0 %v2827, 17
      %v2854 = vpop.permute.xlu0 %2853
      %v2856 = vsel %vm423, %v2840, %v2842
      %v2857 = vsel %vm795, %v2856, %v2846
      %v2858 = vsel %vm345, %v2857, %v2850
      %v2859 = vsel %vm798, %v2858, %v2854
      %v2860 = vsel %vm800, %v2859, 0.0
      %s2861 = scalar_lea.vmem %s225, 32
      %2862 = vst [vmem:[%s2861] sm:$0xff] %v2860
      %s2863 = scalar_lea.vmem %s211, 40
      %v2864 = vld [vmem:[%s2863] sm:$0xff]
      %v2866 = vsel %vm262, %v2864, 0
      %2868 = vmatprep.subr.mxu0 0.0
      %2869 = vmatpush1.msra.mxu0 0.0
      %2870 = vmatprep.subr.mxu0 0.0
      %2871 = vmatpush1.msra.mxu0 0.0
      %2872 = vmatprep.subr.mxu0 0.0
      %2873 = vmatpush1.msra.mxu0 0.0
      %2874 = vmatprep.subr.mxu0 0.0
      %2875 = vmatpush1.msra.mxu0 0.0
      %2876 = vmatprep.subr.mxu0 0.0
      %2877 = vmatpush1.msra.mxu0 0.0
      %2878 = vmatprep.subr.mxu0 0.0
      %2879 = vmatpush1.msra.mxu0 0.0
      %2880 = vmatprep.subr.mxu0 0.0
      %2881 = vmatpush1.msra.mxu0 0.0
      %2882 = vmatprep.subr.mxu0 0.0
      %2883 = vmatpush1.msra.mxu0 0.0
      %2884 = vmatprep.subr.mxu0 0.0
      %2885 = vmatpush1.msra.mxu0 0.0
      %2886 = vmatprep.subr.mxu0 0.0
      %2887 = vmatpush1.msra.mxu0 0.0
      %2888 = vmatprep.subr.mxu0 0.0
      %2889 = vmatpush1.msra.mxu0 0.0
      %2890 = vmatprep.subr.mxu0 0.0
      %2891 = vmatpush1.msra.mxu0 0.0
      %2892 = vmatprep.subr.mxu0 0.0
      %2893 = vmatpush1.msra.mxu0 0.0
      %2894 = vmatprep.subr.mxu0 0.0
      %2895 = vmatpush1.msra.mxu0 %v268
      %2896 = vmatprep.subr.mxu0 0.0
      %2897 = vmatpush1.msra.mxu0 %v228
      %2898 = vmatprep.subr.mxu0 0.0
      %2899 = vmatpush1.msra.mxu0 %v227
      %2900 = vmatprep.subr.mxu0 0.0
      %2901 = vmatpush2.msra.mxu0 0.0
      %2902 = vmatprep.subr.mxu0 0.0
      %2903 = vmatpush2.msra.mxu0 0.0
      %2904 = vmatprep.subr.mxu0 0.0
      %2905 = vmatpush2.msra.mxu0 0.0
      %2906 = vmatprep.subr.mxu0 0.0
      %2907 = vmatpush2.msra.mxu0 0.0
      %2908 = vmatprep.subr.mxu0 0.0
      %2909 = vmatpush2.msra.mxu0 0.0
      %2910 = vmatprep.subr.mxu0 0.0
      %2911 = vmatpush2.msra.mxu0 0.0
      %2912 = vmatprep.subr.mxu0 0.0
      %2913 = vmatpush2.msra.mxu0 0.0
      %2914 = vmatprep.subr.mxu0 0.0
      %2915 = vmatpush2.msra.mxu0 0.0
      %2916 = vmatprep.subr.mxu0 0.0
      %2917 = vmatpush2.msra.mxu0 0.0
      %2918 = vmatprep.subr.mxu0 0.0
      %2919 = vmatpush2.msra.mxu0 0.0
      %2920 = vmatprep.subr.mxu0 0.0
      %2921 = vmatpush2.msra.mxu0 0.0
      %2922 = vmatprep.subr.mxu0 0.0
      %2923 = vmatpush2.msra.mxu0 0.0
      %2924 = vmatprep.subr.mxu0 0.0
      %2925 = vmatpush2.msra.mxu0 0.0
      %2926 = vmatprep.subr.mxu0 0.0
      %2927 = vmatpush2.msra.mxu0 0.0
      %2928 = vmatprep.subr.mxu0 0.0
      %2929 = vmatpush2.msra.mxu0 0.0
      %2930 = vmatprep.subr.mxu0 0.0
      %2931 = vmatpush2.msra.mxu0 0.0
      %2932 = vmatprep.mubr.f32.mxu0 0.0
      %2933 = vmatmul.mubr.f32.gmra.mxu0 %v2866
      %v2934 = vpop.f32.mrf.mxu0
      %v2935 = vadd.f32 %v261, %v2934
      %v2936 = vpop.f32.mrf.mxu0
      %2937 = vdwg.mxu0
      %v2938 = vmax.f32 %v2935, 0.0
      %v2940 = vsel %vm345, %v2938, 0
      %2942 = vmatprep.subr.mxu0 0.0
      %2943 = vmatpush1.msra.mxu0 0.0
      %2944 = vmatprep.subr.mxu0 0.0
      %2945 = vmatpush1.msra.mxu0 0.0
      %2946 = vmatprep.subr.mxu0 0.0
      %2947 = vmatpush1.msra.mxu0 0.0
      %2948 = vmatprep.subr.mxu0 0.0
      %2949 = vmatpush1.msra.mxu0 0.0
      %2950 = vmatprep.subr.mxu0 0.0
      %2951 = vmatpush1.msra.mxu0 0.0
      %2952 = vmatprep.subr.mxu0 0.0
      %2953 = vmatpush1.msra.mxu0 0.0
      %2954 = vmatprep.subr.mxu0 0.0
      %2955 = vmatpush1.msra.mxu0 0.0
      %2956 = vmatprep.subr.mxu0 0.0
      %2957 = vmatpush1.msra.mxu0 0.0
      %2958 = vmatprep.subr.mxu0 0.0
      %2959 = vmatpush1.msra.mxu0 0.0
      %2960 = vmatprep.subr.mxu0 0.0
      %2961 = vmatpush1.msra.mxu0 0.0
      %2962 = vmatprep.subr.mxu0 0.0
      %2963 = vmatpush1.msra.mxu0 0.0
      %2964 = vmatprep.subr.mxu0 0.0
      %2965 = vmatpush1.msra.mxu0 0.0
      %2966 = vmatprep.subr.mxu0 0.0
      %2967 = vmatpush1.msra.mxu0 %v234
      %2968 = vmatprep.subr.mxu0 0.0
      %2969 = vmatpush1.msra.mxu0 %v233
      %2970 = vmatprep.subr.mxu0 0.0
      %2971 = vmatpush1.msra.mxu0 %v232
      %2972 = vmatprep.subr.mxu0 0.0
      %2973 = vmatpush1.msra.mxu0 %v231
      %2974 = vmatprep.subr.mxu0 0.0
      %2975 = vmatpush2.msra.mxu0 0.0
      %2976 = vmatprep.subr.mxu0 0.0
      %2977 = vmatpush2.msra.mxu0 0.0
      %2978 = vmatprep.subr.mxu0 0.0
      %2979 = vmatpush2.msra.mxu0 0.0
      %2980 = vmatprep.subr.mxu0 0.0
      %2981 = vmatpush2.msra.mxu0 0.0
      %2982 = vmatprep.subr.mxu0 0.0
      %2983 = vmatpush2.msra.mxu0 0.0
      %2984 = vmatprep.subr.mxu0 0.0
      %2985 = vmatpush2.msra.mxu0 0.0
      %2986 = vmatprep.subr.mxu0 0.0
      %2987 = vmatpush2.msra.mxu0 0.0
      %2988 = vmatprep.subr.mxu0 0.0
      %2989 = vmatpush2.msra.mxu0 0.0
      %2990 = vmatprep.subr.mxu0 0.0
      %2991 = vmatpush2.msra.mxu0 0.0
      %2992 = vmatprep.subr.mxu0 0.0
      %2993 = vmatpush2.msra.mxu0 0.0
      %2994 = vmatprep.subr.mxu0 0.0
      %2995 = vmatpush2.msra.mxu0 0.0
      %2996 = vmatprep.subr.mxu0 0.0
      %2997 = vmatpush2.msra.mxu0 0.0
      %2998 = vmatprep.subr.mxu0 0.0
      %2999 = vmatpush2.msra.mxu0 0.0
      %3000 = vmatprep.subr.mxu0 0.0
      %3001 = vmatpush2.msra.mxu0 0.0
      %3002 = vmatprep.subr.mxu0 0.0
      %3003 = vmatpush2.msra.mxu0 0.0
      %3004 = vmatprep.subr.mxu0 0.0
      %3005 = vmatpush2.msra.mxu0 0.0
      %3006 = vmatprep.mubr.f32.mxu0 0.0
      %3007 = vmatmul.mubr.f32.gmra.mxu0 %v2940
      %v3008 = vpop.f32.mrf.mxu0
      %v3009 = vadd.f32 %v344, %v3008
      %v3010 = vpop.f32.mrf.mxu0
      %3011 = vdwg.mxu0
      %v3012 = vmax.f32 %v3009, 0.0
      %3014 = vrot.lane.b32.xlu0 %v3012, 96
      %v3015 = vpop.permute.xlu0 %3014
      %v3016 = vsel %vm423, %v3015, 0
      %3018 = vmatprep.subr.mxu0 0.0
      %3019 = vmatpush1.msra.mxu0 0.0
      %3020 = vmatprep.subr.mxu0 0.0
      %3021 = vmatpush1.msra.mxu0 0.0
      %3022 = vmatprep.subr.mxu0 0.0
      %3023 = vmatpush1.msra.mxu0 0.0
      %3024 = vmatprep.subr.mxu0 0.0
      %3025 = vmatpush1.msra.mxu0 0.0
      %3026 = vmatprep.subr.mxu0 0.0
      %3027 = vmatpush1.msra.mxu0 0.0
      %3028 = vmatprep.subr.mxu0 0.0
      %3029 = vmatpush1.msra.mxu0 0.0
      %3030 = vmatprep.subr.mxu0 0.0
      %3031 = vmatpush1.msra.mxu0 0.0
      %3032 = vmatprep.subr.mxu0 0.0
      %3033 = vmatpush1.msra.mxu0 0.0
      %3034 = vmatprep.subr.mxu0 0.0
      %3035 = vmatpush1.msra.mxu0 0.0
      %3036 = vmatprep.subr.mxu0 0.0
      %3037 = vmatpush1.msra.mxu0 0.0
      %3038 = vmatprep.subr.mxu0 0.0
      %3039 = vmatpush1.msra.mxu0 0.0
      %3040 = vmatprep.subr.mxu0 0.0
      %3041 = vmatpush1.msra.mxu0 0.0
      %3042 = vmatprep.subr.mxu0 0.0
      %3043 = vmatpush1.msra.mxu0 0.0
      %3044 = vmatprep.subr.mxu0 0.0
      %3045 = vmatpush1.msra.mxu0 0.0
      %3046 = vmatprep.subr.mxu0 0.0
      %3047 = vmatpush1.msra.mxu0 %v237
      %3048 = vmatprep.subr.mxu0 0.0
      %3049 = vmatpush1.msra.mxu0 %v236
      %3050 = vmatprep.subr.mxu0 0.0
      %3051 = vmatpush2.msra.mxu0 0.0
      %3052 = vmatprep.subr.mxu0 0.0
      %3053 = vmatpush2.msra.mxu0 0.0
      %3054 = vmatprep.subr.mxu0 0.0
      %3055 = vmatpush2.msra.mxu0 0.0
      %3056 = vmatprep.subr.mxu0 0.0
      %3057 = vmatpush2.msra.mxu0 0.0
      %3058 = vmatprep.subr.mxu0 0.0
      %3059 = vmatpush2.msra.mxu0 0.0
      %3060 = vmatprep.subr.mxu0 0.0
      %3061 = vmatpush2.msra.mxu0 0.0
      %3062 = vmatprep.subr.mxu0 0.0
      %3063 = vmatpush2.msra.mxu0 0.0
      %3064 = vmatprep.subr.mxu0 0.0
      %3065 = vmatpush2.msra.mxu0 0.0
      %3066 = vmatprep.subr.mxu0 0.0
      %3067 = vmatpush2.msra.mxu0 0.0
      %3068 = vmatprep.subr.mxu0 0.0
      %3069 = vmatpush2.msra.mxu0 0.0
      %3070 = vmatprep.subr.mxu0 0.0
      %3071 = vmatpush2.msra.mxu0 0.0
      %3072 = vmatprep.subr.mxu0 0.0
      %3073 = vmatpush2.msra.mxu0 0.0
      %3074 = vmatprep.subr.mxu0 0.0
      %3075 = vmatpush2.msra.mxu0 0.0
      %3076 = vmatprep.subr.mxu0 0.0
      %3077 = vmatpush2.msra.mxu0 0.0
      %3078 = vmatprep.subr.mxu0 0.0
      %3079 = vmatpush2.msra.mxu0 0.0
      %3080 = vmatprep.subr.mxu0 0.0
      %3081 = vmatpush2.msra.mxu0 0.0
      %3082 = vmatprep.mubr.f32.mxu0 0.0
      %3083 = vmatmul.mubr.f32.gmra.mxu0 %v3016
      %v3084 = vpop.f32.mrf.mxu0
      %v3085 = vadd.f32 0.0, %v3084
      %v3086 = vpop.f32.mrf.mxu0
      %3087 = vdwg.mxu0
      %v3088 = vadd.f32 %v3009, %v3085
      %v3089 = vmax.f32 %v3088, 0.0
      %3090 = vrot.lane.b32.xlu0 %v2675, 8
      %v3091 = vpop.permute.xlu0 %3090
      %v3093 = vsel %vm345, %v3089, %v3091
      %v3095 = vsel %vm507, %v3093, 0
      %3097 = vmatprep.subr.mxu0 0.0
      %3098 = vmatpush1.msra.mxu0 0.0
      %3099 = vmatprep.subr.mxu0 0.0
      %3100 = vmatpush1.msra.mxu0 0.0
      %3101 = vmatprep.subr.mxu0 0.0
      %3102 = vmatpush1.msra.mxu0 0.0
      %3103 = vmatprep.subr.mxu0 0.0
      %3104 = vmatpush1.msra.mxu0 0.0
      %3105 = vmatprep.subr.mxu0 0.0
      %3106 = vmatpush1.msra.mxu0 0.0
      %3107 = vmatprep.subr.mxu0 0.0
      %3108 = vmatpush1.msra.mxu0 0.0
      %3109 = vmatprep.subr.mxu0 0.0
      %3110 = vmatpush1.msra.mxu0 0.0
      %3111 = vmatprep.subr.mxu0 0.0
      %3112 = vmatpush1.msra.mxu0 0.0
      %3113 = vmatprep.subr.mxu0 0.0
      %3114 = vmatpush1.msra.mxu0 0.0
      %3115 = vmatprep.subr.mxu0 0.0
      %3116 = vmatpush1.msra.mxu0 0.0
      %3117 = vmatprep.subr.mxu0 0.0
      %3118 = vmatpush1.msra.mxu0 0.0
      %3119 = vmatprep.subr.mxu0 0.0
      %3120 = vmatpush1.msra.mxu0 %v242
      %3121 = vmatprep.subr.mxu0 0.0
      %3122 = vmatpush1.msra.mxu0 %v241
      %3123 = vmatprep.subr.mxu0 0.0
      %3124 = vmatpush1.msra.mxu0 %v240
      %3125 = vmatprep.subr.mxu0 0.0
      %3126 = vmatpush1.msra.mxu0 %v239
      %3127 = vmatprep.subr.mxu0 0.0
      %3128 = vmatpush1.msra.mxu0 %v238
      %3129 = vmatprep.subr.mxu0 0.0
      %3130 = vmatpush2.msra.mxu0 0.0
      %3131 = vmatprep.subr.mxu0 0.0
      %3132 = vmatpush2.msra.mxu0 0.0
      %3133 = vmatprep.subr.mxu0 0.0
      %3134 = vmatpush2.msra.mxu0 0.0
      %3135 = vmatprep.subr.mxu0 0.0
      %3136 = vmatpush2.msra.mxu0 0.0
      %3137 = vmatprep.subr.mxu0 0.0
      %3138 = vmatpush2.msra.mxu0 0.0
      %3139 = vmatprep.subr.mxu0 0.0
      %3140 = vmatpush2.msra.mxu0 0.0
      %3141 = vmatprep.subr.mxu0 0.0
      %3142 = vmatpush2.msra.mxu0 0.0
      %3143 = vmatprep.subr.mxu0 0.0
      %3144 = vmatpush2.msra.mxu0 0.0
      %3145 = vmatprep.subr.mxu0 0.0
      %3146 = vmatpush2.msra.mxu0 0.0
      %3147 = vmatprep.subr.mxu0 0.0
      %3148 = vmatpush2.msra.mxu0 0.0
      %3149 = vmatprep.subr.mxu0 0.0
      %3150 = vmatpush2.msra.mxu0 0.0
      %3151 = vmatprep.subr.mxu0 0.0
      %3152 = vmatpush2.msra.mxu0 0.0
      %3153 = vmatprep.subr.mxu0 0.0
      %3154 = vmatpush2.msra.mxu0 0.0
      %3155 = vmatprep.subr.mxu0 0.0
      %3156 = vmatpush2.msra.mxu0 0.0
      %3157 = vmatprep.subr.mxu0 0.0
      %3158 = vmatpush2.msra.mxu0 0.0
      %3159 = vmatprep.subr.mxu0 0.0
      %3160 = vmatpush2.msra.mxu0 0.0
      %3161 = vmatprep.mubr.f32.mxu0 0.0
      %3162 = vmatmul.mubr.f32.gmra.mxu0 %v3095
      %v3163 = vpop.f32.mrf.mxu0
      %v3164 = vadd.f32 %v506, %v3163
      %v3165 = vpop.f32.mrf.mxu0
      %3166 = vdwg.mxu0
      %v3167 = vxor.u32 %v3164, 2147483648
      %v3168 = vmul.f32 %v3167, 1.442695
      %v3169 = vpow.pop %v3168
      %v3170 = vadd.f32 %v3169, 1.0
      %v3171 = vrcp.pop %v3170
      %v3172 = vmul.f32 1.0, %v3171
      %v3173 = vtanh.pop %v3164
      %v3174 = vmul.f32 %v3172, %v2669
      %3176 = vrot.lane.b32.xlu0 %v3173, 112
      %v3177 = vpop.permute.xlu0 %3176
      %v3179 = vmul.f32 %v3172, %v3177
      %3181 = vrot.lane.b32.xlu0 %v3179, 8
      %v3182 = vpop.permute.xlu0 %3181
      %v3184 = vadd.f32 %v3174, %v3182
      %v3185 = vtanh.pop %v3184
      %3187 = vrot.lane.b32.xlu0 %v3185, 16
      %v3188 = vpop.permute.xlu0 %3187
      %v3190 = vmul.f32 %v3172, %v3188
      %3192 = vrot.lane.b32.xlu0 %v3190, 104
      %v3193 = vpop.permute.xlu0 %3192
      %v3194 = vsel %vm612, %v3193, 0
      %3196 = vmatprep.subr.mxu0 0.0
      %3197 = vmatpush1.msra.mxu0 0.0
      %3198 = vmatprep.subr.mxu0 0.0
      %3199 = vmatpush1.msra.mxu0 0.0
      %3200 = vmatprep.subr.mxu0 0.0
      %3201 = vmatpush1.msra.mxu0 0.0
      %3202 = vmatprep.subr.mxu0 0.0
      %3203 = vmatpush1.msra.mxu0 0.0
      %3204 = vmatprep.subr.mxu0 0.0
      %3205 = vmatpush1.msra.mxu0 0.0
      %3206 = vmatprep.subr.mxu0 0.0
      %3207 = vmatpush1.msra.mxu0 0.0
      %3208 = vmatprep.subr.mxu0 0.0
      %3209 = vmatpush1.msra.mxu0 0.0
      %3210 = vmatprep.subr.mxu0 0.0
      %3211 = vmatpush1.msra.mxu0 0.0
      %3212 = vmatprep.subr.mxu0 0.0
      %3213 = vmatpush1.msra.mxu0 0.0
      %3214 = vmatprep.subr.mxu0 0.0
      %3215 = vmatpush1.msra.mxu0 0.0
      %3216 = vmatprep.subr.mxu0 0.0
      %3217 = vmatpush1.msra.mxu0 0.0
      %3218 = vmatprep.subr.mxu0 0.0
      %3219 = vmatpush1.msra.mxu0 0.0
      %3220 = vmatprep.subr.mxu0 0.0
      %3221 = vmatpush1.msra.mxu0 0.0
      %3222 = vmatprep.subr.mxu0 0.0
      %3223 = vmatpush1.msra.mxu0 0.0
      %3224 = vmatprep.subr.mxu0 0.0
      %3225 = vmatpush1.msra.mxu0 0.0
      %3226 = vmatprep.subr.mxu0 0.0
      %3227 = vmatpush1.msra.mxu0 %v244
      %3228 = vmatprep.subr.mxu0 0.0
      %3229 = vmatpush2.msra.mxu0 0.0
      %3230 = vmatprep.subr.mxu0 0.0
      %3231 = vmatpush2.msra.mxu0 0.0
      %3232 = vmatprep.subr.mxu0 0.0
      %3233 = vmatpush2.msra.mxu0 0.0
      %3234 = vmatprep.subr.mxu0 0.0
      %3235 = vmatpush2.msra.mxu0 0.0
      %3236 = vmatprep.subr.mxu0 0.0
      %3237 = vmatpush2.msra.mxu0 0.0
      %3238 = vmatprep.subr.mxu0 0.0
      %3239 = vmatpush2.msra.mxu0 0.0
      %3240 = vmatprep.subr.mxu0 0.0
      %3241 = vmatpush2.msra.mxu0 0.0
      %3242 = vmatprep.subr.mxu0 0.0
      %3243 = vmatpush2.msra.mxu0 0.0
      %3244 = vmatprep.subr.mxu0 0.0
      %3245 = vmatpush2.msra.mxu0 0.0
      %3246 = vmatprep.subr.mxu0 0.0
      %3247 = vmatpush2.msra.mxu0 0.0
      %3248 = vmatprep.subr.mxu0 0.0
      %3249 = vmatpush2.msra.mxu0 0.0
      %3250 = vmatprep.subr.mxu0 0.0
      %3251 = vmatpush2.msra.mxu0 0.0
      %3252 = vmatprep.subr.mxu0 0.0
      %3253 = vmatpush2.msra.mxu0 0.0
      %3254 = vmatprep.subr.mxu0 0.0
      %3255 = vmatpush2.msra.mxu0 0.0
      %3256 = vmatprep.subr.mxu0 0.0
      %3257 = vmatpush2.msra.mxu0 0.0
      %3258 = vmatprep.subr.mxu0 0.0
      %3259 = vmatpush2.msra.mxu0 0.0
      %3260 = vmatprep.mubr.f32.mxu0 0.0
      %3261 = vmatmul.mubr.f32.gmra.mxu0 %v3194
      %v3262 = vpop.f32.mrf.mxu0
      %v3263 = vadd.f32 %v608, %v3262
      %v3264 = vpop.f32.mrf.mxu0
      %3265 = vdwg.mxu0
      %v3266 = vxor.u32 %v3263, 2147483648
      %v3267 = vmul.f32 %v3266, 1.442695
      %v3268 = vpow.pop %v3267
      %v3269 = vadd.f32 %v3268, 1.0
      %v3270 = vrcp.pop %v3269
      %v3271 = vmul.f32 1.0, %v3270
      %v3273 = vsel %vm423, %v3263, 0
      %3275 = vmatprep.subr.mxu0 0.0
      %3276 = vmatpush1.msra.mxu0 0.0
      %3277 = vmatprep.subr.mxu0 0.0
      %3278 = vmatpush1.msra.mxu0 0.0
      %3279 = vmatprep.subr.mxu0 0.0
      %3280 = vmatpush1.msra.mxu0 0.0
      %3281 = vmatprep.subr.mxu0 0.0
      %3282 = vmatpush1.msra.mxu0 0.0
      %3283 = vmatprep.subr.mxu0 0.0
      %3284 = vmatpush1.msra.mxu0 0.0
      %3285 = vmatprep.subr.mxu0 0.0
      %3286 = vmatpush1.msra.mxu0 0.0
      %3287 = vmatprep.subr.mxu0 0.0
      %3288 = vmatpush1.msra.mxu0 0.0
      %3289 = vmatprep.subr.mxu0 0.0
      %3290 = vmatpush1.msra.mxu0 0.0
      %3291 = vmatprep.subr.mxu0 0.0
      %3292 = vmatpush1.msra.mxu0 0.0
      %3293 = vmatprep.subr.mxu0 0.0
      %3294 = vmatpush1.msra.mxu0 0.0
      %3295 = vmatprep.subr.mxu0 0.0
      %3296 = vmatpush1.msra.mxu0 0.0
      %3297 = vmatprep.subr.mxu0 0.0
      %3298 = vmatpush1.msra.mxu0 0.0
      %3299 = vmatprep.subr.mxu0 0.0
      %3300 = vmatpush1.msra.mxu0 0.0
      %3301 = vmatprep.subr.mxu0 0.0
      %3302 = vmatpush1.msra.mxu0 0.0
      %3303 = vmatprep.subr.mxu0 0.0
      %3304 = vmatpush1.msra.mxu0 %v247
      %3305 = vmatprep.subr.mxu0 0.0
      %3306 = vmatpush1.msra.mxu0 %v246
      %3307 = vmatprep.subr.mxu0 0.0
      %3308 = vmatpush2.msra.mxu0 0.0
      %3309 = vmatprep.subr.mxu0 0.0
      %3310 = vmatpush2.msra.mxu0 0.0
      %3311 = vmatprep.subr.mxu0 0.0
      %3312 = vmatpush2.msra.mxu0 0.0
      %3313 = vmatprep.subr.mxu0 0.0
      %3314 = vmatpush2.msra.mxu0 0.0
      %3315 = vmatprep.subr.mxu0 0.0
      %3316 = vmatpush2.msra.mxu0 0.0
      %3317 = vmatprep.subr.mxu0 0.0
      %3318 = vmatpush2.msra.mxu0 0.0
      %3319 = vmatprep.subr.mxu0 0.0
      %3320 = vmatpush2.msra.mxu0 0.0
      %3321 = vmatprep.subr.mxu0 0.0
      %3322 = vmatpush2.msra.mxu0 0.0
      %3323 = vmatprep.subr.mxu0 0.0
      %3324 = vmatpush2.msra.mxu0 0.0
      %3325 = vmatprep.subr.mxu0 0.0
      %3326 = vmatpush2.msra.mxu0 0.0
      %3327 = vmatprep.subr.mxu0 0.0
      %3328 = vmatpush2.msra.mxu0 0.0
      %3329 = vmatprep.subr.mxu0 0.0
      %3330 = vmatpush2.msra.mxu0 0.0
      %3331 = vmatprep.subr.mxu0 0.0
      %3332 = vmatpush2.msra.mxu0 0.0
      %3333 = vmatprep.subr.mxu0 0.0
      %3334 = vmatpush2.msra.mxu0 0.0
      %3335 = vmatprep.subr.mxu0 0.0
      %3336 = vmatpush2.msra.mxu0 0.0
      %3337 = vmatprep.subr.mxu0 0.0
      %3338 = vmatpush2.msra.mxu0 0.0
      %3339 = vmatprep.mubr.f32.mxu0 0.0
      %3340 = vmatmul.mubr.f32.gmra.mxu0 %v3273
      %v3341 = vpop.f32.mrf.mxu0
      %v3342 = vadd.f32 %v694, %v3341
      %v3343 = vpop.f32.mrf.mxu0
      %3344 = vdwg.mxu0
      %v3345 = vsel %vm423, %v3342, -inf
      %3346 = vmax.xlane.f32.xlu0 %v3345
      %v3347 = vpop.xlane.xlu0 %3346
      %v3348 = vsub.f32 %v3342, %v3347
      %v3349 = vmul.f32 %v3348, 1.442695
      %v3350 = vpow.pop %v3349
      %v3351 = vsel %vm423, %v3350, 0.0
      %3352 = vadd.xlane.f32.xlu0 %v3351
      %v3353 = vpop.xlane.xlu0 %3352
      %v3354 = vrcp.pop %v3353
      %v3355 = vmul.f32 %v3350, %v3354
      %3356 = vrot.lane.b32.xlu0 %v3190, 120
      %v3357 = vpop.permute.xlu0 %3356
      %3360 = vrot.lane.b32.xlu0 %v3184, 16
      %v3361 = vpop.permute.xlu0 %3360
      %3364 = vrot.lane.b32.xlu0 %v3271, 16
      %v3365 = vpop.permute.xlu0 %3364
      %3368 = vrot.lane.b32.xlu0 %v3342, 17
      %v3369 = vpop.permute.xlu0 %3368
      %v3371 = vsel %vm423, %v3355, %v3357
      %v3372 = vsel %vm795, %v3371, %v3361
      %v3373 = vsel %vm345, %v3372, %v3365
      %v3374 = vsel %vm798, %v3373, %v3369
      %v3375 = vsel %vm800, %v3374, 0.0
      %s3376 = scalar_lea.vmem %s225, 40
      %3377 = vst [vmem:[%s3376] sm:$0xff] %v3375
      %s3378 = scalar_lea.vmem %s211, 48
      %v3379 = vld [vmem:[%s3378] sm:$0xff]
      %v3381 = vsel %vm262, %v3379, 0
      %3383 = vmatprep.subr.mxu0 0.0
      %3384 = vmatpush1.msra.mxu0 0.0
      %3385 = vmatprep.subr.mxu0 0.0
      %3386 = vmatpush1.msra.mxu0 0.0
      %3387 = vmatprep.subr.mxu0 0.0
      %3388 = vmatpush1.msra.mxu0 0.0
      %3389 = vmatprep.subr.mxu0 0.0
      %3390 = vmatpush1.msra.mxu0 0.0
      %3391 = vmatprep.subr.mxu0 0.0
      %3392 = vmatpush1.msra.mxu0 0.0
      %3393 = vmatprep.subr.mxu0 0.0
      %3394 = vmatpush1.msra.mxu0 0.0
      %3395 = vmatprep.subr.mxu0 0.0
      %3396 = vmatpush1.msra.mxu0 0.0
      %3397 = vmatprep.subr.mxu0 0.0
      %3398 = vmatpush1.msra.mxu0 0.0
      %3399 = vmatprep.subr.mxu0 0.0
      %3400 = vmatpush1.msra.mxu0 0.0
      %3401 = vmatprep.subr.mxu0 0.0
      %3402 = vmatpush1.msra.mxu0 0.0
      %3403 = vmatprep.subr.mxu0 0.0
      %3404 = vmatpush1.msra.mxu0 0.0
      %3405 = vmatprep.subr.mxu0 0.0
      %3406 = vmatpush1.msra.mxu0 0.0
      %3407 = vmatprep.subr.mxu0 0.0
      %3408 = vmatpush1.msra.mxu0 0.0
      %3409 = vmatprep.subr.mxu0 0.0
      %3410 = vmatpush1.msra.mxu0 %v268
      %3411 = vmatprep.subr.mxu0 0.0
      %3412 = vmatpush1.msra.mxu0 %v228
      %3413 = vmatprep.subr.mxu0 0.0
      %3414 = vmatpush1.msra.mxu0 %v227
      %3415 = vmatprep.subr.mxu0 0.0
      %3416 = vmatpush2.msra.mxu0 0.0
      %3417 = vmatprep.subr.mxu0 0.0
      %3418 = vmatpush2.msra.mxu0 0.0
      %3419 = vmatprep.subr.mxu0 0.0
      %3420 = vmatpush2.msra.mxu0 0.0
      %3421 = vmatprep.subr.mxu0 0.0
      %3422 = vmatpush2.msra.mxu0 0.0
      %3423 = vmatprep.subr.mxu0 0.0
      %3424 = vmatpush2.msra.mxu0 0.0
      %3425 = vmatprep.subr.mxu0 0.0
      %3426 = vmatpush2.msra.mxu0 0.0
      %3427 = vmatprep.subr.mxu0 0.0
      %3428 = vmatpush2.msra.mxu0 0.0
      %3429 = vmatprep.subr.mxu0 0.0
      %3430 = vmatpush2.msra.mxu0 0.0
      %3431 = vmatprep.subr.mxu0 0.0
      %3432 = vmatpush2.msra.mxu0 0.0
      %3433 = vmatprep.subr.mxu0 0.0
      %3434 = vmatpush2.msra.mxu0 0.0
      %3435 = vmatprep.subr.mxu0 0.0
      %3436 = vmatpush2.msra.mxu0 0.0
      %3437 = vmatprep.subr.mxu0 0.0
      %3438 = vmatpush2.msra.mxu0 0.0
      %3439 = vmatprep.subr.mxu0 0.0
      %3440 = vmatpush2.msra.mxu0 0.0
      %3441 = vmatprep.subr.mxu0 0.0
      %3442 = vmatpush2.msra.mxu0 0.0
      %3443 = vmatprep.subr.mxu0 0.0
      %3444 = vmatpush2.msra.mxu0 0.0
      %3445 = vmatprep.subr.mxu0 0.0
      %3446 = vmatpush2.msra.mxu0 0.0
      %3447 = vmatprep.mubr.f32.mxu0 0.0
      %3448 = vmatmul.mubr.f32.gmra.mxu0 %v3381
      %v3449 = vpop.f32.mrf.mxu0
      %v3450 = vadd.f32 %v261, %v3449
      %v3451 = vpop.f32.mrf.mxu0
      %3452 = vdwg.mxu0
      %v3453 = vmax.f32 %v3450, 0.0
      %v3455 = vsel %vm345, %v3453, 0
      %3457 = vmatprep.subr.mxu0 0.0
      %3458 = vmatpush1.msra.mxu0 0.0
      %3459 = vmatprep.subr.mxu0 0.0
      %3460 = vmatpush1.msra.mxu0 0.0
      %3461 = vmatprep.subr.mxu0 0.0
      %3462 = vmatpush1.msra.mxu0 0.0
      %3463 = vmatprep.subr.mxu0 0.0
      %3464 = vmatpush1.msra.mxu0 0.0
      %3465 = vmatprep.subr.mxu0 0.0
      %3466 = vmatpush1.msra.mxu0 0.0
      %3467 = vmatprep.subr.mxu0 0.0
      %3468 = vmatpush1.msra.mxu0 0.0
      %3469 = vmatprep.subr.mxu0 0.0
      %3470 = vmatpush1.msra.mxu0 0.0
      %3471 = vmatprep.subr.mxu0 0.0
      %3472 = vmatpush1.msra.mxu0 0.0
      %3473 = vmatprep.subr.mxu0 0.0
      %3474 = vmatpush1.msra.mxu0 0.0
      %3475 = vmatprep.subr.mxu0 0.0
      %3476 = vmatpush1.msra.mxu0 0.0
      %3477 = vmatprep.subr.mxu0 0.0
      %3478 = vmatpush1.msra.mxu0 0.0
      %3479 = vmatprep.subr.mxu0 0.0
      %3480 = vmatpush1.msra.mxu0 0.0
      %3481 = vmatprep.subr.mxu0 0.0
      %3482 = vmatpush1.msra.mxu0 %v234
      %3483 = vmatprep.subr.mxu0 0.0
      %3484 = vmatpush1.msra.mxu0 %v233
      %3485 = vmatprep.subr.mxu0 0.0
      %3486 = vmatpush1.msra.mxu0 %v232
      %3487 = vmatprep.subr.mxu0 0.0
      %3488 = vmatpush1.msra.mxu0 %v231
      %3489 = vmatprep.subr.mxu0 0.0
      %3490 = vmatpush2.msra.mxu0 0.0
      %3491 = vmatprep.subr.mxu0 0.0
      %3492 = vmatpush2.msra.mxu0 0.0
      %3493 = vmatprep.subr.mxu0 0.0
      %3494 = vmatpush2.msra.mxu0 0.0
      %3495 = vmatprep.subr.mxu0 0.0
      %3496 = vmatpush2.msra.mxu0 0.0
      %3497 = vmatprep.subr.mxu0 0.0
      %3498 = vmatpush2.msra.mxu0 0.0
      %3499 = vmatprep.subr.mxu0 0.0
      %3500 = vmatpush2.msra.mxu0 0.0
      %3501 = vmatprep.subr.mxu0 0.0
      %3502 = vmatpush2.msra.mxu0 0.0
      %3503 = vmatprep.subr.mxu0 0.0
      %3504 = vmatpush2.msra.mxu0 0.0
      %3505 = vmatprep.subr.mxu0 0.0
      %3506 = vmatpush2.msra.mxu0 0.0
      %3507 = vmatprep.subr.mxu0 0.0
      %3508 = vmatpush2.msra.mxu0 0.0
      %3509 = vmatprep.subr.mxu0 0.0
      %3510 = vmatpush2.msra.mxu0 0.0
      %3511 = vmatprep.subr.mxu0 0.0
      %3512 = vmatpush2.msra.mxu0 0.0
      %3513 = vmatprep.subr.mxu0 0.0
      %3514 = vmatpush2.msra.mxu0 0.0
      %3515 = vmatprep.subr.mxu0 0.0
      %3516 = vmatpush2.msra.mxu0 0.0
      %3517 = vmatprep.subr.mxu0 0.0
      %3518 = vmatpush2.msra.mxu0 0.0
      %3519 = vmatprep.subr.mxu0 0.0
      %3520 = vmatpush2.msra.mxu0 0.0
      %3521 = vmatprep.mubr.f32.mxu0 0.0
      %3522 = vmatmul.mubr.f32.gmra.mxu0 %v3455
      %v3523 = vpop.f32.mrf.mxu0
      %v3524 = vadd.f32 %v344, %v3523
      %v3525 = vpop.f32.mrf.mxu0
      %3526 = vdwg.mxu0
      %v3527 = vmax.f32 %v3524, 0.0
      %3529 = vrot.lane.b32.xlu0 %v3527, 96
      %v3530 = vpop.permute.xlu0 %3529
      %v3531 = vsel %vm423, %v3530, 0
      %3533 = vmatprep.subr.mxu0 0.0
      %3534 = vmatpush1.msra.mxu0 0.0
      %3535 = vmatprep.subr.mxu0 0.0
      %3536 = vmatpush1.msra.mxu0 0.0
      %3537 = vmatprep.subr.mxu0 0.0
      %3538 = vmatpush1.msra.mxu0 0.0
      %3539 = vmatprep.subr.mxu0 0.0
      %3540 = vmatpush1.msra.mxu0 0.0
      %3541 = vmatprep.subr.mxu0 0.0
      %3542 = vmatpush1.msra.mxu0 0.0
      %3543 = vmatprep.subr.mxu0 0.0
      %3544 = vmatpush1.msra.mxu0 0.0
      %3545 = vmatprep.subr.mxu0 0.0
      %3546 = vmatpush1.msra.mxu0 0.0
      %3547 = vmatprep.subr.mxu0 0.0
      %3548 = vmatpush1.msra.mxu0 0.0
      %3549 = vmatprep.subr.mxu0 0.0
      %3550 = vmatpush1.msra.mxu0 0.0
      %3551 = vmatprep.subr.mxu0 0.0
      %3552 = vmatpush1.msra.mxu0 0.0
      %3553 = vmatprep.subr.mxu0 0.0
      %3554 = vmatpush1.msra.mxu0 0.0
      %3555 = vmatprep.subr.mxu0 0.0
      %3556 = vmatpush1.msra.mxu0 0.0
      %3557 = vmatprep.subr.mxu0 0.0
      %3558 = vmatpush1.msra.mxu0 0.0
      %3559 = vmatprep.subr.mxu0 0.0
      %3560 = vmatpush1.msra.mxu0 0.0
      %3561 = vmatprep.subr.mxu0 0.0
      %3562 = vmatpush1.msra.mxu0 %v237
      %3563 = vmatprep.subr.mxu0 0.0
      %3564 = vmatpush1.msra.mxu0 %v236
      %3565 = vmatprep.subr.mxu0 0.0
      %3566 = vmatpush2.msra.mxu0 0.0
      %3567 = vmatprep.subr.mxu0 0.0
      %3568 = vmatpush2.msra.mxu0 0.0
      %3569 = vmatprep.subr.mxu0 0.0
      %3570 = vmatpush2.msra.mxu0 0.0
      %3571 = vmatprep.subr.mxu0 0.0
      %3572 = vmatpush2.msra.mxu0 0.0
      %3573 = vmatprep.subr.mxu0 0.0
      %3574 = vmatpush2.msra.mxu0 0.0
      %3575 = vmatprep.subr.mxu0 0.0
      %3576 = vmatpush2.msra.mxu0 0.0
      %3577 = vmatprep.subr.mxu0 0.0
      %3578 = vmatpush2.msra.mxu0 0.0
      %3579 = vmatprep.subr.mxu0 0.0
      %3580 = vmatpush2.msra.mxu0 0.0
      %3581 = vmatprep.subr.mxu0 0.0
      %3582 = vmatpush2.msra.mxu0 0.0
      %3583 = vmatprep.subr.mxu0 0.0
      %3584 = vmatpush2.msra.mxu0 0.0
      %3585 = vmatprep.subr.mxu0 0.0
      %3586 = vmatpush2.msra.mxu0 0.0
      %3587 = vmatprep.subr.mxu0 0.0
      %3588 = vmatpush2.msra.mxu0 0.0
      %3589 = vmatprep.subr.mxu0 0.0
      %3590 = vmatpush2.msra.mxu0 0.0
      %3591 = vmatprep.subr.mxu0 0.0
      %3592 = vmatpush2.msra.mxu0 0.0
      %3593 = vmatprep.subr.mxu0 0.0
      %3594 = vmatpush2.msra.mxu0 0.0
      %3595 = vmatprep.subr.mxu0 0.0
      %3596 = vmatpush2.msra.mxu0 0.0
      %3597 = vmatprep.mubr.f32.mxu0 0.0
      %3598 = vmatmul.mubr.f32.gmra.mxu0 %v3531
      %v3599 = vpop.f32.mrf.mxu0
      %v3600 = vadd.f32 0.0, %v3599
      %v3601 = vpop.f32.mrf.mxu0
      %3602 = vdwg.mxu0
      %v3603 = vadd.f32 %v3524, %v3600
      %v3604 = vmax.f32 %v3603, 0.0
      %3605 = vrot.lane.b32.xlu0 %v3190, 8
      %v3606 = vpop.permute.xlu0 %3605
      %v3608 = vsel %vm345, %v3604, %v3606
      %v3610 = vsel %vm507, %v3608, 0
      %3612 = vmatprep.subr.mxu0 0.0
      %3613 = vmatpush1.msra.mxu0 0.0
      %3614 = vmatprep.subr.mxu0 0.0
      %3615 = vmatpush1.msra.mxu0 0.0
      %3616 = vmatprep.subr.mxu0 0.0
      %3617 = vmatpush1.msra.mxu0 0.0
      %3618 = vmatprep.subr.mxu0 0.0
      %3619 = vmatpush1.msra.mxu0 0.0
      %3620 = vmatprep.subr.mxu0 0.0
      %3621 = vmatpush1.msra.mxu0 0.0
      %3622 = vmatprep.subr.mxu0 0.0
      %3623 = vmatpush1.msra.mxu0 0.0
      %3624 = vmatprep.subr.mxu0 0.0
      %3625 = vmatpush1.msra.mxu0 0.0
      %3626 = vmatprep.subr.mxu0 0.0
      %3627 = vmatpush1.msra.mxu0 0.0
      %3628 = vmatprep.subr.mxu0 0.0
      %3629 = vmatpush1.msra.mxu0 0.0
      %3630 = vmatprep.subr.mxu0 0.0
      %3631 = vmatpush1.msra.mxu0 0.0
      %3632 = vmatprep.subr.mxu0 0.0
      %3633 = vmatpush1.msra.mxu0 0.0
      %3634 = vmatprep.subr.mxu0 0.0
      %3635 = vmatpush1.msra.mxu0 %v242
      %3636 = vmatprep.subr.mxu0 0.0
      %3637 = vmatpush1.msra.mxu0 %v241
      %3638 = vmatprep.subr.mxu0 0.0
      %3639 = vmatpush1.msra.mxu0 %v240
      %3640 = vmatprep.subr.mxu0 0.0
      %3641 = vmatpush1.msra.mxu0 %v239
      %3642 = vmatprep.subr.mxu0 0.0
      %3643 = vmatpush1.msra.mxu0 %v238
      %3644 = vmatprep.subr.mxu0 0.0
      %3645 = vmatpush2.msra.mxu0 0.0
      %3646 = vmatprep.subr.mxu0 0.0
      %3647 = vmatpush2.msra.mxu0 0.0
      %3648 = vmatprep.subr.mxu0 0.0
      %3649 = vmatpush2.msra.mxu0 0.0
      %3650 = vmatprep.subr.mxu0 0.0
      %3651 = vmatpush2.msra.mxu0 0.0
      %3652 = vmatprep.subr.mxu0 0.0
      %3653 = vmatpush2.msra.mxu0 0.0
      %3654 = vmatprep.subr.mxu0 0.0
      %3655 = vmatpush2.msra.mxu0 0.0
      %3656 = vmatprep.subr.mxu0 0.0
      %3657 = vmatpush2.msra.mxu0 0.0
      %3658 = vmatprep.subr.mxu0 0.0
      %3659 = vmatpush2.msra.mxu0 0.0
      %3660 = vmatprep.subr.mxu0 0.0
      %3661 = vmatpush2.msra.mxu0 0.0
      %3662 = vmatprep.subr.mxu0 0.0
      %3663 = vmatpush2.msra.mxu0 0.0
      %3664 = vmatprep.subr.mxu0 0.0
      %3665 = vmatpush2.msra.mxu0 0.0
      %3666 = vmatprep.subr.mxu0 0.0
      %3667 = vmatpush2.msra.mxu0 0.0
      %3668 = vmatprep.subr.mxu0 0.0
      %3669 = vmatpush2.msra.mxu0 0.0
      %3670 = vmatprep.subr.mxu0 0.0
      %3671 = vmatpush2.msra.mxu0 0.0
      %3672 = vmatprep.subr.mxu0 0.0
      %3673 = vmatpush2.msra.mxu0 0.0
      %3674 = vmatprep.subr.mxu0 0.0
      %3675 = vmatpush2.msra.mxu0 0.0
      %3676 = vmatprep.mubr.f32.mxu0 0.0
      %3677 = vmatmul.mubr.f32.gmra.mxu0 %v3610
      %v3678 = vpop.f32.mrf.mxu0
      %v3679 = vadd.f32 %v506, %v3678
      %v3680 = vpop.f32.mrf.mxu0
      %3681 = vdwg.mxu0
      %v3682 = vxor.u32 %v3679, 2147483648
      %v3683 = vmul.f32 %v3682, 1.442695
      %v3684 = vpow.pop %v3683
      %v3685 = vadd.f32 %v3684, 1.0
      %v3686 = vrcp.pop %v3685
      %v3687 = vmul.f32 1.0, %v3686
      %v3688 = vtanh.pop %v3679
      %v3689 = vmul.f32 %v3687, %v3184
      %3691 = vrot.lane.b32.xlu0 %v3688, 112
      %v3692 = vpop.permute.xlu0 %3691
      %v3694 = vmul.f32 %v3687, %v3692
      %3696 = vrot.lane.b32.xlu0 %v3694, 8
      %v3697 = vpop.permute.xlu0 %3696
      %v3699 = vadd.f32 %v3689, %v3697
      %v3700 = vtanh.pop %v3699
      %3702 = vrot.lane.b32.xlu0 %v3700, 16
      %v3703 = vpop.permute.xlu0 %3702
      %v3705 = vmul.f32 %v3687, %v3703
      %3707 = vrot.lane.b32.xlu0 %v3705, 104
      %v3708 = vpop.permute.xlu0 %3707
      %v3709 = vsel %vm612, %v3708, 0
      %3711 = vmatprep.subr.mxu0 0.0
      %3712 = vmatpush1.msra.mxu0 0.0
      %3713 = vmatprep.subr.mxu0 0.0
      %3714 = vmatpush1.msra.mxu0 0.0
      %3715 = vmatprep.subr.mxu0 0.0
      %3716 = vmatpush1.msra.mxu0 0.0
      %3717 = vmatprep.subr.mxu0 0.0
      %3718 = vmatpush1.msra.mxu0 0.0
      %3719 = vmatprep.subr.mxu0 0.0
      %3720 = vmatpush1.msra.mxu0 0.0
      %3721 = vmatprep.subr.mxu0 0.0
      %3722 = vmatpush1.msra.mxu0 0.0
      %3723 = vmatprep.subr.mxu0 0.0
      %3724 = vmatpush1.msra.mxu0 0.0
      %3725 = vmatprep.subr.mxu0 0.0
      %3726 = vmatpush1.msra.mxu0 0.0
      %3727 = vmatprep.subr.mxu0 0.0
      %3728 = vmatpush1.msra.mxu0 0.0
      %3729 = vmatprep.subr.mxu0 0.0
      %3730 = vmatpush1.msra.mxu0 0.0
      %3731 = vmatprep.subr.mxu0 0.0
      %3732 = vmatpush1.msra.mxu0 0.0
      %3733 = vmatprep.subr.mxu0 0.0
      %3734 = vmatpush1.msra.mxu0 0.0
      %3735 = vmatprep.subr.mxu0 0.0
      %3736 = vmatpush1.msra.mxu0 0.0
      %3737 = vmatprep.subr.mxu0 0.0
      %3738 = vmatpush1.msra.mxu0 0.0
      %3739 = vmatprep.subr.mxu0 0.0
      %3740 = vmatpush1.msra.mxu0 0.0
      %3741 = vmatprep.subr.mxu0 0.0
      %3742 = vmatpush1.msra.mxu0 %v244
      %3743 = vmatprep.subr.mxu0 0.0
      %3744 = vmatpush2.msra.mxu0 0.0
      %3745 = vmatprep.subr.mxu0 0.0
      %3746 = vmatpush2.msra.mxu0 0.0
      %3747 = vmatprep.subr.mxu0 0.0
      %3748 = vmatpush2.msra.mxu0 0.0
      %3749 = vmatprep.subr.mxu0 0.0
      %3750 = vmatpush2.msra.mxu0 0.0
      %3751 = vmatprep.subr.mxu0 0.0
      %3752 = vmatpush2.msra.mxu0 0.0
      %3753 = vmatprep.subr.mxu0 0.0
      %3754 = vmatpush2.msra.mxu0 0.0
      %3755 = vmatprep.subr.mxu0 0.0
      %3756 = vmatpush2.msra.mxu0 0.0
      %3757 = vmatprep.subr.mxu0 0.0
      %3758 = vmatpush2.msra.mxu0 0.0
      %3759 = vmatprep.subr.mxu0 0.0
      %3760 = vmatpush2.msra.mxu0 0.0
      %3761 = vmatprep.subr.mxu0 0.0
      %3762 = vmatpush2.msra.mxu0 0.0
      %3763 = vmatprep.subr.mxu0 0.0
      %3764 = vmatpush2.msra.mxu0 0.0
      %3765 = vmatprep.subr.mxu0 0.0
      %3766 = vmatpush2.msra.mxu0 0.0
      %3767 = vmatprep.subr.mxu0 0.0
      %3768 = vmatpush2.msra.mxu0 0.0
      %3769 = vmatprep.subr.mxu0 0.0
      %3770 = vmatpush2.msra.mxu0 0.0
      %3771 = vmatprep.subr.mxu0 0.0
      %3772 = vmatpush2.msra.mxu0 0.0
      %3773 = vmatprep.subr.mxu0 0.0
      %3774 = vmatpush2.msra.mxu0 0.0
      %3775 = vmatprep.mubr.f32.mxu0 0.0
      %3776 = vmatmul.mubr.f32.gmra.mxu0 %v3709
      %v3777 = vpop.f32.mrf.mxu0
      %v3778 = vadd.f32 %v608, %v3777
      %v3779 = vpop.f32.mrf.mxu0
      %3780 = vdwg.mxu0
      %v3781 = vxor.u32 %v3778, 2147483648
      %v3782 = vmul.f32 %v3781, 1.442695
      %v3783 = vpow.pop %v3782
      %v3784 = vadd.f32 %v3783, 1.0
      %v3785 = vrcp.pop %v3784
      %v3786 = vmul.f32 1.0, %v3785
      %v3788 = vsel %vm423, %v3778, 0
      %3790 = vmatprep.subr.mxu0 0.0
      %3791 = vmatpush1.msra.mxu0 0.0
      %3792 = vmatprep.subr.mxu0 0.0
      %3793 = vmatpush1.msra.mxu0 0.0
      %3794 = vmatprep.subr.mxu0 0.0
      %3795 = vmatpush1.msra.mxu0 0.0
      %3796 = vmatprep.subr.mxu0 0.0
      %3797 = vmatpush1.msra.mxu0 0.0
      %3798 = vmatprep.subr.mxu0 0.0
      %3799 = vmatpush1.msra.mxu0 0.0
      %3800 = vmatprep.subr.mxu0 0.0
      %3801 = vmatpush1.msra.mxu0 0.0
      %3802 = vmatprep.subr.mxu0 0.0
      %3803 = vmatpush1.msra.mxu0 0.0
      %3804 = vmatprep.subr.mxu0 0.0
      %3805 = vmatpush1.msra.mxu0 0.0
      %3806 = vmatprep.subr.mxu0 0.0
      %3807 = vmatpush1.msra.mxu0 0.0
      %3808 = vmatprep.subr.mxu0 0.0
      %3809 = vmatpush1.msra.mxu0 0.0
      %3810 = vmatprep.subr.mxu0 0.0
      %3811 = vmatpush1.msra.mxu0 0.0
      %3812 = vmatprep.subr.mxu0 0.0
      %3813 = vmatpush1.msra.mxu0 0.0
      %3814 = vmatprep.subr.mxu0 0.0
      %3815 = vmatpush1.msra.mxu0 0.0
      %3816 = vmatprep.subr.mxu0 0.0
      %3817 = vmatpush1.msra.mxu0 0.0
      %3818 = vmatprep.subr.mxu0 0.0
      %3819 = vmatpush1.msra.mxu0 %v247
      %3820 = vmatprep.subr.mxu0 0.0
      %3821 = vmatpush1.msra.mxu0 %v246
      %3822 = vmatprep.subr.mxu0 0.0
      %3823 = vmatpush2.msra.mxu0 0.0
      %3824 = vmatprep.subr.mxu0 0.0
      %3825 = vmatpush2.msra.mxu0 0.0
      %3826 = vmatprep.subr.mxu0 0.0
      %3827 = vmatpush2.msra.mxu0 0.0
      %3828 = vmatprep.subr.mxu0 0.0
      %3829 = vmatpush2.msra.mxu0 0.0
      %3830 = vmatprep.subr.mxu0 0.0
      %3831 = vmatpush2.msra.mxu0 0.0
      %3832 = vmatprep.subr.mxu0 0.0
      %3833 = vmatpush2.msra.mxu0 0.0
      %3834 = vmatprep.subr.mxu0 0.0
      %3835 = vmatpush2.msra.mxu0 0.0
      %3836 = vmatprep.subr.mxu0 0.0
      %3837 = vmatpush2.msra.mxu0 0.0
      %3838 = vmatprep.subr.mxu0 0.0
      %3839 = vmatpush2.msra.mxu0 0.0
      %3840 = vmatprep.subr.mxu0 0.0
      %3841 = vmatpush2.msra.mxu0 0.0
      %3842 = vmatprep.subr.mxu0 0.0
      %3843 = vmatpush2.msra.mxu0 0.0
      %3844 = vmatprep.subr.mxu0 0.0
      %3845 = vmatpush2.msra.mxu0 0.0
      %3846 = vmatprep.subr.mxu0 0.0
      %3847 = vmatpush2.msra.mxu0 0.0
      %3848 = vmatprep.subr.mxu0 0.0
      %3849 = vmatpush2.msra.mxu0 0.0
      %3850 = vmatprep.subr.mxu0 0.0
      %3851 = vmatpush2.msra.mxu0 0.0
      %3852 = vmatprep.subr.mxu0 0.0
      %3853 = vmatpush2.msra.mxu0 0.0
      %3854 = vmatprep.mubr.f32.mxu0 0.0
      %3855 = vmatmul.mubr.f32.gmra.mxu0 %v3788
      %v3856 = vpop.f32.mrf.mxu0
      %v3857 = vadd.f32 %v694, %v3856
      %v3858 = vpop.f32.mrf.mxu0
      %3859 = vdwg.mxu0
      %v3860 = vsel %vm423, %v3857, -inf
      %3861 = vmax.xlane.f32.xlu0 %v3860
      %v3862 = vpop.xlane.xlu0 %3861
      %v3863 = vsub.f32 %v3857, %v3862
      %v3864 = vmul.f32 %v3863, 1.442695
      %v3865 = vpow.pop %v3864
      %v3866 = vsel %vm423, %v3865, 0.0
      %3867 = vadd.xlane.f32.xlu0 %v3866
      %v3868 = vpop.xlane.xlu0 %3867
      %v3869 = vrcp.pop %v3868
      %v3870 = vmul.f32 %v3865, %v3869
      %3871 = vrot.lane.b32.xlu0 %v3705, 120
      %v3872 = vpop.permute.xlu0 %3871
      %3875 = vrot.lane.b32.xlu0 %v3699, 16
      %v3876 = vpop.permute.xlu0 %3875
      %3879 = vrot.lane.b32.xlu0 %v3786, 16
      %v3880 = vpop.permute.xlu0 %3879
      %3883 = vrot.lane.b32.xlu0 %v3857, 17
      %v3884 = vpop.permute.xlu0 %3883
      %v3886 = vsel %vm423, %v3870, %v3872
      %v3887 = vsel %vm795, %v3886, %v3876
      %v3888 = vsel %vm345, %v3887, %v3880
      %v3889 = vsel %vm798, %v3888, %v3884
      %v3890 = vsel %vm800, %v3889, 0.0
      %s3891 = scalar_lea.vmem %s225, 48
      %3892 = vst [vmem:[%s3891] sm:$0xff] %v3890
      %s3893 = scalar_lea.vmem %s211, 56
      %v3894 = vld [vmem:[%s3893] sm:$0xff]
      %v3896 = vsel %vm262, %v3894, 0
      %3898 = vmatprep.subr.mxu0 0.0
      %3899 = vmatpush1.msra.mxu0 0.0
      %3900 = vmatprep.subr.mxu0 0.0
      %3901 = vmatpush1.msra.mxu0 0.0
      %3902 = vmatprep.subr.mxu0 0.0
      %3903 = vmatpush1.msra.mxu0 0.0
      %3904 = vmatprep.subr.mxu0 0.0
      %3905 = vmatpush1.msra.mxu0 0.0
      %3906 = vmatprep.subr.mxu0 0.0
      %3907 = vmatpush1.msra.mxu0 0.0
      %3908 = vmatprep.subr.mxu0 0.0
      %3909 = vmatpush1.msra.mxu0 0.0
      %3910 = vmatprep.subr.mxu0 0.0
      %3911 = vmatpush1.msra.mxu0 0.0
      %3912 = vmatprep.subr.mxu0 0.0
      %3913 = vmatpush1.msra.mxu0 0.0
      %3914 = vmatprep.subr.mxu0 0.0
      %3915 = vmatpush1.msra.mxu0 0.0
      %3916 = vmatprep.subr.mxu0 0.0
      %3917 = vmatpush1.msra.mxu0 0.0
      %3918 = vmatprep.subr.mxu0 0.0
      %3919 = vmatpush1.msra.mxu0 0.0
      %3920 = vmatprep.subr.mxu0 0.0
      %3921 = vmatpush1.msra.mxu0 0.0
      %3922 = vmatprep.subr.mxu0 0.0
      %3923 = vmatpush1.msra.mxu0 0.0
      %3924 = vmatprep.subr.mxu0 0.0
      %3925 = vmatpush1.msra.mxu0 %v268
      %3926 = vmatprep.subr.mxu0 0.0
      %3927 = vmatpush1.msra.mxu0 %v228
      %3928 = vmatprep.subr.mxu0 0.0
      %3929 = vmatpush1.msra.mxu0 %v227
      %3930 = vmatprep.subr.mxu0 0.0
      %3931 = vmatpush2.msra.mxu0 0.0
      %3932 = vmatprep.subr.mxu0 0.0
      %3933 = vmatpush2.msra.mxu0 0.0
      %3934 = vmatprep.subr.mxu0 0.0
      %3935 = vmatpush2.msra.mxu0 0.0
      %3936 = vmatprep.subr.mxu0 0.0
      %3937 = vmatpush2.msra.mxu0 0.0
      %3938 = vmatprep.subr.mxu0 0.0
      %3939 = vmatpush2.msra.mxu0 0.0
      %3940 = vmatprep.subr.mxu0 0.0
      %3941 = vmatpush2.msra.mxu0 0.0
      %3942 = vmatprep.subr.mxu0 0.0
      %3943 = vmatpush2.msra.mxu0 0.0
      %3944 = vmatprep.subr.mxu0 0.0
      %3945 = vmatpush2.msra.mxu0 0.0
      %3946 = vmatprep.subr.mxu0 0.0
      %3947 = vmatpush2.msra.mxu0 0.0
      %3948 = vmatprep.subr.mxu0 0.0
      %3949 = vmatpush2.msra.mxu0 0.0
      %3950 = vmatprep.subr.mxu0 0.0
      %3951 = vmatpush2.msra.mxu0 0.0
      %3952 = vmatprep.subr.mxu0 0.0
      %3953 = vmatpush2.msra.mxu0 0.0
      %3954 = vmatprep.subr.mxu0 0.0
      %3955 = vmatpush2.msra.mxu0 0.0
      %3956 = vmatprep.subr.mxu0 0.0
      %3957 = vmatpush2.msra.mxu0 0.0
      %3958 = vmatprep.subr.mxu0 0.0
      %3959 = vmatpush2.msra.mxu0 0.0
      %3960 = vmatprep.subr.mxu0 0.0
      %3961 = vmatpush2.msra.mxu0 0.0
      %3962 = vmatprep.mubr.f32.mxu0 0.0
      %3963 = vmatmul.mubr.f32.gmra.mxu0 %v3896
      %v3964 = vpop.f32.mrf.mxu0
      %v3965 = vadd.f32 %v261, %v3964
      %v3966 = vpop.f32.mrf.mxu0
      %3967 = vdwg.mxu0
      %v3968 = vmax.f32 %v3965, 0.0
      %v3970 = vsel %vm345, %v3968, 0
      %3972 = vmatprep.subr.mxu0 0.0
      %3973 = vmatpush1.msra.mxu0 0.0
      %3974 = vmatprep.subr.mxu0 0.0
      %3975 = vmatpush1.msra.mxu0 0.0
      %3976 = vmatprep.subr.mxu0 0.0
      %3977 = vmatpush1.msra.mxu0 0.0
      %3978 = vmatprep.subr.mxu0 0.0
      %3979 = vmatpush1.msra.mxu0 0.0
      %3980 = vmatprep.subr.mxu0 0.0
      %3981 = vmatpush1.msra.mxu0 0.0
      %3982 = vmatprep.subr.mxu0 0.0
      %3983 = vmatpush1.msra.mxu0 0.0
      %3984 = vmatprep.subr.mxu0 0.0
      %3985 = vmatpush1.msra.mxu0 0.0
      %3986 = vmatprep.subr.mxu0 0.0
      %3987 = vmatpush1.msra.mxu0 0.0
      %3988 = vmatprep.subr.mxu0 0.0
      %3989 = vmatpush1.msra.mxu0 0.0
      %3990 = vmatprep.subr.mxu0 0.0
      %3991 = vmatpush1.msra.mxu0 0.0
      %3992 = vmatprep.subr.mxu0 0.0
      %3993 = vmatpush1.msra.mxu0 0.0
      %3994 = vmatprep.subr.mxu0 0.0
      %3995 = vmatpush1.msra.mxu0 0.0
      %3996 = vmatprep.subr.mxu0 0.0
      %3997 = vmatpush1.msra.mxu0 %v234
      %3998 = vmatprep.subr.mxu0 0.0
      %3999 = vmatpush1.msra.mxu0 %v233
      %4000 = vmatprep.subr.mxu0 0.0
      %4001 = vmatpush1.msra.mxu0 %v232
      %4002 = vmatprep.subr.mxu0 0.0
      %4003 = vmatpush1.msra.mxu0 %v231
      %4004 = vmatprep.subr.mxu0 0.0
      %4005 = vmatpush2.msra.mxu0 0.0
      %4006 = vmatprep.subr.mxu0 0.0
      %4007 = vmatpush2.msra.mxu0 0.0
      %4008 = vmatprep.subr.mxu0 0.0
      %4009 = vmatpush2.msra.mxu0 0.0
      %4010 = vmatprep.subr.mxu0 0.0
      %4011 = vmatpush2.msra.mxu0 0.0
      %4012 = vmatprep.subr.mxu0 0.0
      %4013 = vmatpush2.msra.mxu0 0.0
      %4014 = vmatprep.subr.mxu0 0.0
      %4015 = vmatpush2.msra.mxu0 0.0
      %4016 = vmatprep.subr.mxu0 0.0
      %4017 = vmatpush2.msra.mxu0 0.0
      %4018 = vmatprep.subr.mxu0 0.0
      %4019 = vmatpush2.msra.mxu0 0.0
      %4020 = vmatprep.subr.mxu0 0.0
      %4021 = vmatpush2.msra.mxu0 0.0
      %4022 = vmatprep.subr.mxu0 0.0
      %4023 = vmatpush2.msra.mxu0 0.0
      %4024 = vmatprep.subr.mxu0 0.0
      %4025 = vmatpush2.msra.mxu0 0.0
      %4026 = vmatprep.subr.mxu0 0.0
      %4027 = vmatpush2.msra.mxu0 0.0
      %4028 = vmatprep.subr.mxu0 0.0
      %4029 = vmatpush2.msra.mxu0 0.0
      %4030 = vmatprep.subr.mxu0 0.0
      %4031 = vmatpush2.msra.mxu0 0.0
      %4032 = vmatprep.subr.mxu0 0.0
      %4033 = vmatpush2.msra.mxu0 0.0
      %4034 = vmatprep.subr.mxu0 0.0
      %4035 = vmatpush2.msra.mxu0 0.0
      %4036 = vmatprep.mubr.f32.mxu0 0.0
      %4037 = vmatmul.mubr.f32.gmra.mxu0 %v3970
      %v4038 = vpop.f32.mrf.mxu0
      %v4039 = vadd.f32 %v344, %v4038
      %v4040 = vpop.f32.mrf.mxu0
      %4041 = vdwg.mxu0
      %v4042 = vmax.f32 %v4039, 0.0
      %4044 = vrot.lane.b32.xlu0 %v4042, 96
      %v4045 = vpop.permute.xlu0 %4044
      %v4046 = vsel %vm423, %v4045, 0
      %4048 = vmatprep.subr.mxu0 0.0
      %4049 = vmatpush1.msra.mxu0 0.0
      %4050 = vmatprep.subr.mxu0 0.0
      %4051 = vmatpush1.msra.mxu0 0.0
      %4052 = vmatprep.subr.mxu0 0.0
      %4053 = vmatpush1.msra.mxu0 0.0
      %4054 = vmatprep.subr.mxu0 0.0
      %4055 = vmatpush1.msra.mxu0 0.0
      %4056 = vmatprep.subr.mxu0 0.0
      %4057 = vmatpush1.msra.mxu0 0.0
      %4058 = vmatprep.subr.mxu0 0.0
      %4059 = vmatpush1.msra.mxu0 0.0
      %4060 = vmatprep.subr.mxu0 0.0
      %4061 = vmatpush1.msra.mxu0 0.0
      %4062 = vmatprep.subr.mxu0 0.0
      %4063 = vmatpush1.msra.mxu0 0.0
      %4064 = vmatprep.subr.mxu0 0.0
      %4065 = vmatpush1.msra.mxu0 0.0
      %4066 = vmatprep.subr.mxu0 0.0
      %4067 = vmatpush1.msra.mxu0 0.0
      %4068 = vmatprep.subr.mxu0 0.0
      %4069 = vmatpush1.msra.mxu0 0.0
      %4070 = vmatprep.subr.mxu0 0.0
      %4071 = vmatpush1.msra.mxu0 0.0
      %4072 = vmatprep.subr.mxu0 0.0
      %4073 = vmatpush1.msra.mxu0 0.0
      %4074 = vmatprep.subr.mxu0 0.0
      %4075 = vmatpush1.msra.mxu0 0.0
      %4076 = vmatprep.subr.mxu0 0.0
      %4077 = vmatpush1.msra.mxu0 %v237
      %4078 = vmatprep.subr.mxu0 0.0
      %4079 = vmatpush1.msra.mxu0 %v236
      %4080 = vmatprep.subr.mxu0 0.0
      %4081 = vmatpush2.msra.mxu0 0.0
      %4082 = vmatprep.subr.mxu0 0.0
      %4083 = vmatpush2.msra.mxu0 0.0
      %4084 = vmatprep.subr.mxu0 0.0
      %4085 = vmatpush2.msra.mxu0 0.0
      %4086 = vmatprep.subr.mxu0 0.0
      %4087 = vmatpush2.msra.mxu0 0.0
      %4088 = vmatprep.subr.mxu0 0.0
      %4089 = vmatpush2.msra.mxu0 0.0
      %4090 = vmatprep.subr.mxu0 0.0
      %4091 = vmatpush2.msra.mxu0 0.0
      %4092 = vmatprep.subr.mxu0 0.0
      %4093 = vmatpush2.msra.mxu0 0.0
      %4094 = vmatprep.subr.mxu0 0.0
      %4095 = vmatpush2.msra.mxu0 0.0
      %4096 = vmatprep.subr.mxu0 0.0
      %4097 = vmatpush2.msra.mxu0 0.0
      %4098 = vmatprep.subr.mxu0 0.0
      %4099 = vmatpush2.msra.mxu0 0.0
      %4100 = vmatprep.subr.mxu0 0.0
      %4101 = vmatpush2.msra.mxu0 0.0
      %4102 = vmatprep.subr.mxu0 0.0
      %4103 = vmatpush2.msra.mxu0 0.0
      %4104 = vmatprep.subr.mxu0 0.0
      %4105 = vmatpush2.msra.mxu0 0.0
      %4106 = vmatprep.subr.mxu0 0.0
      %4107 = vmatpush2.msra.mxu0 0.0
      %4108 = vmatprep.subr.mxu0 0.0
      %4109 = vmatpush2.msra.mxu0 0.0
      %4110 = vmatprep.subr.mxu0 0.0
      %4111 = vmatpush2.msra.mxu0 0.0
      %4112 = vmatprep.mubr.f32.mxu0 0.0
      %4113 = vmatmul.mubr.f32.gmra.mxu0 %v4046
      %v4114 = vpop.f32.mrf.mxu0
      %v4115 = vadd.f32 0.0, %v4114
      %v4116 = vpop.f32.mrf.mxu0
      %4117 = vdwg.mxu0
      %v4118 = vadd.f32 %v4039, %v4115
      %v4119 = vmax.f32 %v4118, 0.0
      %4120 = vrot.lane.b32.xlu0 %v3705, 8
      %v4121 = vpop.permute.xlu0 %4120
      %v4123 = vsel %vm345, %v4119, %v4121
      %v4125 = vsel %vm507, %v4123, 0
      %4127 = vmatprep.subr.mxu0 0.0
      %4128 = vmatpush1.msra.mxu0 0.0
      %4129 = vmatprep.subr.mxu0 0.0
      %4130 = vmatpush1.msra.mxu0 0.0
      %4131 = vmatprep.subr.mxu0 0.0
      %4132 = vmatpush1.msra.mxu0 0.0
      %4133 = vmatprep.subr.mxu0 0.0
      %4134 = vmatpush1.msra.mxu0 0.0
      %4135 = vmatprep.subr.mxu0 0.0
      %4136 = vmatpush1.msra.mxu0 0.0
      %4137 = vmatprep.subr.mxu0 0.0
      %4138 = vmatpush1.msra.mxu0 0.0
      %4139 = vmatprep.subr.mxu0 0.0
      %4140 = vmatpush1.msra.mxu0 0.0
      %4141 = vmatprep.subr.mxu0 0.0
      %4142 = vmatpush1.msra.mxu0 0.0
      %4143 = vmatprep.subr.mxu0 0.0
      %4144 = vmatpush1.msra.mxu0 0.0
      %4145 = vmatprep.subr.mxu0 0.0
      %4146 = vmatpush1.msra.mxu0 0.0
      %4147 = vmatprep.subr.mxu0 0.0
      %4148 = vmatpush1.msra.mxu0 0.0
      %4149 = vmatprep.subr.mxu0 0.0
      %4150 = vmatpush1.msra.mxu0 %v242
      %4151 = vmatprep.subr.mxu0 0.0
      %4152 = vmatpush1.msra.mxu0 %v241
      %4153 = vmatprep.subr.mxu0 0.0
      %4154 = vmatpush1.msra.mxu0 %v240
      %4155 = vmatprep.subr.mxu0 0.0
      %4156 = vmatpush1.msra.mxu0 %v239
      %4157 = vmatprep.subr.mxu0 0.0
      %4158 = vmatpush1.msra.mxu0 %v238
      %4159 = vmatprep.subr.mxu0 0.0
      %4160 = vmatpush2.msra.mxu0 0.0
      %4161 = vmatprep.subr.mxu0 0.0
      %4162 = vmatpush2.msra.mxu0 0.0
      %4163 = vmatprep.subr.mxu0 0.0
      %4164 = vmatpush2.msra.mxu0 0.0
      %4165 = vmatprep.subr.mxu0 0.0
      %4166 = vmatpush2.msra.mxu0 0.0
      %4167 = vmatprep.subr.mxu0 0.0
      %4168 = vmatpush2.msra.mxu0 0.0
      %4169 = vmatprep.subr.mxu0 0.0
      %4170 = vmatpush2.msra.mxu0 0.0
      %4171 = vmatprep.subr.mxu0 0.0
      %4172 = vmatpush2.msra.mxu0 0.0
      %4173 = vmatprep.subr.mxu0 0.0
      %4174 = vmatpush2.msra.mxu0 0.0
      %4175 = vmatprep.subr.mxu0 0.0
      %4176 = vmatpush2.msra.mxu0 0.0
      %4177 = vmatprep.subr.mxu0 0.0
      %4178 = vmatpush2.msra.mxu0 0.0
      %4179 = vmatprep.subr.mxu0 0.0
      %4180 = vmatpush2.msra.mxu0 0.0
      %4181 = vmatprep.subr.mxu0 0.0
      %4182 = vmatpush2.msra.mxu0 0.0
      %4183 = vmatprep.subr.mxu0 0.0
      %4184 = vmatpush2.msra.mxu0 0.0
      %4185 = vmatprep.subr.mxu0 0.0
      %4186 = vmatpush2.msra.mxu0 0.0
      %4187 = vmatprep.subr.mxu0 0.0
      %4188 = vmatpush2.msra.mxu0 0.0
      %4189 = vmatprep.subr.mxu0 0.0
      %4190 = vmatpush2.msra.mxu0 0.0
      %4191 = vmatprep.mubr.f32.mxu0 0.0
      %4192 = vmatmul.mubr.f32.gmra.mxu0 %v4125
      %v4193 = vpop.f32.mrf.mxu0
      %v4194 = vadd.f32 %v506, %v4193
      %v4195 = vpop.f32.mrf.mxu0
      %4196 = vdwg.mxu0
      %v4197 = vxor.u32 %v4194, 2147483648
      %v4198 = vmul.f32 %v4197, 1.442695
      %v4199 = vpow.pop %v4198
      %v4200 = vadd.f32 %v4199, 1.0
      %v4201 = vrcp.pop %v4200
      %v4202 = vmul.f32 1.0, %v4201
      %v4203 = vtanh.pop %v4194
      %v4204 = vmul.f32 %v4202, %v3699
      %4206 = vrot.lane.b32.xlu0 %v4203, 112
      %v4207 = vpop.permute.xlu0 %4206
      %v4209 = vmul.f32 %v4202, %v4207
      %4211 = vrot.lane.b32.xlu0 %v4209, 8
      %v4212 = vpop.permute.xlu0 %4211
      %v4214 = vadd.f32 %v4204, %v4212
      %v4215 = vtanh.pop %v4214
      %4217 = vrot.lane.b32.xlu0 %v4215, 16
      %v4218 = vpop.permute.xlu0 %4217
      %v4220 = vmul.f32 %v4202, %v4218
      %4222 = vrot.lane.b32.xlu0 %v4220, 104
      %v4223 = vpop.permute.xlu0 %4222
      %v4224 = vsel %vm612, %v4223, 0
      %4226 = vmatprep.subr.mxu0 0.0
      %4227 = vmatpush1.msra.mxu0 0.0
      %4228 = vmatprep.subr.mxu0 0.0
      %4229 = vmatpush1.msra.mxu0 0.0
      %4230 = vmatprep.subr.mxu0 0.0
      %4231 = vmatpush1.msra.mxu0 0.0
      %4232 = vmatprep.subr.mxu0 0.0
      %4233 = vmatpush1.msra.mxu0 0.0
      %4234 = vmatprep.subr.mxu0 0.0
      %4235 = vmatpush1.msra.mxu0 0.0
      %4236 = vmatprep.subr.mxu0 0.0
      %4237 = vmatpush1.msra.mxu0 0.0
      %4238 = vmatprep.subr.mxu0 0.0
      %4239 = vmatpush1.msra.mxu0 0.0
      %4240 = vmatprep.subr.mxu0 0.0
      %4241 = vmatpush1.msra.mxu0 0.0
      %4242 = vmatprep.subr.mxu0 0.0
      %4243 = vmatpush1.msra.mxu0 0.0
      %4244 = vmatprep.subr.mxu0 0.0
      %4245 = vmatpush1.msra.mxu0 0.0
      %4246 = vmatprep.subr.mxu0 0.0
      %4247 = vmatpush1.msra.mxu0 0.0
      %4248 = vmatprep.subr.mxu0 0.0
      %4249 = vmatpush1.msra.mxu0 0.0
      %4250 = vmatprep.subr.mxu0 0.0
      %4251 = vmatpush1.msra.mxu0 0.0
      %4252 = vmatprep.subr.mxu0 0.0
      %4253 = vmatpush1.msra.mxu0 0.0
      %4254 = vmatprep.subr.mxu0 0.0
      %4255 = vmatpush1.msra.mxu0 0.0
      %4256 = vmatprep.subr.mxu0 0.0
      %4257 = vmatpush1.msra.mxu0 %v244
      %4258 = vmatprep.subr.mxu0 0.0
      %4259 = vmatpush2.msra.mxu0 0.0
      %4260 = vmatprep.subr.mxu0 0.0
      %4261 = vmatpush2.msra.mxu0 0.0
      %4262 = vmatprep.subr.mxu0 0.0
      %4263 = vmatpush2.msra.mxu0 0.0
      %4264 = vmatprep.subr.mxu0 0.0
      %4265 = vmatpush2.msra.mxu0 0.0
      %4266 = vmatprep.subr.mxu0 0.0
      %4267 = vmatpush2.msra.mxu0 0.0
      %4268 = vmatprep.subr.mxu0 0.0
      %4269 = vmatpush2.msra.mxu0 0.0
      %4270 = vmatprep.subr.mxu0 0.0
      %4271 = vmatpush2.msra.mxu0 0.0
      %4272 = vmatprep.subr.mxu0 0.0
      %4273 = vmatpush2.msra.mxu0 0.0
      %4274 = vmatprep.subr.mxu0 0.0
      %4275 = vmatpush2.msra.mxu0 0.0
      %4276 = vmatprep.subr.mxu0 0.0
      %4277 = vmatpush2.msra.mxu0 0.0
      %4278 = vmatprep.subr.mxu0 0.0
      %4279 = vmatpush2.msra.mxu0 0.0
      %4280 = vmatprep.subr.mxu0 0.0
      %4281 = vmatpush2.msra.mxu0 0.0
      %4282 = vmatprep.subr.mxu0 0.0
      %4283 = vmatpush2.msra.mxu0 0.0
      %4284 = vmatprep.subr.mxu0 0.0
      %4285 = vmatpush2.msra.mxu0 0.0
      %4286 = vmatprep.subr.mxu0 0.0
      %4287 = vmatpush2.msra.mxu0 0.0
      %4288 = vmatprep.subr.mxu0 0.0
      %4289 = vmatpush2.msra.mxu0 0.0
      %4290 = vmatprep.mubr.f32.mxu0 0.0
      %4291 = vmatmul.mubr.f32.gmra.mxu0 %v4224
      %v4292 = vpop.f32.mrf.mxu0
      %v4293 = vadd.f32 %v608, %v4292
      %v4294 = vpop.f32.mrf.mxu0
      %4295 = vdwg.mxu0
      %v4296 = vxor.u32 %v4293, 2147483648
      %v4297 = vmul.f32 %v4296, 1.442695
      %v4298 = vpow.pop %v4297
      %v4299 = vadd.f32 %v4298, 1.0
      %v4300 = vrcp.pop %v4299
      %v4301 = vmul.f32 1.0, %v4300
      %v4303 = vsel %vm423, %v4293, 0
      %4305 = vmatprep.subr.mxu0 0.0
      %4306 = vmatpush1.msra.mxu0 0.0
      %4307 = vmatprep.subr.mxu0 0.0
      %4308 = vmatpush1.msra.mxu0 0.0
      %4309 = vmatprep.subr.mxu0 0.0
      %4310 = vmatpush1.msra.mxu0 0.0
      %4311 = vmatprep.subr.mxu0 0.0
      %4312 = vmatpush1.msra.mxu0 0.0
      %4313 = vmatprep.subr.mxu0 0.0
      %4314 = vmatpush1.msra.mxu0 0.0
      %4315 = vmatprep.subr.mxu0 0.0
      %4316 = vmatpush1.msra.mxu0 0.0
      %4317 = vmatprep.subr.mxu0 0.0
      %4318 = vmatpush1.msra.mxu0 0.0
      %4319 = vmatprep.subr.mxu0 0.0
      %4320 = vmatpush1.msra.mxu0 0.0
      %4321 = vmatprep.subr.mxu0 0.0
      %4322 = vmatpush1.msra.mxu0 0.0
      %4323 = vmatprep.subr.mxu0 0.0
      %4324 = vmatpush1.msra.mxu0 0.0
      %4325 = vmatprep.subr.mxu0 0.0
      %4326 = vmatpush1.msra.mxu0 0.0
      %4327 = vmatprep.subr.mxu0 0.0
      %4328 = vmatpush1.msra.mxu0 0.0
      %4329 = vmatprep.subr.mxu0 0.0
      %4330 = vmatpush1.msra.mxu0 0.0
      %4331 = vmatprep.subr.mxu0 0.0
      %4332 = vmatpush1.msra.mxu0 0.0
      %4333 = vmatprep.subr.mxu0 0.0
      %4334 = vmatpush1.msra.mxu0 %v247
      %4335 = vmatprep.subr.mxu0 0.0
      %4336 = vmatpush1.msra.mxu0 %v246
      %4337 = vmatprep.subr.mxu0 0.0
      %4338 = vmatpush2.msra.mxu0 0.0
      %4339 = vmatprep.subr.mxu0 0.0
      %4340 = vmatpush2.msra.mxu0 0.0
      %4341 = vmatprep.subr.mxu0 0.0
      %4342 = vmatpush2.msra.mxu0 0.0
      %4343 = vmatprep.subr.mxu0 0.0
      %4344 = vmatpush2.msra.mxu0 0.0
      %4345 = vmatprep.subr.mxu0 0.0
      %4346 = vmatpush2.msra.mxu0 0.0
      %4347 = vmatprep.subr.mxu0 0.0
      %4348 = vmatpush2.msra.mxu0 0.0
      %4349 = vmatprep.subr.mxu0 0.0
      %4350 = vmatpush2.msra.mxu0 0.0
      %4351 = vmatprep.subr.mxu0 0.0
      %4352 = vmatpush2.msra.mxu0 0.0
      %4353 = vmatprep.subr.mxu0 0.0
      %4354 = vmatpush2.msra.mxu0 0.0
      %4355 = vmatprep.subr.mxu0 0.0
      %4356 = vmatpush2.msra.mxu0 0.0
      %4357 = vmatprep.subr.mxu0 0.0
      %4358 = vmatpush2.msra.mxu0 0.0
      %4359 = vmatprep.subr.mxu0 0.0
      %4360 = vmatpush2.msra.mxu0 0.0
      %4361 = vmatprep.subr.mxu0 0.0
      %4362 = vmatpush2.msra.mxu0 0.0
      %4363 = vmatprep.subr.mxu0 0.0
      %4364 = vmatpush2.msra.mxu0 0.0
      %4365 = vmatprep.subr.mxu0 0.0
      %4366 = vmatpush2.msra.mxu0 0.0
      %4367 = vmatprep.subr.mxu0 0.0
      %4368 = vmatpush2.msra.mxu0 0.0
      %4369 = vmatprep.mubr.f32.mxu0 0.0
      %4370 = vmatmul.mubr.f32.gmra.mxu0 %v4303
      %v4371 = vpop.f32.mrf.mxu0
      %v4372 = vadd.f32 %v694, %v4371
      %v4373 = vpop.f32.mrf.mxu0
      %4374 = vdwg.mxu0
      %v4375 = vsel %vm423, %v4372, -inf
      %4376 = vmax.xlane.f32.xlu0 %v4375
      %v4377 = vpop.xlane.xlu0 %4376
      %v4378 = vsub.f32 %v4372, %v4377
      %v4379 = vmul.f32 %v4378, 1.442695
      %v4380 = vpow.pop %v4379
      %v4381 = vsel %vm423, %v4380, 0.0
      %4382 = vadd.xlane.f32.xlu0 %v4381
      %v4383 = vpop.xlane.xlu0 %4382
      %v4384 = vrcp.pop %v4383
      %v4385 = vmul.f32 %v4380, %v4384
      %4386 = vrot.lane.b32.xlu0 %v4220, 120
      %v4387 = vpop.permute.xlu0 %4386
      %4390 = vrot.lane.b32.xlu0 %v4214, 16
      %v4391 = vpop.permute.xlu0 %4390
      %4394 = vrot.lane.b32.xlu0 %v4301, 16
      %v4395 = vpop.permute.xlu0 %4394
      %4398 = vrot.lane.b32.xlu0 %v4372, 17
      %v4399 = vpop.permute.xlu0 %4398
      %v4401 = vsel %vm423, %v4385, %v4387
      %v4402 = vsel %vm795, %v4401, %v4391
      %v4403 = vsel %vm345, %v4402, %v4395
      %v4404 = vsel %vm798, %v4403, %v4399
      %v4405 = vsel %vm800, %v4404, 0.0
      %s4406 = scalar_lea.vmem %s225, 56
      %4407 = vst [vmem:[%s4406] sm:$0xff] %v4405
      %v4409 = vsel %vm612, %v4223, %v4214
      %4410 = vst.msk [vmem:[#allocation2] sm:$0xff] %vm423, %v4409
      %s4411 = smul.u32 8, %s19
      %p4412 = scmp.lt.s32.totalorder %s18, 1
      %s4413 = scalar_select %p4412, %s18, 1
      %p4414 = scmp.lt.s32.totalorder %s4411, 31
      %s4415 = scalar_select %p4414, %s4411, 31
      %s4416 = smul.addr %s4413, 32
      %s4417 = sadd.s32 %s4415, %s4416
      %s4418 = smul.addr %s4417, 8
      %s4419 = scalar_lea.vmem %s3, %s4418
      // Predicated region
      $region37: #{aria_forward_seq.1} parent=31 // pred_check
        %p4420 = pneg %p121
      $region38: #{aria_forward_seq.1} parent=31 // pred_check_branch
        %4422 = sbr.rel (%p4420) target = $region40
      $region39: #{aria_forward_seq.1} parent=31 // pred_region
        %s4423 = smul.u32 8, %s19
      $region40: #{aria_forward_seq.1} parent=31 // pred_fallthru
        _
    $region32: #{aria_forward_seq.1} parent=5 // pred_fallthru
      _
    %p4424 = scmp.le.s32.totalorder 2, %s9
    // Predicated region
    $region41: #{aria_forward_seq.1} parent=5 // pred_check
      %p4425 = pneg %p4424
    $region42: #{aria_forward_seq.1} parent=5 // pred_check_branch
      %4427 = sbr.rel (%p4425) target = $region44
    $region43: #{aria_forward_seq.1} parent=5 // pred_region
      %s4428 = ssub.s32 %s9, 2
      // Predicated region
      $region45: #{aria_forward_seq.1} parent=43 // pred_check
        %p4429 = pneg %p127
      $region46: #{aria_forward_seq.1} parent=43 // pred_check_branch
        %4431 = sbr.rel (%p4429) target = $region48
      $region47: #{aria_forward_seq.1} parent=43 // pred_region
        %s4432 = smul.u32 8, %s21
        %p4433 = scmp.lt.s32.totalorder %s20, 1
        %s4434 = scalar_select %p4433, %s20, 1
        %p4435 = scmp.lt.s32.totalorder %s4432, 31
        %s4436 = scalar_select %p4435, %s4432, 31
        %s4437 = smul.addr %s4434, 32
        %s4438 = sadd.s32 %s4436, %s4437
        %s4439 = smul.addr %s4438, 8
        %s4440 = scalar_lea.vmem %s3, %s4439
      $region48: #{aria_forward_seq.1} parent=43 // pred_fallthru
        _
    $region44: #{aria_forward_seq.1} parent=5 // pred_fallthru
      _
  $region6: #{aria_forward_seq.1} parent=0 // loop_footer
    %s13 = sadd.s32 1, %s9
  $region7: #{aria_forward_seq.1} parent=0 // loop_footer_branch
    %8 = sbr.rel target = $region3
  $region8: #{aria_forward_seq.1} parent=0 // loop_exit
    _

</llo_original>
